<compile_context>
chip_gen: v7x
topology: tpu7x:2x2x1
jax: 0.10.0
libtpu: 0.0.40
codegen_flags: <defaults>
</compile_context>

<pallas_src>
import numpy as np
import jax
import jax.numpy as jnp
from jax import lax
from jax.experimental import pallas as pl
from jax.experimental.pallas import tpu as pltpu

# ----------------------- small, module-consistent config ---------------------
VOCAB_SIZE = 65      # len(sorted(set(text))) for a char-level corpus
N_EMBED    = 128     # nEmbed (scaled down, lane-aligned)
BLOCK_SIZE = 16      # blockSize (max sequence length)
N_HEAD     = 4       # nHead
N_LAYER    = 2       # nLayer
HEAD_SIZE  = N_EMBED // N_HEAD
LN_EPS     = 1e-5    # torch.nn.LayerNorm default
V_PAD      = 128     # lane-dense padded vocab width for the lm head output
NEG_INF    = -1e30


def _layernorm(x, gamma, beta):
    # x: (R, C) f32, gamma/beta: (1, C) f32
    mu = jnp.mean(x, axis=-1, keepdims=True)
    var = jnp.mean((x - mu) ** 2, axis=-1, keepdims=True)
    return (x - mu) * lax.rsqrt(var + LN_EPS) * gamma + beta


# ------------------------------ fused Pallas kernel ---------------------------
def _make_kernel(B, T):
    BT = B * T
    C = N_EMBED
    HBT = N_HEAD * BT

    def kernel(x_ref, bias_ref, bdm_ref, ind_ref,
               ln1g_ref, ln1b_ref, wqkv_ref, wo_ref, bo_ref,
               ln2g_ref, ln2b_ref, w1_ref, b1_ref, w2_ref, b2_ref,
               lnfg_ref, lnfb_ref, lmw_ref, lmb_ref,
               o_ref, xs_ref):
        l = pl.program_id(0)

        @pl.when(l == 0)
        def _():
            xs_ref[...] = x_ref[...]                    # load activations once

        x = xs_ref[...]                                  # (BT, C) f32 carried state

        # ---------------- x + MultiHeadAttention(LayerNorm(x)) ----------------
        xn = _layernorm(x, ln1g_ref[0], ln1b_ref[0])
        qkv = jnp.dot(xn.astype(jnp.bfloat16), wqkv_ref[0],
                      preferred_element_type=jnp.float32)          # (BT, 3C) f32
        q = qkv[:, :C].astype(jnp.bfloat16)              # scale folded into W_q
        k = qkv[:, C:2 * C]
        v = qkv[:, 2 * C:]

        # Block-diagonal packing of K / V: rows h*BT..(h+1)*BT hold head h's K/V
        # in columns h*HEAD_SIZE..(h+1)*HEAD_SIZE, zero elsewhere.
        bdm = bdm_ref[...]                               # (HBT, C) f32 0/1 constant
        k_bd = (jnp.concatenate([k] * N_HEAD, axis=0) * bdm).astype(jnp.bfloat16)
        v_bd = (jnp.concatenate([v] * N_HEAD, axis=0) * bdm).astype(jnp.bfloat16)

        # All heads' scores in one lane-dense slab, no explicit transpose:
        # s[:, h*BT + j] = q_h . k_h[j]
        s = lax.dot_general(q, k_bd, (((1,), (1,)), ((), ())),
                            preferred_element_type=jnp.float32)    # (BT, HBT) f32
        s = s + bias_ref[...]                            # additive causal/block bias
        p = jnp.exp(s - jnp.max(s, axis=-1, keepdims=True))        # f32 exp
        # per-head softmax denominators (f32 masked row-sums), EUP reciprocal
        inv = jnp.zeros((BT, HBT), jnp.float32)
        for h in range(N_HEAD):                          # static unroll, full-width ops
            ind = ind_ref[h]                             # (1, HBT) 0/1 indicator
            den = jnp.sum(p * ind, axis=-1, keepdims=True)          # (BT, 1) f32
            inv = inv + pl.reciprocal(den, approx=True) * ind
        p = p * inv                                      # per-head softmax probs (f32)

        av = jnp.dot(p.astype(jnp.bfloat16), v_bd,
                     preferred_element_type=jnp.float32)            # (BT, C) head outs
        attn = jnp.dot(av.astype(jnp.bfloat16), wo_ref[0],
                       preferred_element_type=jnp.float32) + bo_ref[0]
        x = x + attn                                     # residual (attn dropout = id)

        # ---------------- x + FeedForward(LayerNorm(x)) ----------------
        xn2 = _layernorm(x, ln2g_ref[0], ln2b_ref[0])
        hdn = jnp.dot(xn2.astype(jnp.bfloat16), w1_ref[0],
                      preferred_element_type=jnp.float32) + b1_ref[0]
        hdn = jnp.maximum(hdn, 0.0)                      # ReLU (f32)
        y = jnp.dot(hdn.astype(jnp.bfloat16), w2_ref[0],
                    preferred_element_type=jnp.float32) + b2_ref[0]
        x = x + y                                        # residual (dropout = id)
        xs_ref[...] = x

        # ---------------- final LayerNorm + lm_head (lane-padded) ----------------
        @pl.when(l == N_LAYER - 1)
        def _():
            xf = _layernorm(x, lnfg_ref[...], lnfb_ref[...])
            logits = jnp.dot(xf.astype(jnp.bfloat16), lmw_ref[...],
                             preferred_element_type=jnp.float32) + lmb_ref[...]
            o_ref[...] = logits.astype(o_ref.dtype)

    return kernel


def _build_consts(B, T):
    """Trace-time constants: additive causal bias, block-diag K/V mask, head indicators."""
    BT = B * T
    HBT = N_HEAD * BT
    i = np.arange(BT)
    j = np.arange(HBT) % BT
    valid = ((j[None, :] // T) == (i[:, None] // T)) & ((j[None, :] % T) <= (i[:, None] % T))
    attn_bias = np.where(valid, 0.0, NEG_INF).astype(np.float32)          # (BT, HBT)
    r = np.arange(HBT)
    c = np.arange(N_EMBED)
    bd_mask = ((r[:, None] // BT) == (c[None, :] // HEAD_SIZE)).astype(np.float32)  # (HBT, C)
    blk_ind = (np.arange(HBT)[None, :] // BT == np.arange(N_HEAD)[:, None])
    blk_ind = blk_ind.astype(np.float32).reshape(N_HEAD, 1, HBT)          # (H, 1, HBT)
    return jnp.asarray(attn_bias), jnp.asarray(bd_mask), jnp.asarray(blk_ind)


def _const_spec(shape):
    nd = len(shape)
    return pl.BlockSpec(tuple(shape), lambda l, _nd=nd: (0,) * _nd)


def _layer_spec(shape):
    nd = len(shape)
    return pl.BlockSpec((1,) + tuple(shape[1:]),
                        lambda l, _nd=nd: (l,) + (0,) * (_nd - 1))


def fused_forward(x2d, pk, B, T):
    """x2d: (B*T, C) f32.  Returns padded logits (B*T, V_PAD) f32."""
    BT = B * T
    attn_bias, bd_mask, blk_ind = _build_consts(B, T)
    const_ops = (x2d, attn_bias, bd_mask, blk_ind)
    layer_ops = (pk["ln1_g"], pk["ln1_b"], pk["wqkv"], pk["wo"], pk["bo"],
                 pk["ln2_g"], pk["ln2_b"], pk["w1"], pk["b1"], pk["w2"], pk["b2"])
    tail_ops = (pk["lnf_g"], pk["lnf_b"], pk["lm_w"], pk["lm_b"])

    grid_spec = pltpu.PrefetchScalarGridSpec(
        num_scalar_prefetch=0,
        grid=(N_LAYER,),
        in_specs=([_const_spec(a.shape) for a in const_ops]
                  + [_layer_spec(a.shape) for a in layer_ops]
                  + [_const_spec(a.shape) for a in tail_ops]),
        out_specs=pl.BlockSpec((BT, V_PAD), lambda l: (0, 0)),
        scratch_shapes=[pltpu.VMEM((BT, N_EMBED), jnp.float32)])

    return pl.pallas_call(
        _make_kernel(B, T),
        out_shape=jax.ShapeDtypeStruct((BT, V_PAD), jnp.float32),
        grid_spec=grid_spec,
        compiler_params=pltpu.CompilerParams(dimension_semantics=("arbitrary",)),
    )(*const_ops, *layer_ops, *tail_ops)
    # NOTE: at BT=32 this is intentionally NOT split across v7x's two TensorCores
    # (per-core overhead + duplicated weight DMA would regress at this size).
    # TODO(synk): if used inside generate(), prefetch the next call's weights with
    # the cross-pallas_call semaphore/VMEM-future pattern instead of cold DMA.


# ------------------------------ parameter construction -------------------------
def init_params(key):
    def nrm(k, shape, scale=0.02):
        return (scale * jax.random.normal(k, shape)).astype(jnp.float32)

    keys = iter(jax.random.split(key, 8 + N_LAYER * 16))
    p = {
        "tok_emb": nrm(next(keys), (VOCAB_SIZE, N_EMBED)),
        "pos_emb": nrm(next(keys), (BLOCK_SIZE, N_EMBED)),
        "lnf_g": jnp.ones((1, N_EMBED), jnp.float32),
        "lnf_b": jnp.zeros((1, N_EMBED), jnp.float32),
        "lm_w": nrm(next(keys), (N_EMBED, VOCAB_SIZE)),
        "lm_b": jnp.zeros((1, VOCAB_SIZE), jnp.float32),
        "blocks": [],
    }
    for _ in range(N_LAYER):
        blk = {
            "ln1_g": jnp.ones((1, N_EMBED), jnp.float32),
            "ln1_b": jnp.zeros((1, N_EMBED), jnp.float32),
            "wq": nrm(next(keys), (N_EMBED, N_EMBED)),   # per-head columns concat
            "wk": nrm(next(keys), (N_EMBED, N_EMBED)),
            "wv": nrm(next(keys), (N_EMBED, N_EMBED)),
            "wo": nrm(next(keys), (N_EMBED, N_EMBED)),
            "bo": jnp.zeros((1, N_EMBED), jnp.float32),
            "ln2_g": jnp.ones((1, N_EMBED), jnp.float32),
            "ln2_b": jnp.zeros((1, N_EMBED), jnp.float32),
            "w1": nrm(next(keys), (N_EMBED, 4 * N_EMBED)),
            "b1": jnp.zeros((1, 4 * N_EMBED), jnp.float32),
            "w2": nrm(next(keys), (4 * N_EMBED, N_EMBED)),
            "b2": jnp.zeros((1, N_EMBED), jnp.float32),
        }
        p["blocks"].append(blk)
    return p


def pack_params(p):
    """Repack module-shaped params into the fused-kernel operand layout."""
    scale = N_EMBED ** -0.5  # nEmbed**-0.5, as in the reference (quirk; do not "fix")

    def stack(name, dtype=jnp.float32):
        return jnp.stack([blk[name] for blk in p["blocks"]]).astype(dtype)

    wqkv = jnp.stack([
        jnp.concatenate([blk["wq"] * scale, blk["wk"], blk["wv"]], axis=1)
        for blk in p["blocks"]
    ]).astype(jnp.bfloat16)                                  # (L, C, 3C)

    lm_w = (jnp.zeros((N_EMBED, V_PAD), jnp.float32)
            .at[:, :VOCAB_SIZE].set(p["lm_w"])).astype(jnp.bfloat16)
    lm_b = jnp.zeros((1, V_PAD), jnp.float32).at[:, :VOCAB_SIZE].set(p["lm_b"])

    return {
        "tok_emb": p["tok_emb"], "pos_emb": p["pos_emb"],
        "ln1_g": stack("ln1_g"), "ln1_b": stack("ln1_b"),
        "wqkv": wqkv,
        "wo": stack("wo", jnp.bfloat16),
        "bo": stack("bo"),
        "ln2_g": stack("ln2_g"), "ln2_b": stack("ln2_b"),
        "w1": stack("w1", jnp.bfloat16), "b1": stack("b1"),
        "w2": stack("w2", jnp.bfloat16), "b2": stack("b2"),
        "lnf_g": p["lnf_g"], "lnf_b": p["lnf_b"],
        "lm_w": lm_w, "lm_b": lm_b,
    }


# ------------------------------ full forward -----------------------------------
@jax.jit
def bigram_lm_forward(packed, idx):
    """idx: (B, T) int32 token ids.  Returns logits (B, T, VOCAB_SIZE) f32."""
    B, T = idx.shape
    tok = jnp.take(packed["tok_emb"], idx, axis=0)       # (B, T, C)  glue gather
    pos = packed["pos_emb"][:T]                          # (T, C)
    x = (tok + pos[None, :, :]).reshape(B * T, N_EMBED)  # fold batch into rows
    logits_p = fused_forward(x, packed, B, T)            # (B*T, V_PAD)
    return logits_p.reshape(B, T, V_PAD)[:, :, :VOCAB_SIZE]
    # TODO(synk): cross-entropy loss branch (targets is not None) and the
    # autoregressive generate() sampling loop are not implemented; this is the
    # targets=None forward (loss=None).


if __name__ == "__main__":
    key = jax.random.PRNGKey(0)
    pkey, ikey = jax.random.split(key)
    params = init_params(pkey)
    packed = pack_params(params)

    B, T = 2, BLOCK_SIZE  # (2, 16)
    idx = jax.random.randint(ikey, (B, T), 0, VOCAB_SIZE, dtype=jnp.int32)

    logits = bigram_lm_forward(packed, idx)
    jax.block_until_ready(logits)
    assert logits.shape == (B, T, VOCAB_SIZE), logits.shape
    assert logits.dtype == jnp.float32
    assert bool(jnp.all(jnp.isfinite(logits)))
    print("KERNEL_OK")
</pallas_src>

<mosaic_0001>
module attributes {stable_mosaic.version = 11 : i64} {
  func.func @kernel(%arg0: i32, %arg1: memref<32x128xf32, #tpu.memory_space<vmem>>, %arg2: memref<32x128xf32, #tpu.memory_space<vmem>>, %arg3: memref<128x128xf32, #tpu.memory_space<vmem>>, %arg4: memref<4x1x128xf32, #tpu.memory_space<vmem>>, %arg5: memref<1x1x128xf32, #tpu.memory_space<vmem>>, %arg6: memref<1x1x128xf32, #tpu.memory_space<vmem>>, %arg7: memref<1x128x384xbf16, #tpu.memory_space<vmem>>, %arg8: memref<1x128x128xbf16, #tpu.memory_space<vmem>>, %arg9: memref<1x1x128xf32, #tpu.memory_space<vmem>>, %arg10: memref<1x1x128xf32, #tpu.memory_space<vmem>>, %arg11: memref<1x1x128xf32, #tpu.memory_space<vmem>>, %arg12: memref<1x128x512xbf16, #tpu.memory_space<vmem>>, %arg13: memref<1x1x512xf32, #tpu.memory_space<vmem>>, %arg14: memref<1x512x128xbf16, #tpu.memory_space<vmem>>, %arg15: memref<1x1x128xf32, #tpu.memory_space<vmem>>, %arg16: memref<1x128xf32, #tpu.memory_space<vmem>>, %arg17: memref<1x128xf32, #tpu.memory_space<vmem>>, %arg18: memref<128x128xbf16, #tpu.memory_space<vmem>>, %arg19: memref<1x128xf32, #tpu.memory_space<vmem>>, %arg20: memref<32x128xf32, #tpu.memory_space<vmem>>, %arg21: memref<32x128xf32, #tpu.memory_space<vmem>>) attributes {dimension_semantics = [#tpu.dimension_semantics<arbitrary>], iteration_bounds = array<i64: 2>, scalar_prefetch = 0 : i64, scratch_operands = 1 : i64, tpu.core_type = #tpu.core_type<tc>, window_params = [{pipeline_mode = #tpu.pipeline_mode<synchronous>, transform_indices = @transform_0, window_bounds = array<i64: 32, 128>}, {pipeline_mode = #tpu.pipeline_mode<synchronous>, transform_indices = @transform_1, window_bounds = array<i64: 32, 128>}, {pipeline_mode = #tpu.pipeline_mode<synchronous>, transform_indices = @transform_2, window_bounds = array<i64: 128, 128>}, {pipeline_mode = #tpu.pipeline_mode<synchronous>, transform_indices = @transform_3, window_bounds = array<i64: 4, 1, 128>}, {transform_indices = @transform_4, window_bounds = array<i64: 1, 1, 128>}, {transform_indices = @transform_5, window_bounds = array<i64: 1, 1, 128>}, {transform_indices = @transform_6, window_bounds = array<i64: 1, 128, 384>}, {transform_indices = @transform_7, window_bounds = array<i64: 1, 128, 128>}, {transform_indices = @transform_8, window_bounds = array<i64: 1, 1, 128>}, {transform_indices = @transform_9, window_bounds = array<i64: 1, 1, 128>}, {transform_indices = @transform_10, window_bounds = array<i64: 1, 1, 128>}, {transform_indices = @transform_11, window_bounds = array<i64: 1, 128, 512>}, {transform_indices = @transform_12, window_bounds = array<i64: 1, 1, 512>}, {transform_indices = @transform_13, window_bounds = array<i64: 1, 512, 128>}, {transform_indices = @transform_14, window_bounds = array<i64: 1, 1, 128>}, {pipeline_mode = #tpu.pipeline_mode<synchronous>, transform_indices = @transform_15, window_bounds = array<i64: 1, 128>}, {pipeline_mode = #tpu.pipeline_mode<synchronous>, transform_indices = @transform_16, window_bounds = array<i64: 1, 128>}, {pipeline_mode = #tpu.pipeline_mode<synchronous>, transform_indices = @transform_17, window_bounds = array<i64: 128, 128>}, {pipeline_mode = #tpu.pipeline_mode<synchronous>, transform_indices = @transform_18, window_bounds = array<i64: 1, 128>}, {pipeline_mode = #tpu.pipeline_mode<synchronous>, transform_indices = @transform_19, window_bounds = array<i64: 32, 128>}]} {
    %c0_i32 = arith.constant 0 : i32
    %0 = arith.cmpi eq, %arg0, %c0_i32 : i32
    %1 = arith.extui %0 : i1 to i32
    %c0_i32_0 = arith.constant 0 : i32
    %2 = arith.cmpi ne, %1, %c0_i32_0 : i32
    scf.if %2 {
      %c0_73 = arith.constant 0 : index
      %c0_74 = arith.constant 0 : index
      %159 = vector.load %arg1[%c0_73, %c0_74] : memref<32x128xf32, #tpu.memory_space<vmem>>, vector<32x128xf32>
      %c0_75 = arith.constant 0 : index
      %c0_76 = arith.constant 0 : index
      %160 = vector.load %arg21[%c0_75, %c0_76] : memref<32x128xf32, #tpu.memory_space<vmem>>, vector<32x128xf32>
      tpu.vector_store %arg21[%c0_75, %c0_76], %159 {strides = array<i32>} : memref<32x128xf32, #tpu.memory_space<vmem>>, vector<32x128xf32>,
    } else {
    }
    %c0 = arith.constant 0 : index
    %c0_1 = arith.constant 0 : index
    %3 = vector.load %arg21[%c0, %c0_1] : memref<32x128xf32, #tpu.memory_space<vmem>>, vector<32x128xf32>
    %c0_2 = arith.constant 0 : index
    %c0_3 = arith.constant 0 : index
    %c0_4 = arith.constant 0 : index
    %4 = vector.load %arg5[%c0_2, %c0_3, %c0_4] : memref<1x1x128xf32, #tpu.memory_space<vmem>>, vector<1x1x128xf32>
    %5 = vector.shape_cast %4 : vector<1x1x128xf32> to vector<1x128xf32>
    %c0_5 = arith.constant 0 : index
    %c0_6 = arith.constant 0 : index
    %c0_7 = arith.constant 0 : index
    %6 = vector.load %arg6[%c0_5, %c0_6, %c0_7] : memref<1x1x128xf32, #tpu.memory_space<vmem>>, vector<1x1x128xf32>
    %7 = vector.shape_cast %6 : vector<1x1x128xf32> to vector<1x128xf32>
    %cst = arith.constant dense<0.000000e+00> : vector<32xf32>
    %8 = vector.multi_reduction <add>, %3, %cst [1] : vector<32x128xf32> to vector<32xf32>
    %9 = vector.shape_cast %8 : vector<32xf32> to vector<32x1xf32>
    %cst_8 = arith.constant 1.280000e+02 : f32
    %10 = vector.broadcast %cst_8 : f32 to vector<32x1xf32>
    %11 = arith.divf %9, %10 : vector<32x1xf32>
    %12 = vector.broadcast %11 : vector<32x1xf32> to vector<32x128xf32>
    %13 = arith.subf %3, %12 : vector<32x128xf32>
    %14 = arith.mulf %13, %13 : vector<32x128xf32>
    %cst_9 = arith.constant dense<0.000000e+00> : vector<32xf32>
    %15 = vector.multi_reduction <add>, %14, %cst_9 [1] : vector<32x128xf32> to vector<32xf32>
    %16 = vector.shape_cast %15 : vector<32xf32> to vector<32x1xf32>
    %cst_10 = arith.constant 1.280000e+02 : f32
    %17 = vector.broadcast %cst_10 : f32 to vector<32x1xf32>
    %18 = arith.divf %16, %17 : vector<32x1xf32>
    %19 = vector.broadcast %11 : vector<32x1xf32> to vector<32x128xf32>
    %20 = arith.subf %3, %19 : vector<32x128xf32>
    %cst_11 = arith.constant 9.99999974E-6 : f32
    %21 = vector.broadcast %cst_11 : f32 to vector<32x1xf32>
    %22 = arith.addf %18, %21 : vector<32x1xf32>
    %23 = math.rsqrt %22 : vector<32x1xf32>
    %24 = vector.broadcast %23 : vector<32x1xf32> to vector<32x128xf32>
    %25 = arith.mulf %20, %24 : vector<32x128xf32>
    %26 = vector.broadcast %5 : vector<1x128xf32> to vector<32x128xf32>
    %27 = arith.mulf %25, %26 : vector<32x128xf32>
    %28 = vector.broadcast %7 : vector<1x128xf32> to vector<32x128xf32>
    %29 = arith.addf %27, %28 : vector<32x128xf32>
    %30 = arith.truncf %29 : vector<32x128xf32> to vector<32x128xbf16>
    %c0_12 = arith.constant 0 : index
    %c0_13 = arith.constant 0 : index
    %c0_14 = arith.constant 0 : index
    %31 = vector.load %arg7[%c0_12, %c0_13, %c0_14] : memref<1x128x384xbf16, #tpu.memory_space<vmem>>, vector<1x128x384xbf16>
    %32 = vector.shape_cast %31 : vector<1x128x384xbf16> to vector<128x384xbf16>
    %cst_15 = arith.constant dense<0.000000e+00> : vector<32x384xf32>
    %33 = tpu.matmul %30, %32, %cst_15 {dimension_numbers = #tpu.dot_dimension_numbers<[1], [0], [0], [1], [0, 0, 1, 1], [], []>} : vector<32x128xbf16>, vector<128x384xbf16>, vector<32x384xf32> -> vector<32x384xf32>
    %34 = vector.extract_strided_slice %33 {offsets = [0, 0], sizes = [32, 128], strides = [1, 1]} : vector<32x384xf32> to vector<32x128xf32>
    %35 = arith.truncf %34 : vector<32x128xf32> to vector<32x128xbf16>
    %36 = vector.extract_strided_slice %33 {offsets = [0, 128], sizes = [32, 128], strides = [1, 1]} : vector<32x384xf32> to vector<32x128xf32>
    %37 = vector.extract_strided_slice %33 {offsets = [0, 256], sizes = [32, 128], strides = [1, 1]} : vector<32x384xf32> to vector<32x128xf32>
    %c0_16 = arith.constant 0 : index
    %c0_17 = arith.constant 0 : index
    %38 = vector.load %arg3[%c0_16, %c0_17] : memref<128x128xf32, #tpu.memory_space<vmem>>, vector<128x128xf32>
    %39 = tpu.concatenate %36, %36, %36, %36 in 0 : vector<32x128xf32>, vector<32x128xf32>, vector<32x128xf32>, vector<32x128xf32> -> vector<128x128xf32>
    %40 = arith.mulf %39, %38 : vector<128x128xf32>
    %41 = arith.truncf %40 : vector<128x128xf32> to vector<128x128xbf16>
    %42 = tpu.concatenate %37, %37, %37, %37 in 0 : vector<32x128xf32>, vector<32x128xf32>, vector<32x128xf32>, vector<32x128xf32> -> vector<128x128xf32>
    %43 = arith.mulf %42, %38 : vector<128x128xf32>
    %44 = arith.truncf %43 : vector<128x128xf32> to vector<128x128xbf16>
    %cst_18 = arith.constant dense<0.000000e+00> : vector<32x128xf32>
    %45 = tpu.matmul %35, %41, %cst_18 {dimension_numbers = #tpu.dot_dimension_numbers<[1], [1], [0], [0], [0, 0, 1, 0], [], []>} : vector<32x128xbf16>, vector<128x128xbf16>, vector<32x128xf32> -> vector<32x128xf32>
    %c0_19 = arith.constant 0 : index
    %c0_20 = arith.constant 0 : index
    %46 = vector.load %arg2[%c0_19, %c0_20] : memref<32x128xf32, #tpu.memory_space<vmem>>, vector<32x128xf32>
    %47 = arith.addf %45, %46 : vector<32x128xf32>
    %cst_21 = arith.constant dense<0xFF800000> : vector<32xf32>
    %48 = vector.multi_reduction <maximumf>, %47, %cst_21 [1] : vector<32x128xf32> to vector<32xf32>
    %49 = vector.shape_cast %48 : vector<32xf32> to vector<32x1xf32>
    %50 = vector.broadcast %49 : vector<32x1xf32> to vector<32x128xf32>
    %51 = arith.subf %47, %50 : vector<32x128xf32>
    %52 = math.exp %51 : vector<32x128xf32>
    %cst_22 = arith.constant 0.000000e+00 : f32
    %53 = vector.broadcast %cst_22 : f32 to vector<32x128xf32>
    %c0_23 = arith.constant 0 : index
    %c0_24 = arith.constant 0 : index
    %c0_25 = arith.constant 0 : index
    %54 = vector.load %arg4[%c0_23, %c0_24, %c0_25] : memref<4x1x128xf32, #tpu.memory_space<vmem>>, vector<1x1x128xf32>
    %55 = vector.shape_cast %54 : vector<1x1x128xf32> to vector<1x128xf32>
    %56 = vector.broadcast %55 : vector<1x128xf32> to vector<32x128xf32>
    %57 = arith.mulf %52, %56 : vector<32x128xf32>
    %cst_26 = arith.constant dense<0.000000e+00> : vector<32xf32>
    %58 = vector.multi_reduction <add>, %57, %cst_26 [1] : vector<32x128xf32> to vector<32xf32>
    %59 = vector.shape_cast %58 : vector<32xf32> to vector<32x1xf32>
    %60 = tpu.reciprocal %59 {approx = true} : vector<32x1xf32> -> vector<32x1xf32>
    %61 = vector.broadcast %60 : vector<32x1xf32> to vector<32x128xf32>
    %62 = vector.broadcast %55 : vector<1x128xf32> to vector<32x128xf32>
    %63 = arith.mulf %61, %62 : vector<32x128xf32>
    %64 = arith.addf %53, %63 : vector<32x128xf32>
    %c1 = arith.constant 1 : index
    %c0_27 = arith.constant 0 : index
    %c0_28 = arith.constant 0 : index
    %65 = vector.load %arg4[%c1, %c0_27, %c0_28] : memref<4x1x128xf32, #tpu.memory_space<vmem>>, vector<1x1x128xf32>
    %66 = vector.shape_cast %65 : vector<1x1x128xf32> to vector<1x128xf32>
    %67 = vector.broadcast %66 : vector<1x128xf32> to vector<32x128xf32>
    %68 = arith.mulf %52, %67 : vector<32x128xf32>
    %cst_29 = arith.constant dense<0.000000e+00> : vector<32xf32>
    %69 = vector.multi_reduction <add>, %68, %cst_29 [1] : vector<32x128xf32> to vector<32xf32>
    %70 = vector.shape_cast %69 : vector<32xf32> to vector<32x1xf32>
    %71 = tpu.reciprocal %70 {approx = true} : vector<32x1xf32> -> vector<32x1xf32>
    %72 = vector.broadcast %71 : vector<32x1xf32> to vector<32x128xf32>
    %73 = vector.broadcast %66 : vector<1x128xf32> to vector<32x128xf32>
    %74 = arith.mulf %72, %73 : vector<32x128xf32>
    %75 = arith.addf %64, %74 : vector<32x128xf32>
    %c2 = arith.constant 2 : index
    %c0_30 = arith.constant 0 : index
    %c0_31 = arith.constant 0 : index
    %76 = vector.load %arg4[%c2, %c0_30, %c0_31] : memref<4x1x128xf32, #tpu.memory_space<vmem>>, vector<1x1x128xf32>
    %77 = vector.shape_cast %76 : vector<1x1x128xf32> to vector<1x128xf32>
    %78 = vector.broadcast %77 : vector<1x128xf32> to vector<32x128xf32>
    %79 = arith.mulf %52, %78 : vector<32x128xf32>
    %cst_32 = arith.constant dense<0.000000e+00> : vector<32xf32>
    %80 = vector.multi_reduction <add>, %79, %cst_32 [1] : vector<32x128xf32> to vector<32xf32>
    %81 = vector.shape_cast %80 : vector<32xf32> to vector<32x1xf32>
    %82 = tpu.reciprocal %81 {approx = true} : vector<32x1xf32> -> vector<32x1xf32>
    %83 = vector.broadcast %82 : vector<32x1xf32> to vector<32x128xf32>
    %84 = vector.broadcast %77 : vector<1x128xf32> to vector<32x128xf32>
    %85 = arith.mulf %83, %84 : vector<32x128xf32>
    %86 = arith.addf %75, %85 : vector<32x128xf32>
    %c3 = arith.constant 3 : index
    %c0_33 = arith.constant 0 : index
    %c0_34 = arith.constant 0 : index
    %87 = vector.load %arg4[%c3, %c0_33, %c0_34] : memref<4x1x128xf32, #tpu.memory_space<vmem>>, vector<1x1x128xf32>
    %88 = vector.shape_cast %87 : vector<1x1x128xf32> to vector<1x128xf32>
    %89 = vector.broadcast %88 : vector<1x128xf32> to vector<32x128xf32>
    %90 = arith.mulf %52, %89 : vector<32x128xf32>
    %cst_35 = arith.constant dense<0.000000e+00> : vector<32xf32>
    %91 = vector.multi_reduction <add>, %90, %cst_35 [1] : vector<32x128xf32> to vector<32xf32>
    %92 = vector.shape_cast %91 : vector<32xf32> to vector<32x1xf32>
    %93 = tpu.reciprocal %92 {approx = true} : vector<32x1xf32> -> vector<32x1xf32>
    %94 = vector.broadcast %93 : vector<32x1xf32> to vector<32x128xf32>
    %95 = vector.broadcast %88 : vector<1x128xf32> to vector<32x128xf32>
    %96 = arith.mulf %94, %95 : vector<32x128xf32>
    %97 = arith.addf %86, %96 : vector<32x128xf32>
    %98 = arith.mulf %52, %97 : vector<32x128xf32>
    %99 = arith.truncf %98 : vector<32x128xf32> to vector<32x128xbf16>
    %cst_36 = arith.constant dense<0.000000e+00> : vector<32x128xf32>
    %100 = tpu.matmul %99, %44, %cst_36 {dimension_numbers = #tpu.dot_dimension_numbers<[1], [0], [0], [1], [0, 0, 1, 1], [], []>} : vector<32x128xbf16>, vector<128x128xbf16>, vector<32x128xf32> -> vector<32x128xf32>
    %101 = arith.truncf %100 : vector<32x128xf32> to vector<32x128xbf16>
    %c0_37 = arith.constant 0 : index
    %c0_38 = arith.constant 0 : index
    %c0_39 = arith.constant 0 : index
    %102 = vector.load %arg8[%c0_37, %c0_38, %c0_39] : memref<1x128x128xbf16, #tpu.memory_space<vmem>>, vector<1x128x128xbf16>
    %103 = vector.shape_cast %102 : vector<1x128x128xbf16> to vector<128x128xbf16>
    %cst_40 = arith.constant dense<0.000000e+00> : vector<32x128xf32>
    %104 = tpu.matmul %101, %103, %cst_40 {dimension_numbers = #tpu.dot_dimension_numbers<[1], [0], [0], [1], [0, 0, 1, 1], [], []>} : vector<32x128xbf16>, vector<128x128xbf16>, vector<32x128xf32> -> vector<32x128xf32>
    %c0_41 = arith.constant 0 : index
    %c0_42 = arith.constant 0 : index
    %c0_43 = arith.constant 0 : index
    %105 = vector.load %arg9[%c0_41, %c0_42, %c0_43] : memref<1x1x128xf32, #tpu.memory_space<vmem>>, vector<1x1x128xf32>
    %106 = vector.shape_cast %105 : vector<1x1x128xf32> to vector<1x128xf32>
    %107 = vector.broadcast %106 : vector<1x128xf32> to vector<32x128xf32>
    %108 = arith.addf %104, %107 : vector<32x128xf32>
    %109 = arith.addf %3, %108 : vector<32x128xf32>
    %c0_44 = arith.constant 0 : index
    %c0_45 = arith.constant 0 : index
    %c0_46 = arith.constant 0 : index
    %110 = vector.load %arg10[%c0_44, %c0_45, %c0_46] : memref<1x1x128xf32, #tpu.memory_space<vmem>>, vector<1x1x128xf32>
    %111 = vector.shape_cast %110 : vector<1x1x128xf32> to vector<1x128xf32>
    %c0_47 = arith.constant 0 : index
    %c0_48 = arith.constant 0 : index
    %c0_49 = arith.constant 0 : index
    %112 = vector.load %arg11[%c0_47, %c0_48, %c0_49] : memref<1x1x128xf32, #tpu.memory_space<vmem>>, vector<1x1x128xf32>
    %113 = vector.shape_cast %112 : vector<1x1x128xf32> to vector<1x128xf32>
    %cst_50 = arith.constant dense<0.000000e+00> : vector<32xf32>
    %114 = vector.multi_reduction <add>, %109, %cst_50 [1] : vector<32x128xf32> to vector<32xf32>
    %115 = vector.shape_cast %114 : vector<32xf32> to vector<32x1xf32>
    %cst_51 = arith.constant 1.280000e+02 : f32
    %116 = vector.broadcast %cst_51 : f32 to vector<32x1xf32>
    %117 = arith.divf %115, %116 : vector<32x1xf32>
    %118 = vector.broadcast %117 : vector<32x1xf32> to vector<32x128xf32>
    %119 = arith.subf %109, %118 : vector<32x128xf32>
    %120 = arith.mulf %119, %119 : vector<32x128xf32>
    %cst_52 = arith.constant dense<0.000000e+00> : vector<32xf32>
    %121 = vector.multi_reduction <add>, %120, %cst_52 [1] : vector<32x128xf32> to vector<32xf32>
    %122 = vector.shape_cast %121 : vector<32xf32> to vector<32x1xf32>
    %cst_53 = arith.constant 1.280000e+02 : f32
    %123 = vector.broadcast %cst_53 : f32 to vector<32x1xf32>
    %124 = arith.divf %122, %123 : vector<32x1xf32>
    %125 = vector.broadcast %117 : vector<32x1xf32> to vector<32x128xf32>
    %126 = arith.subf %109, %125 : vector<32x128xf32>
    %cst_54 = arith.constant 9.99999974E-6 : f32
    %127 = vector.broadcast %cst_54 : f32 to vector<32x1xf32>
    %128 = arith.addf %124, %127 : vector<32x1xf32>
    %129 = math.rsqrt %128 : vector<32x1xf32>
    %130 = vector.broadcast %129 : vector<32x1xf32> to vector<32x128xf32>
    %131 = arith.mulf %126, %130 : vector<32x128xf32>
    %132 = vector.broadcast %111 : vector<1x128xf32> to vector<32x128xf32>
    %133 = arith.mulf %131, %132 : vector<32x128xf32>
    %134 = vector.broadcast %113 : vector<1x128xf32> to vector<32x128xf32>
    %135 = arith.addf %133, %134 : vector<32x128xf32>
    %136 = arith.truncf %135 : vector<32x128xf32> to vector<32x128xbf16>
    %c0_55 = arith.constant 0 : index
    %c0_56 = arith.constant 0 : index
    %c0_57 = arith.constant 0 : index
    %137 = vector.load %arg12[%c0_55, %c0_56, %c0_57] : memref<1x128x512xbf16, #tpu.memory_space<vmem>>, vector<1x128x512xbf16>
    %138 = vector.shape_cast %137 : vector<1x128x512xbf16> to vector<128x512xbf16>
    %cst_58 = arith.constant dense<0.000000e+00> : vector<32x512xf32>
    %139 = tpu.matmul %136, %138, %cst_58 {dimension_numbers = #tpu.dot_dimension_numbers<[1], [0], [0], [1], [0, 0, 1, 1], [], []>} : vector<32x128xbf16>, vector<128x512xbf16>, vector<32x512xf32> -> vector<32x512xf32>
    %c0_59 = arith.constant 0 : index
    %c0_60 = arith.constant 0 : index
    %c0_61 = arith.constant 0 : index
    %140 = vector.load %arg13[%c0_59, %c0_60, %c0_61] : memref<1x1x512xf32, #tpu.memory_space<vmem>>, vector<1x1x512xf32>
    %141 = vector.shape_cast %140 : vector<1x1x512xf32> to vector<1x512xf32>
    %142 = vector.broadcast %141 : vector<1x512xf32> to vector<32x512xf32>
    %143 = arith.addf %139, %142 : vector<32x512xf32>
    %cst_62 = arith.constant 0.000000e+00 : f32
    %144 = vector.broadcast %cst_62 : f32 to vector<32x512xf32>
    %145 = arith.maximumf %143, %144 : vector<32x512xf32>
    %146 = arith.truncf %145 : vector<32x512xf32> to vector<32x512xbf16>
    %c0_63 = arith.constant 0 : index
    %c0_64 = arith.constant 0 : index
    %c0_65 = arith.constant 0 : index
    %147 = vector.load %arg14[%c0_63, %c0_64, %c0_65] : memref<1x512x128xbf16, #tpu.memory_space<vmem>>, vector<1x512x128xbf16>
    %148 = vector.shape_cast %147 : vector<1x512x128xbf16> to vector<512x128xbf16>
    %cst_66 = arith.constant dense<0.000000e+00> : vector<32x128xf32>
    %149 = tpu.matmul %146, %148, %cst_66 {dimension_numbers = #tpu.dot_dimension_numbers<[1], [0], [0], [1], [0, 0, 1, 1], [], []>} : vector<32x512xbf16>, vector<512x128xbf16>, vector<32x128xf32> -> vector<32x128xf32>
    %c0_67 = arith.constant 0 : index
    %c0_68 = arith.constant 0 : index
    %c0_69 = arith.constant 0 : index
    %150 = vector.load %arg15[%c0_67, %c0_68, %c0_69] : memref<1x1x128xf32, #tpu.memory_space<vmem>>, vector<1x1x128xf32>
    %151 = vector.shape_cast %150 : vector<1x1x128xf32> to vector<1x128xf32>
    %152 = vector.broadcast %151 : vector<1x128xf32> to vector<32x128xf32>
    %153 = arith.addf %149, %152 : vector<32x128xf32>
    %154 = arith.addf %109, %153 : vector<32x128xf32>
    %c0_70 = arith.constant 0 : index
    %c0_71 = arith.constant 0 : index
    %155 = vector.load %arg21[%c0_70, %c0_71] : memref<32x128xf32, #tpu.memory_space<vmem>>, vector<32x128xf32>
    tpu.vector_store %arg21[%c0_70, %c0_71], %154 {strides = array<i32>} : memref<32x128xf32, #tpu.memory_space<vmem>>, vector<32x128xf32>,
    %c1_i32 = arith.constant 1 : i32
    %156 = arith.cmpi eq, %arg0, %c1_i32 : i32
    %157 = arith.extui %156 : i1 to i32
    %c0_i32_72 = arith.constant 0 : i32
    %158 = arith.cmpi ne, %157, %c0_i32_72 : i32
    scf.if %158 {
      %c0_73 = arith.constant 0 : index
      %c0_74 = arith.constant 0 : index
      %159 = vector.load %arg16[%c0_73, %c0_74] : memref<1x128xf32, #tpu.memory_space<vmem>>, vector<1x128xf32>
      %c0_75 = arith.constant 0 : index
      %c0_76 = arith.constant 0 : index
      %160 = vector.load %arg17[%c0_75, %c0_76] : memref<1x128xf32, #tpu.memory_space<vmem>>, vector<1x128xf32>
      %cst_77 = arith.constant dense<0.000000e+00> : vector<32xf32>
      %161 = vector.multi_reduction <add>, %154, %cst_77 [1] : vector<32x128xf32> to vector<32xf32>
      %162 = vector.shape_cast %161 : vector<32xf32> to vector<32x1xf32>
      %cst_78 = arith.constant 1.280000e+02 : f32
      %163 = vector.broadcast %cst_78 : f32 to vector<32x1xf32>
      %164 = arith.divf %162, %163 : vector<32x1xf32>
      %165 = vector.broadcast %164 : vector<32x1xf32> to vector<32x128xf32>
      %166 = arith.subf %154, %165 : vector<32x128xf32>
      %167 = arith.mulf %166, %166 : vector<32x128xf32>
      %cst_79 = arith.constant dense<0.000000e+00> : vector<32xf32>
      %168 = vector.multi_reduction <add>, %167, %cst_79 [1] : vector<32x128xf32> to vector<32xf32>
      %169 = vector.shape_cast %168 : vector<32xf32> to vector<32x1xf32>
      %cst_80 = arith.constant 1.280000e+02 : f32
      %170 = vector.broadcast %cst_80 : f32 to vector<32x1xf32>
      %171 = arith.divf %169, %170 : vector<32x1xf32>
      %172 = vector.broadcast %164 : vector<32x1xf32> to vector<32x128xf32>
      %173 = arith.subf %154, %172 : vector<32x128xf32>
      %cst_81 = arith.constant 9.99999974E-6 : f32
      %174 = vector.broadcast %cst_81 : f32 to vector<32x1xf32>
      %175 = arith.addf %171, %174 : vector<32x1xf32>
      %176 = math.rsqrt %175 : vector<32x1xf32>
      %177 = vector.broadcast %176 : vector<32x1xf32> to vector<32x128xf32>
      %178 = arith.mulf %173, %177 : vector<32x128xf32>
      %179 = vector.broadcast %159 : vector<1x128xf32> to vector<32x128xf32>
      %180 = arith.mulf %178, %179 : vector<32x128xf32>
      %181 = vector.broadcast %160 : vector<1x128xf32> to vector<32x128xf32>
      %182 = arith.addf %180, %181 : vector<32x128xf32>
      %183 = arith.truncf %182 : vector<32x128xf32> to vector<32x128xbf16>
      %c0_82 = arith.constant 0 : index
      %c0_83 = arith.constant 0 : index
      %184 = vector.load %arg18[%c0_82, %c0_83] : memref<128x128xbf16, #tpu.memory_space<vmem>>, vector<128x128xbf16>
      %cst_84 = arith.constant dense<0.000000e+00> : vector<32x128xf32>
      %185 = tpu.matmul %183, %184, %cst_84 {dimension_numbers = #tpu.dot_dimension_numbers<[1], [0], [0], [1], [0, 0, 1, 1], [], []>} : vector<32x128xbf16>, vector<128x128xbf16>, vector<32x128xf32> -> vector<32x128xf32>
      %c0_85 = arith.constant 0 : index
      %c0_86 = arith.constant 0 : index
      %186 = vector.load %arg19[%c0_85, %c0_86] : memref<1x128xf32, #tpu.memory_space<vmem>>, vector<1x128xf32>
      %187 = vector.broadcast %186 : vector<1x128xf32> to vector<32x128xf32>
      %188 = arith.addf %185, %187 : vector<32x128xf32>
      %c0_87 = arith.constant 0 : index
      %c0_88 = arith.constant 0 : index
      %189 = vector.load %arg20[%c0_87, %c0_88] : memref<32x128xf32, #tpu.memory_space<vmem>>, vector<32x128xf32>
      tpu.vector_store %arg20[%c0_87, %c0_88], %188 {strides = array<i32>} : memref<32x128xf32, #tpu.memory_space<vmem>>, vector<32x128xf32>,
    } else {
    }
    return
  }
  func.func @transform_0(%arg0: i32) -> (i32, i32) {
    %c0_i32 = arith.constant 0 : i32
    %c0_i32_0 = arith.constant 0 : i32
    %c0_i32_1 = arith.constant 0 : i32
    return %c0_i32, %c0_i32_0 : i32, i32
  }
  func.func @transform_1(%arg0: i32) -> (i32, i32) {
    %c0_i32 = arith.constant 0 : i32
    %c0_i32_0 = arith.constant 0 : i32
    %c0_i32_1 = arith.constant 0 : i32
    return %c0_i32, %c0_i32_0 : i32, i32
  }
  func.func @transform_2(%arg0: i32) -> (i32, i32) {
    %c0_i32 = arith.constant 0 : i32
    %c0_i32_0 = arith.constant 0 : i32
    %c0_i32_1 = arith.constant 0 : i32
    return %c0_i32, %c0_i32_0 : i32, i32
  }
  func.func @transform_3(%arg0: i32) -> (i32, i32, i32) {
    %c0_i32 = arith.constant 0 : i32
    %c0_i32_0 = arith.constant 0 : i32
    %c0_i32_1 = arith.constant 0 : i32
    %c0_i32_2 = arith.constant 0 : i32
    return %c0_i32, %c0_i32_0, %c0_i32_1 : i32, i32, i32
  }
  func.func @transform_4(%arg0: i32) -> (i32, i32, i32) {
    %c0_i32 = arith.constant 0 : i32
    %c0_i32_0 = arith.constant 0 : i32
    %c0_i32_1 = arith.constant 0 : i32
    return %arg0, %c0_i32, %c0_i32_0 : i32, i32, i32
  }
  func.func @transform_5(%arg0: i32) -> (i32, i32, i32) {
    %c0_i32 = arith.constant 0 : i32
    %c0_i32_0 = arith.constant 0 : i32
    %c0_i32_1 = arith.constant 0 : i32
    return %arg0, %c0_i32, %c0_i32_0 : i32, i32, i32
  }
  func.func @transform_6(%arg0: i32) -> (i32, i32, i32) {
    %c0_i32 = arith.constant 0 : i32
    %c0_i32_0 = arith.constant 0 : i32
    %c0_i32_1 = arith.constant 0 : i32
    return %arg0, %c0_i32, %c0_i32_0 : i32, i32, i32
  }
  func.func @transform_7(%arg0: i32) -> (i32, i32, i32) {
    %c0_i32 = arith.constant 0 : i32
    %c0_i32_0 = arith.constant 0 : i32
    %c0_i32_1 = arith.constant 0 : i32
    return %arg0, %c0_i32, %c0_i32_0 : i32, i32, i32
  }
  func.func @transform_8(%arg0: i32) -> (i32, i32, i32) {
    %c0_i32 = arith.constant 0 : i32
    %c0_i32_0 = arith.constant 0 : i32
    %c0_i32_1 = arith.constant 0 : i32
    return %arg0, %c0_i32, %c0_i32_0 : i32, i32, i32
  }
  func.func @transform_9(%arg0: i32) -> (i32, i32, i32) {
    %c0_i32 = arith.constant 0 : i32
    %c0_i32_0 = arith.constant 0 : i32
    %c0_i32_1 = arith.constant 0 : i32
    return %arg0, %c0_i32, %c0_i32_0 : i32, i32, i32
  }
  func.func @transform_10(%arg0: i32) -> (i32, i32, i32) {
    %c0_i32 = arith.constant 0 : i32
    %c0_i32_0 = arith.constant 0 : i32
    %c0_i32_1 = arith.constant 0 : i32
    return %arg0, %c0_i32, %c0_i32_0 : i32, i32, i32
  }
  func.func @transform_11(%arg0: i32) -> (i32, i32, i32) {
    %c0_i32 = arith.constant 0 : i32
    %c0_i32_0 = arith.constant 0 : i32
    %c0_i32_1 = arith.constant 0 : i32
    return %arg0, %c0_i32, %c0_i32_0 : i32, i32, i32
  }
  func.func @transform_12(%arg0: i32) -> (i32, i32, i32) {
    %c0_i32 = arith.constant 0 : i32
    %c0_i32_0 = arith.constant 0 : i32
    %c0_i32_1 = arith.constant 0 : i32
    return %arg0, %c0_i32, %c0_i32_0 : i32, i32, i32
  }
  func.func @transform_13(%arg0: i32) -> (i32, i32, i32) {
    %c0_i32 = arith.constant 0 : i32
    %c0_i32_0 = arith.constant 0 : i32
    %c0_i32_1 = arith.constant 0 : i32
    return %arg0, %c0_i32, %c0_i32_0 : i32, i32, i32
  }
  func.func @transform_14(%arg0: i32) -> (i32, i32, i32) {
    %c0_i32 = arith.constant 0 : i32
    %c0_i32_0 = arith.constant 0 : i32
    %c0_i32_1 = arith.constant 0 : i32
    return %arg0, %c0_i32, %c0_i32_0 : i32, i32, i32
  }
  func.func @transform_15(%arg0: i32) -> (i32, i32) {
    %c0_i32 = arith.constant 0 : i32
    %c0_i32_0 = arith.constant 0 : i32
    %c0_i32_1 = arith.constant 0 : i32
    return %c0_i32, %c0_i32_0 : i32, i32
  }
  func.func @transform_16(%arg0: i32) -> (i32, i32) {
    %c0_i32 = arith.constant 0 : i32
    %c0_i32_0 = arith.constant 0 : i32
    %c0_i32_1 = arith.constant 0 : i32
    return %c0_i32, %c0_i32_0 : i32, i32
  }
  func.func @transform_17(%arg0: i32) -> (i32, i32) {
    %c0_i32 = arith.constant 0 : i32
    %c0_i32_0 = arith.constant 0 : i32
    %c0_i32_1 = arith.constant 0 : i32
    return %c0_i32, %c0_i32_0 : i32, i32
  }
  func.func @transform_18(%arg0: i32) -> (i32, i32) {
    %c0_i32 = arith.constant 0 : i32
    %c0_i32_0 = arith.constant 0 : i32
    %c0_i32_1 = arith.constant 0 : i32
    return %c0_i32, %c0_i32_0 : i32, i32
  }
  func.func @transform_19(%arg0: i32) -> (i32, i32) {
    %c0_i32 = arith.constant 0 : i32
    %c0_i32_0 = arith.constant 0 : i32
    %c0_i32_1 = arith.constant 0 : i32
    return %c0_i32, %c0_i32_0 : i32, i32
  }
}

</mosaic_0001>

<llo_original>
// kernel: bigram_lm_forward.1
$region0: #{bigram_lm_forward.1}
  #allocation0 [shape = 'u32[]', space=smem, size = 0x4, offset = 0x4, fixed_abs, tag = 'smem constant byte address 0x4 - core index']
  #allocation1 [shape = 'u32[144,128]{1,0:T(1,128)}', space=vmem, size = 0x12000, scoped, tag = 'internal scratch']
  #allocation2 [shape = 'f32[32,128]{1,0:T(8,128)}', space=vmem, size = 0x4000, scoped, tag = 'scratch operand']
  %s0 = inlined_call_operand.vmem [shape: f32[32,128], index: 0, kind: input, shape index: {}]
  %s1 = inlined_call_operand.hbm [shape: f32[32,128], index: 1, kind: input, shape index: {}]
  %s2 = inlined_call_operand.hbm [shape: f32[128,128], index: 2, kind: input, shape index: {}]
  %s3 = inlined_call_operand.vmem [shape: f32[4,1,128], index: 3, kind: input, shape index: {}]
  %s4 = inlined_call_operand.hbm [shape: f32[2,1,128], index: 4, kind: input, shape index: {}]
  %s5 = inlined_call_operand.hbm [shape: f32[2,1,128], index: 5, kind: input, shape index: {}]
  %s6 = inlined_call_operand.hbm [shape: bf16[2,128,384], index: 6, kind: input, shape index: {}]
  %s7 = inlined_call_operand.hbm [shape: bf16[2,128,128], index: 7, kind: input, shape index: {}]
  %s8 = inlined_call_operand.hbm [shape: f32[2,1,128], index: 8, kind: input, shape index: {}]
  %s9 = inlined_call_operand.hbm [shape: f32[2,1,128], index: 9, kind: input, shape index: {}]
  %s10 = inlined_call_operand.hbm [shape: f32[2,1,128], index: 10, kind: input, shape index: {}]
  %s11 = inlined_call_operand.vmem [shape: bf16[2,128,512], index: 11, kind: input, shape index: {}]
  %s12 = inlined_call_operand.hbm [shape: f32[2,1,512], index: 12, kind: input, shape index: {}]
  %s13 = inlined_call_operand.hbm [shape: bf16[2,512,128], index: 13, kind: input, shape index: {}]
  %s14 = inlined_call_operand.hbm [shape: f32[2,1,128], index: 14, kind: input, shape index: {}]
  %s15 = inlined_call_operand.hbm [shape: f32[1,128], index: 15, kind: input, shape index: {}]
  %s16 = inlined_call_operand.hbm [shape: f32[1,128], index: 16, kind: input, shape index: {}]
  %s17 = inlined_call_operand.hbm [shape: bf16[128,128], index: 17, kind: input, shape index: {}]
  %s18 = inlined_call_operand.hbm [shape: f32[1,128], index: 18, kind: input, shape index: {}]
  %s19 = inlined_call_operand.hbm [shape: f32[32,128], index: 19, kind: output, shape index: {}]
  %s20 = sld [smem:[#allocation0]]
  $region181: #{bigram_lm_forward.1} parent=0
    _
  %s22 = ssub.s32 1, %s20
  %s23 = scalar_select 0, %s22, %s20
  $region1: #{bigram_lm_forward.1} parent=0
    #allocation3 [shape = 'u8[16384]{0}', space=vmem, size = 0x4000, scoped, tag = 'input window, operand 1, single buffered']
    #allocation4 [shape = 's32[2]{0}', space=sflag, size = 0x8, scoped, tag = 'scoped memory for bigram_lm_forward.1']
    #allocation5 [shape = 's32[2]{0}', space=sflag, size = 0x8, scoped, tag = 'scoped memory for bigram_lm_forward.1']
    #allocation6 [shape = 'u8[65536]{0}', space=vmem, size = 0x10000, scoped, tag = 'input window, operand 2, single buffered']
    #allocation7 [shape = 's32[1]{0}', space=sflag, size = 0x4, scoped, tag = 'scoped memory for bigram_lm_forward.1']
    #allocation8 [shape = 'u8[1024]{0}', space=vmem, size = 0x400, scoped, tag = 'input window, operand 4']
    #allocation9 [shape = 'u8[1024]{0}', space=vmem, size = 0x400, scoped, tag = 'input window, operand 5']
    #allocation10 [shape = 'u8[196608]{0}', space=vmem, size = 0x30000, scoped, tag = 'input window, operand 6']
    #allocation11 [shape = 'u8[65536]{0}', space=vmem, size = 0x10000, scoped, tag = 'input window, operand 7']
    #allocation12 [shape = 'u8[1024]{0}', space=vmem, size = 0x400, scoped, tag = 'input window, operand 8']
    #allocation13 [shape = 'u8[1024]{0}', space=vmem, size = 0x400, scoped, tag = 'input window, operand 9']
    #allocation14 [shape = 'u8[1024]{0}', space=vmem, size = 0x400, scoped, tag = 'input window, operand 10']
    #allocation15 [shape = 'u8[4096]{0}', space=vmem, size = 0x1000, scoped, tag = 'input window, operand 12']
    #allocation16 [shape = 'u8[262144]{0}', space=vmem, size = 0x40000, scoped, tag = 'input window, operand 13']
    #allocation17 [shape = 'u8[1024]{0}', space=vmem, size = 0x400, scoped, tag = 'input window, operand 14']
    #allocation18 [shape = 'u8[512]{0}', space=vmem, size = 0x400, scoped, tag = 'input window, operand 15, single buffered']
    #allocation19 [shape = 'u8[512]{0}', space=vmem, size = 0x400, scoped, tag = 'input window, operand 16, single buffered']
    #allocation20 [shape = 's32[1]{0}', space=sflag, size = 0x4, scoped, tag = 'scoped memory for bigram_lm_forward.1']
    #allocation21 [shape = 'u8[32768]{0}', space=vmem, size = 0x8000, scoped, tag = 'input window, operand 17, single buffered']
    #allocation22 [shape = 'u8[512]{0}', space=vmem, size = 0x400, scoped, tag = 'input window, operand 18, single buffered']
    #allocation23 [shape = 's32[1]{0}', space=sflag, size = 0x4, scoped, tag = 'scoped memory for bigram_lm_forward.1']
    #allocation24 [shape = 'u8[16384]{0}', space=vmem, size = 0x4000, scoped, tag = 'output window, operand 0, single buffered']
    %24 = vsyncpa [#allocation4], 0
    %25 = vsyncpa [#allocation7], 0
    %26 = vsyncpa [#allocation20], 0
    %27 = vsyncpa [#allocation23], 0
    %28 = vsyncpa [#allocation5], 0
    loop: start=0, step=1, limit=4
    $region2: #{bigram_lm_forward.1} parent=1 // loop_pre_header
      _
    $region3: #{bigram_lm_forward.1} parent=1 // loop_header
      %s30 = sphi 0, %s34
      %p31 = scmp.ge.s32.totalorder %s30, 4
      %s38 = sphi 0, %s38
      %s40 = sphi 0, %s38
      %s41 = sphi 0, %s40
      %s55 = sphi 0, %s41
      %s59 = sphi 0, %s59
      %s61 = sphi 0, %s59
      %s62 = sphi 0, %s61
      %s76 = sphi 0, %s62
      %s80 = sphi 0, %s80
      %s82 = sphi 0, %s80
      %s83 = sphi 0, %s82
      %s97 = sphi 0, %s83
      %s101 = sphi 0, %s101
      %s103 = sphi 0, %s101
      %s104 = sphi 0, %s103
      %s118 = sphi 0, %s104
      %s124 = sphi 0, %s126
      %s127 = sphi 0, %s124
      %s128 = sphi 0, %s127
      %s144 = sphi 0, %s128
      %s150 = sphi 0, %s152
      %s153 = sphi 0, %s150
      %s154 = sphi 0, %s153
      %s170 = sphi 0, %s154
      %s176 = sphi 0, %s178
      %s179 = sphi 0, %s176
      %s180 = sphi 0, %s179
      %s196 = sphi 0, %s180
      %s202 = sphi 0, %s204
      %s205 = sphi 0, %s202
      %s206 = sphi 0, %s205
      %s222 = sphi 0, %s206
      %s228 = sphi 0, %s230
      %s231 = sphi 0, %s228
      %s232 = sphi 0, %s231
      %s248 = sphi 0, %s232
      %s254 = sphi 0, %s256
      %s257 = sphi 0, %s254
      %s258 = sphi 0, %s257
      %s274 = sphi 0, %s258
      %s280 = sphi 0, %s282
      %s283 = sphi 0, %s280
      %s284 = sphi 0, %s283
      %s300 = sphi 0, %s284
      %s306 = sphi 0, %s308
      %s309 = sphi 0, %s306
      %s310 = sphi 0, %s309
      %s326 = sphi 0, %s310
      %s332 = sphi 0, %s334
      %s335 = sphi 0, %s332
      %s336 = sphi 0, %s335
      %s352 = sphi 0, %s336
      %s358 = sphi 0, %s360
      %s361 = sphi 0, %s358
      %s362 = sphi 0, %s361
      %s378 = sphi 0, %s362
      %s384 = sphi 0, %s386
      %s387 = sphi 0, %s384
      %s388 = sphi 0, %s387
      %s404 = sphi 0, %s388
      %s408 = sphi 0, %s408
      %s410 = sphi 0, %s408
      %s411 = sphi 0, %s410
      %s425 = sphi 0, %s411
      %s429 = sphi 0, %s429
      %s431 = sphi 0, %s429
      %s432 = sphi 0, %s431
      %s446 = sphi 0, %s432
      %s450 = sphi 0, %s450
      %s452 = sphi 0, %s450
      %s453 = sphi 0, %s452
      %s467 = sphi 0, %s453
      %s471 = sphi 0, %s471
      %s473 = sphi 0, %s471
      %s474 = sphi 0, %s473
      %s488 = sphi 0, %s474
      %s492 = sphi 0, %s492
      %s494 = sphi 0, %s492
      %s495 = sphi 0, %s494
      %s509 = sphi 0, %s495
    $region4: #{bigram_lm_forward.1} parent=1 // loop_header_branch
      %33 = sbr.rel (%p31) target = $region8
    $region5: #{bigram_lm_forward.1} parent=1 // loop_body
      %s35 = ssub.s32 %s30, 1
      %s36 = ssub.s32 %s30, 2
      %s37 = sadd.s32 %s30, 1
      %s39 = sadd.s32 %s38, 1
      %p42 = scmp.eq.s32.totalorder %s30, 1
      %p43 = scmp.ne.s32.totalorder %s38, %s40
      %p44 = scmp.eq.s32.totalorder %s30, 0
      %p45 = por %p43, %p44
      %p46 = scmp.ne.s32.totalorder %s38, %s40
      %p47 = scmp.eq.s32.totalorder %s35, 1
      %p48 = por %p46, %p47
      %p49 = scmp.ne.s32.totalorder %s40, %s41
      %p50 = scmp.eq.s32.totalorder %s35, 0
      %p51 = por %p49, %p50
      %p52 = scmp.ne.s32.totalorder %s40, %s41
      %p53 = scmp.eq.s32.totalorder %s36, 1
      %p54 = por %p52, %p53
      %p56 = scmp.ne.s32.totalorder %s41, %s55
      %p57 = scmp.eq.s32.totalorder %s36, 0
      %p58 = por %p56, %p57
      %s60 = sadd.s32 %s59, 1
      %p63 = scmp.eq.s32.totalorder %s30, 1
      %p64 = scmp.ne.s32.totalorder %s59, %s61
      %p65 = scmp.eq.s32.totalorder %s30, 0
      %p66 = por %p64, %p65
      %p67 = scmp.ne.s32.totalorder %s59, %s61
      %p68 = scmp.eq.s32.totalorder %s35, 1
      %p69 = por %p67, %p68
      %p70 = scmp.ne.s32.totalorder %s61, %s62
      %p71 = scmp.eq.s32.totalorder %s35, 0
      %p72 = por %p70, %p71
      %p73 = scmp.ne.s32.totalorder %s61, %s62
      %p74 = scmp.eq.s32.totalorder %s36, 1
      %p75 = por %p73, %p74
      %p77 = scmp.ne.s32.totalorder %s62, %s76
      %p78 = scmp.eq.s32.totalorder %s36, 0
      %p79 = por %p77, %p78
      %s81 = sadd.s32 %s80, 1
      %p84 = scmp.eq.s32.totalorder %s30, 1
      %p85 = scmp.ne.s32.totalorder %s80, %s82
      %p86 = scmp.eq.s32.totalorder %s30, 0
      %p87 = por %p85, %p86
      %p88 = scmp.ne.s32.totalorder %s80, %s82
      %p89 = scmp.eq.s32.totalorder %s35, 1
      %p90 = por %p88, %p89
      %p91 = scmp.ne.s32.totalorder %s82, %s83
      %p92 = scmp.eq.s32.totalorder %s35, 0
      %p93 = por %p91, %p92
      %p94 = scmp.ne.s32.totalorder %s82, %s83
      %p95 = scmp.eq.s32.totalorder %s36, 1
      %p96 = por %p94, %p95
      %p98 = scmp.ne.s32.totalorder %s83, %s97
      %p99 = scmp.eq.s32.totalorder %s36, 0
      %p100 = por %p98, %p99
      %s102 = sadd.s32 %s101, 1
      %p105 = scmp.eq.s32.totalorder %s30, 1
      %p106 = scmp.ne.s32.totalorder %s101, %s103
      %p107 = scmp.eq.s32.totalorder %s30, 0
      %p108 = por %p106, %p107
      %p109 = scmp.ne.s32.totalorder %s101, %s103
      %p110 = scmp.eq.s32.totalorder %s35, 1
      %p111 = por %p109, %p110
      %p112 = scmp.ne.s32.totalorder %s103, %s104
      %p113 = scmp.eq.s32.totalorder %s35, 0
      %p114 = por %p112, %p113
      %p115 = scmp.ne.s32.totalorder %s103, %s104
      %p116 = scmp.eq.s32.totalorder %s36, 1
      %p117 = por %p115, %p116
      %p119 = scmp.ne.s32.totalorder %s104, %s118
      %p120 = scmp.eq.s32.totalorder %s36, 0
      %p121 = por %p119, %p120
      %s122 = ssub.s32 %s30, %s37
      %p123 = scmp.eq.s32.totalorder %s122, 0
      %s125 = sadd.s32 %s124, 1
      %s126 = scalar_select %p123, %s124, %s125
      %p129 = pneg %p123
      %p130 = scmp.eq.s32.totalorder %s30, 1
      %p131 = por %p129, %p130
      %p132 = scmp.ne.s32.totalorder %s124, %s127
      %p133 = scmp.eq.s32.totalorder %s30, 0
      %p134 = por %p132, %p133
      %p135 = scmp.ne.s32.totalorder %s124, %s127
      %p136 = scmp.eq.s32.totalorder %s35, 1
      %p137 = por %p135, %p136
      %p138 = scmp.ne.s32.totalorder %s127, %s128
      %p139 = scmp.eq.s32.totalorder %s35, 0
      %p140 = por %p138, %p139
      %p141 = scmp.ne.s32.totalorder %s127, %s128
      %p142 = scmp.eq.s32.totalorder %s36, 1
      %p143 = por %p141, %p142
      %p145 = scmp.ne.s32.totalorder %s128, %s144
      %p146 = scmp.eq.s32.totalorder %s36, 0
      %p147 = por %p145, %p146
      %s148 = ssub.s32 %s30, %s37
      %p149 = scmp.eq.s32.totalorder %s148, 0
      %s151 = sadd.s32 %s150, 1
      %s152 = scalar_select %p149, %s150, %s151
      %p155 = pneg %p149
      %p156 = scmp.eq.s32.totalorder %s30, 1
      %p157 = por %p155, %p156
      %p158 = scmp.ne.s32.totalorder %s150, %s153
      %p159 = scmp.eq.s32.totalorder %s30, 0
      %p160 = por %p158, %p159
      %p161 = scmp.ne.s32.totalorder %s150, %s153
      %p162 = scmp.eq.s32.totalorder %s35, 1
      %p163 = por %p161, %p162
      %p164 = scmp.ne.s32.totalorder %s153, %s154
      %p165 = scmp.eq.s32.totalorder %s35, 0
      %p166 = por %p164, %p165
      %p167 = scmp.ne.s32.totalorder %s153, %s154
      %p168 = scmp.eq.s32.totalorder %s36, 1
      %p169 = por %p167, %p168
      %p171 = scmp.ne.s32.totalorder %s154, %s170
      %p172 = scmp.eq.s32.totalorder %s36, 0
      %p173 = por %p171, %p172
      %s174 = ssub.s32 %s30, %s37
      %p175 = scmp.eq.s32.totalorder %s174, 0
      %s177 = sadd.s32 %s176, 1
      %s178 = scalar_select %p175, %s176, %s177
      %p181 = pneg %p175
      %p182 = scmp.eq.s32.totalorder %s30, 1
      %p183 = por %p181, %p182
      %p184 = scmp.ne.s32.totalorder %s176, %s179
      %p185 = scmp.eq.s32.totalorder %s30, 0
      %p186 = por %p184, %p185
      %p187 = scmp.ne.s32.totalorder %s176, %s179
      %p188 = scmp.eq.s32.totalorder %s35, 1
      %p189 = por %p187, %p188
      %p190 = scmp.ne.s32.totalorder %s179, %s180
      %p191 = scmp.eq.s32.totalorder %s35, 0
      %p192 = por %p190, %p191
      %p193 = scmp.ne.s32.totalorder %s179, %s180
      %p194 = scmp.eq.s32.totalorder %s36, 1
      %p195 = por %p193, %p194
      %p197 = scmp.ne.s32.totalorder %s180, %s196
      %p198 = scmp.eq.s32.totalorder %s36, 0
      %p199 = por %p197, %p198
      %s200 = ssub.s32 %s30, %s37
      %p201 = scmp.eq.s32.totalorder %s200, 0
      %s203 = sadd.s32 %s202, 1
      %s204 = scalar_select %p201, %s202, %s203
      %p207 = pneg %p201
      %p208 = scmp.eq.s32.totalorder %s30, 1
      %p209 = por %p207, %p208
      %p210 = scmp.ne.s32.totalorder %s202, %s205
      %p211 = scmp.eq.s32.totalorder %s30, 0
      %p212 = por %p210, %p211
      %p213 = scmp.ne.s32.totalorder %s202, %s205
      %p214 = scmp.eq.s32.totalorder %s35, 1
      %p215 = por %p213, %p214
      %p216 = scmp.ne.s32.totalorder %s205, %s206
      %p217 = scmp.eq.s32.totalorder %s35, 0
      %p218 = por %p216, %p217
      %p219 = scmp.ne.s32.totalorder %s205, %s206
      %p220 = scmp.eq.s32.totalorder %s36, 1
      %p221 = por %p219, %p220
      %p223 = scmp.ne.s32.totalorder %s206, %s222
      %p224 = scmp.eq.s32.totalorder %s36, 0
      %p225 = por %p223, %p224
      %s226 = ssub.s32 %s30, %s37
      %p227 = scmp.eq.s32.totalorder %s226, 0
      %s229 = sadd.s32 %s228, 1
      %s230 = scalar_select %p227, %s228, %s229
      %p233 = pneg %p227
      %p234 = scmp.eq.s32.totalorder %s30, 1
      %p235 = por %p233, %p234
      %p236 = scmp.ne.s32.totalorder %s228, %s231
      %p237 = scmp.eq.s32.totalorder %s30, 0
      %p238 = por %p236, %p237
      %p239 = scmp.ne.s32.totalorder %s228, %s231
      %p240 = scmp.eq.s32.totalorder %s35, 1
      %p241 = por %p239, %p240
      %p242 = scmp.ne.s32.totalorder %s231, %s232
      %p243 = scmp.eq.s32.totalorder %s35, 0
      %p244 = por %p242, %p243
      %p245 = scmp.ne.s32.totalorder %s231, %s232
      %p246 = scmp.eq.s32.totalorder %s36, 1
      %p247 = por %p245, %p246
      %p249 = scmp.ne.s32.totalorder %s232, %s248
      %p250 = scmp.eq.s32.totalorder %s36, 0
      %p251 = por %p249, %p250
      %s252 = ssub.s32 %s30, %s37
      %p253 = scmp.eq.s32.totalorder %s252, 0
      %s255 = sadd.s32 %s254, 1
      %s256 = scalar_select %p253, %s254, %s255
      %p259 = pneg %p253
      %p260 = scmp.eq.s32.totalorder %s30, 1
      %p261 = por %p259, %p260
      %p262 = scmp.ne.s32.totalorder %s254, %s257
      %p263 = scmp.eq.s32.totalorder %s30, 0
      %p264 = por %p262, %p263
      %p265 = scmp.ne.s32.totalorder %s254, %s257
      %p266 = scmp.eq.s32.totalorder %s35, 1
      %p267 = por %p265, %p266
      %p268 = scmp.ne.s32.totalorder %s257, %s258
      %p269 = scmp.eq.s32.totalorder %s35, 0
      %p270 = por %p268, %p269
      %p271 = scmp.ne.s32.totalorder %s257, %s258
      %p272 = scmp.eq.s32.totalorder %s36, 1
      %p273 = por %p271, %p272
      %p275 = scmp.ne.s32.totalorder %s258, %s274
      %p276 = scmp.eq.s32.totalorder %s36, 0
      %p277 = por %p275, %p276
      %s278 = ssub.s32 %s30, %s37
      %p279 = scmp.eq.s32.totalorder %s278, 0
      %s281 = sadd.s32 %s280, 1
      %s282 = scalar_select %p279, %s280, %s281
      %p285 = pneg %p279
      %p286 = scmp.eq.s32.totalorder %s30, 1
      %p287 = por %p285, %p286
      %p288 = scmp.ne.s32.totalorder %s280, %s283
      %p289 = scmp.eq.s32.totalorder %s30, 0
      %p290 = por %p288, %p289
      %p291 = scmp.ne.s32.totalorder %s280, %s283
      %p292 = scmp.eq.s32.totalorder %s35, 1
      %p293 = por %p291, %p292
      %p294 = scmp.ne.s32.totalorder %s283, %s284
      %p295 = scmp.eq.s32.totalorder %s35, 0
      %p296 = por %p294, %p295
      %p297 = scmp.ne.s32.totalorder %s283, %s284
      %p298 = scmp.eq.s32.totalorder %s36, 1
      %p299 = por %p297, %p298
      %p301 = scmp.ne.s32.totalorder %s284, %s300
      %p302 = scmp.eq.s32.totalorder %s36, 0
      %p303 = por %p301, %p302
      %s304 = ssub.s32 %s30, %s37
      %p305 = scmp.eq.s32.totalorder %s304, 0
      %s307 = sadd.s32 %s306, 1
      %s308 = scalar_select %p305, %s306, %s307
      %p311 = pneg %p305
      %p312 = scmp.eq.s32.totalorder %s30, 1
      %p313 = por %p311, %p312
      %p314 = scmp.ne.s32.totalorder %s306, %s309
      %p315 = scmp.eq.s32.totalorder %s30, 0
      %p316 = por %p314, %p315
      %p317 = scmp.ne.s32.totalorder %s306, %s309
      %p318 = scmp.eq.s32.totalorder %s35, 1
      %p319 = por %p317, %p318
      %p320 = scmp.ne.s32.totalorder %s309, %s310
      %p321 = scmp.eq.s32.totalorder %s35, 0
      %p322 = por %p320, %p321
      %p323 = scmp.ne.s32.totalorder %s309, %s310
      %p324 = scmp.eq.s32.totalorder %s36, 1
      %p325 = por %p323, %p324
      %p327 = scmp.ne.s32.totalorder %s310, %s326
      %p328 = scmp.eq.s32.totalorder %s36, 0
      %p329 = por %p327, %p328
      %s330 = ssub.s32 %s30, %s37
      %p331 = scmp.eq.s32.totalorder %s330, 0
      %s333 = sadd.s32 %s332, 1
      %s334 = scalar_select %p331, %s332, %s333
      %p337 = pneg %p331
      %p338 = scmp.eq.s32.totalorder %s30, 1
      %p339 = por %p337, %p338
      %p340 = scmp.ne.s32.totalorder %s332, %s335
      %p341 = scmp.eq.s32.totalorder %s30, 0
      %p342 = por %p340, %p341
      %p343 = scmp.ne.s32.totalorder %s332, %s335
      %p344 = scmp.eq.s32.totalorder %s35, 1
      %p345 = por %p343, %p344
      %p346 = scmp.ne.s32.totalorder %s335, %s336
      %p347 = scmp.eq.s32.totalorder %s35, 0
      %p348 = por %p346, %p347
      %p349 = scmp.ne.s32.totalorder %s335, %s336
      %p350 = scmp.eq.s32.totalorder %s36, 1
      %p351 = por %p349, %p350
      %p353 = scmp.ne.s32.totalorder %s336, %s352
      %p354 = scmp.eq.s32.totalorder %s36, 0
      %p355 = por %p353, %p354
      %s356 = ssub.s32 %s30, %s37
      %p357 = scmp.eq.s32.totalorder %s356, 0
      %s359 = sadd.s32 %s358, 1
      %s360 = scalar_select %p357, %s358, %s359
      %p363 = pneg %p357
      %p364 = scmp.eq.s32.totalorder %s30, 1
      %p365 = por %p363, %p364
      %p366 = scmp.ne.s32.totalorder %s358, %s361
      %p367 = scmp.eq.s32.totalorder %s30, 0
      %p368 = por %p366, %p367
      %p369 = scmp.ne.s32.totalorder %s358, %s361
      %p370 = scmp.eq.s32.totalorder %s35, 1
      %p371 = por %p369, %p370
      %p372 = scmp.ne.s32.totalorder %s361, %s362
      %p373 = scmp.eq.s32.totalorder %s35, 0
      %p374 = por %p372, %p373
      %p375 = scmp.ne.s32.totalorder %s361, %s362
      %p376 = scmp.eq.s32.totalorder %s36, 1
      %p377 = por %p375, %p376
      %p379 = scmp.ne.s32.totalorder %s362, %s378
      %p380 = scmp.eq.s32.totalorder %s36, 0
      %p381 = por %p379, %p380
      %s382 = ssub.s32 %s30, %s37
      %p383 = scmp.eq.s32.totalorder %s382, 0
      %s385 = sadd.s32 %s384, 1
      %s386 = scalar_select %p383, %s384, %s385
      %p389 = pneg %p383
      %p390 = scmp.eq.s32.totalorder %s30, 1
      %p391 = por %p389, %p390
      %p392 = scmp.ne.s32.totalorder %s384, %s387
      %p393 = scmp.eq.s32.totalorder %s30, 0
      %p394 = por %p392, %p393
      %p395 = scmp.ne.s32.totalorder %s384, %s387
      %p396 = scmp.eq.s32.totalorder %s35, 1
      %p397 = por %p395, %p396
      %p398 = scmp.ne.s32.totalorder %s387, %s388
      %p399 = scmp.eq.s32.totalorder %s35, 0
      %p400 = por %p398, %p399
      %p401 = scmp.ne.s32.totalorder %s387, %s388
      %p402 = scmp.eq.s32.totalorder %s36, 1
      %p403 = por %p401, %p402
      %p405 = scmp.ne.s32.totalorder %s388, %s404
      %p406 = scmp.eq.s32.totalorder %s36, 0
      %p407 = por %p405, %p406
      %s409 = sadd.s32 %s408, 1
      %p412 = scmp.eq.s32.totalorder %s30, 1
      %p413 = scmp.ne.s32.totalorder %s408, %s410
      %p414 = scmp.eq.s32.totalorder %s30, 0
      %p415 = por %p413, %p414
      %p416 = scmp.ne.s32.totalorder %s408, %s410
      %p417 = scmp.eq.s32.totalorder %s35, 1
      %p418 = por %p416, %p417
      %p419 = scmp.ne.s32.totalorder %s410, %s411
      %p420 = scmp.eq.s32.totalorder %s35, 0
      %p421 = por %p419, %p420
      %p422 = scmp.ne.s32.totalorder %s410, %s411
      %p423 = scmp.eq.s32.totalorder %s36, 1
      %p424 = por %p422, %p423
      %p426 = scmp.ne.s32.totalorder %s411, %s425
      %p427 = scmp.eq.s32.totalorder %s36, 0
      %p428 = por %p426, %p427
      %s430 = sadd.s32 %s429, 1
      %p433 = scmp.eq.s32.totalorder %s30, 1
      %p434 = scmp.ne.s32.totalorder %s429, %s431
      %p435 = scmp.eq.s32.totalorder %s30, 0
      %p436 = por %p434, %p435
      %p437 = scmp.ne.s32.totalorder %s429, %s431
      %p438 = scmp.eq.s32.totalorder %s35, 1
      %p439 = por %p437, %p438
      %p440 = scmp.ne.s32.totalorder %s431, %s432
      %p441 = scmp.eq.s32.totalorder %s35, 0
      %p442 = por %p440, %p441
      %p443 = scmp.ne.s32.totalorder %s431, %s432
      %p444 = scmp.eq.s32.totalorder %s36, 1
      %p445 = por %p443, %p444
      %p447 = scmp.ne.s32.totalorder %s432, %s446
      %p448 = scmp.eq.s32.totalorder %s36, 0
      %p449 = por %p447, %p448
      %s451 = sadd.s32 %s450, 1
      %p454 = scmp.eq.s32.totalorder %s30, 1
      %p455 = scmp.ne.s32.totalorder %s450, %s452
      %p456 = scmp.eq.s32.totalorder %s30, 0
      %p457 = por %p455, %p456
      %p458 = scmp.ne.s32.totalorder %s450, %s452
      %p459 = scmp.eq.s32.totalorder %s35, 1
      %p460 = por %p458, %p459
      %p461 = scmp.ne.s32.totalorder %s452, %s453
      %p462 = scmp.eq.s32.totalorder %s35, 0
      %p463 = por %p461, %p462
      %p464 = scmp.ne.s32.totalorder %s452, %s453
      %p465 = scmp.eq.s32.totalorder %s36, 1
      %p466 = por %p464, %p465
      %p468 = scmp.ne.s32.totalorder %s453, %s467
      %p469 = scmp.eq.s32.totalorder %s36, 0
      %p470 = por %p468, %p469
      %s472 = sadd.s32 %s471, 1
      %p475 = scmp.eq.s32.totalorder %s30, 1
      %p476 = scmp.ne.s32.totalorder %s471, %s473
      %p477 = scmp.eq.s32.totalorder %s30, 0
      %p478 = por %p476, %p477
      %p479 = scmp.ne.s32.totalorder %s471, %s473
      %p480 = scmp.eq.s32.totalorder %s35, 1
      %p481 = por %p479, %p480
      %p482 = scmp.ne.s32.totalorder %s473, %s474
      %p483 = scmp.eq.s32.totalorder %s35, 0
      %p484 = por %p482, %p483
      %p485 = scmp.ne.s32.totalorder %s473, %s474
      %p486 = scmp.eq.s32.totalorder %s36, 1
      %p487 = por %p485, %p486
      %p489 = scmp.ne.s32.totalorder %s474, %s488
      %p490 = scmp.eq.s32.totalorder %s36, 0
      %p491 = por %p489, %p490
      %s493 = sadd.s32 %s492, 1
      %p496 = scmp.eq.s32.totalorder %s30, 1
      %p497 = scmp.ne.s32.totalorder %s492, %s494
      %p498 = scmp.eq.s32.totalorder %s30, 0
      %p499 = por %p497, %p498
      %p500 = scmp.ne.s32.totalorder %s492, %s494
      %p501 = scmp.eq.s32.totalorder %s35, 1
      %p502 = por %p500, %p501
      %p503 = scmp.ne.s32.totalorder %s494, %s495
      %p504 = scmp.eq.s32.totalorder %s35, 0
      %p505 = por %p503, %p504
      %p506 = scmp.ne.s32.totalorder %s494, %s495
      %p507 = scmp.eq.s32.totalorder %s36, 1
      %p508 = por %p506, %p507
      %p510 = scmp.ne.s32.totalorder %s495, %s509
      %p511 = scmp.eq.s32.totalorder %s36, 0
      %p512 = por %p510, %p511
      %p513 = scmp.le.s32.totalorder 1, %s30
      %p514 = scmp.lt.s32.totalorder %s30, 3
      %p515 = pnand %p513, %p514
      %p516 = pneg %p515
      // Predicated region
      $region9: #{bigram_lm_forward.1} parent=5 // pred_check
        _
      $region10: #{bigram_lm_forward.1} parent=5 // pred_check_branch
        %518 = sbr.rel (%p515) target = $region12
      $region11: #{bigram_lm_forward.1} parent=5 // pred_region
        %s519 = ssub.s32 %s30, 1
        // Predicated region
        $region13: #{bigram_lm_forward.1} parent=11 // pred_check
          %p520 = pneg %p51
        $region14: #{bigram_lm_forward.1} parent=11 // pred_check_branch
          %522 = sbr.rel (%p520) target = $region16
        $region15: #{bigram_lm_forward.1} parent=11 // pred_region
          _
        $region16: #{bigram_lm_forward.1} parent=11 // pred_fallthru
          _
        // Predicated region
        $region17: #{bigram_lm_forward.1} parent=11 // pred_check
          %p523 = pneg %p72
        $region18: #{bigram_lm_forward.1} parent=11 // pred_check_branch
          %525 = sbr.rel (%p523) target = $region20
        $region19: #{bigram_lm_forward.1} parent=11 // pred_region
          %s527 = ssub.s32 512, 512
          %528 = vsyncadd [#allocation4], %s527
          %s529 = sshll.u32 [#allocation3], 4
          %s530 = int_to_ptr.vmem [resolvable:$true] %s529
          %535 = dma.hbm_to_vmem [thread:$0]  %s1, 512, %s530, [#allocation4], 128, 128, 8
        $region20: #{bigram_lm_forward.1} parent=11 // pred_fallthru
          _
        // Predicated region
        $region21: #{bigram_lm_forward.1} parent=11 // pred_check
          %p536 = pneg %p93
        $region22: #{bigram_lm_forward.1} parent=11 // pred_check_branch
          %538 = sbr.rel (%p536) target = $region24
        $region23: #{bigram_lm_forward.1} parent=11 // pred_region
          %s540 = ssub.s32 2048, 2048
          %541 = vsyncadd [#allocation7], %s540
          %s542 = sshll.u32 [#allocation6], 4
          %s543 = int_to_ptr.vmem [resolvable:$true] %s542
          %548 = dma.hbm_to_vmem [thread:$0]  %s2, 2048, %s543, [#allocation7], 128, 128, 8
        $region24: #{bigram_lm_forward.1} parent=11 // pred_fallthru
          _
        // Predicated region
        $region25: #{bigram_lm_forward.1} parent=11 // pred_check
          %p549 = pneg %p114
        $region26: #{bigram_lm_forward.1} parent=11 // pred_check_branch
          %551 = sbr.rel (%p549) target = $region28
        $region27: #{bigram_lm_forward.1} parent=11 // pred_region
          _
        $region28: #{bigram_lm_forward.1} parent=11 // pred_fallthru
          _
        // Predicated region
        $region29: #{bigram_lm_forward.1} parent=11 // pred_check
          %p552 = pneg %p421
        $region30: #{bigram_lm_forward.1} parent=11 // pred_check_branch
          %554 = sbr.rel (%p552) target = $region32
        $region31: #{bigram_lm_forward.1} parent=11 // pred_region
          %s556 = ssub.s32 16, 16
          %557 = vsyncadd [#allocation7], %s556
          %s559 = sshll.u32 [#allocation18], 4
          %s560 = int_to_ptr.vmem [resolvable:$true] %s559
          %562 = dma.hbm_to_vmem [thread:$0]  %s15, 16, %s560, [#allocation7]
        $region32: #{bigram_lm_forward.1} parent=11 // pred_fallthru
          _
        // Predicated region
        $region33: #{bigram_lm_forward.1} parent=11 // pred_check
          %p563 = pneg %p442
        $region34: #{bigram_lm_forward.1} parent=11 // pred_check_branch
          %565 = sbr.rel (%p563) target = $region36
        $region35: #{bigram_lm_forward.1} parent=11 // pred_region
          %s567 = ssub.s32 16, 16
          %568 = vsyncadd [#allocation20], %s567
          %s570 = sshll.u32 [#allocation19], 4
          %s571 = int_to_ptr.vmem [resolvable:$true] %s570
          %573 = dma.hbm_to_vmem [thread:$0]  %s16, 16, %s571, [#allocation20]
        $region36: #{bigram_lm_forward.1} parent=11 // pred_fallthru
          _
        // Predicated region
        $region37: #{bigram_lm_forward.1} parent=11 // pred_check
          %p574 = pneg %p463
        $region38: #{bigram_lm_forward.1} parent=11 // pred_check_branch
          %576 = sbr.rel (%p574) target = $region40
        $region39: #{bigram_lm_forward.1} parent=11 // pred_region
          %s578 = ssub.s32 1024, 1024
          %579 = vsyncadd [#allocation20], %s578
          %s580 = sshll.u32 [#allocation21], 4
          %s581 = int_to_ptr.vmem [resolvable:$true] %s580
          %586 = dma.hbm_to_vmem [thread:$0]  %s17, 1024, %s581, [#allocation20], 64, 64, 4
        $region40: #{bigram_lm_forward.1} parent=11 // pred_fallthru
          _
        // Predicated region
        $region41: #{bigram_lm_forward.1} parent=11 // pred_check
          %p587 = pneg %p484
        $region42: #{bigram_lm_forward.1} parent=11 // pred_check_branch
          %589 = sbr.rel (%p587) target = $region44
        $region43: #{bigram_lm_forward.1} parent=11 // pred_region
          %s591 = ssub.s32 16, 16
          %592 = vsyncadd [#allocation23], %s591
          %s594 = sshll.u32 [#allocation22], 4
          %s595 = int_to_ptr.vmem [resolvable:$true] %s594
          %597 = dma.hbm_to_vmem [thread:$0]  %s18, 16, %s595, [#allocation23]
        $region44: #{bigram_lm_forward.1} parent=11 // pred_fallthru
          _
      $region12: #{bigram_lm_forward.1} parent=5 // pred_fallthru
        _
      %p598 = scmp.lt.s32.totalorder %s30, 2
      // Predicated region
      $region45: #{bigram_lm_forward.1} parent=5 // pred_check
        %p599 = pneg %p598
      $region46: #{bigram_lm_forward.1} parent=5 // pred_check_branch
        %601 = sbr.rel (%p599) target = $region48
      $region47: #{bigram_lm_forward.1} parent=5 // pred_region
        // Predicated region
        $region49: #{bigram_lm_forward.1} parent=47 // pred_check
          %p602 = pneg %p134
        $region50: #{bigram_lm_forward.1} parent=47 // pred_check_branch
          %604 = sbr.rel (%p602) target = $region52
        $region51: #{bigram_lm_forward.1} parent=47 // pred_region
          %s605 = sand.u32 %s30, 1
          %s606 = scalar_lea.sflag [#allocation4], %s605
          %s607 = sand.u32 %s124, 1
          %s608 = scalar_lea.vmem [#allocation8], %s607
          %s610 = ssub.s32 16, 16
          %611 = vsyncadd %s606, %s610
          %s612 = smul.addr %s30, 16
          %s613 = scalar_lea.hbm %s4, %s612
          %s615 = sshll.u32 %s608, 4
          %s616 = int_to_ptr.vmem [resolvable:$true] %s615
          %618 = dma.hbm_to_vmem [thread:$0]  %s613, 16, %s616, %s606
        $region52: #{bigram_lm_forward.1} parent=47 // pred_fallthru
          _
        // Predicated region
        $region53: #{bigram_lm_forward.1} parent=47 // pred_check
          %p619 = pneg %p160
        $region54: #{bigram_lm_forward.1} parent=47 // pred_check_branch
          %621 = sbr.rel (%p619) target = $region56
        $region55: #{bigram_lm_forward.1} parent=47 // pred_region
          %s622 = sand.u32 %s30, 1
          %s623 = scalar_lea.sflag [#allocation4], %s622
          %s624 = sand.u32 %s150, 1
          %s625 = scalar_lea.vmem [#allocation9], %s624
          %s627 = ssub.s32 16, 16
          %628 = vsyncadd %s623, %s627
          %s629 = smul.addr %s30, 16
          %s630 = scalar_lea.hbm %s5, %s629
          %s632 = sshll.u32 %s625, 4
          %s633 = int_to_ptr.vmem [resolvable:$true] %s632
          %635 = dma.hbm_to_vmem [thread:$0]  %s630, 16, %s633, %s623
        $region56: #{bigram_lm_forward.1} parent=47 // pred_fallthru
          _
        // Predicated region
        $region57: #{bigram_lm_forward.1} parent=47 // pred_check
          %p636 = pneg %p186
        $region58: #{bigram_lm_forward.1} parent=47 // pred_check_branch
          %638 = sbr.rel (%p636) target = $region60
        $region59: #{bigram_lm_forward.1} parent=47 // pred_region
          %s639 = sand.u32 %s30, 1
          %s640 = scalar_lea.sflag [#allocation4], %s639
          %s641 = sand.u32 %s176, 1
          %s642 = smul.addr %s641, 192
          %s643 = scalar_lea.vmem [#allocation10], %s642
          %s645 = ssub.s32 3072, 3072
          %646 = vsyncadd %s640, %s645
          %s647 = smul.addr %s30, 48
          %s648 = smul.addr %s647, 64
          %s649 = scalar_lea.hbm %s6, %s648
          %s650 = sshll.u32 %s643, 4
          %s651 = int_to_ptr.vmem [resolvable:$true] %s650
          %656 = dma.hbm_to_vmem [thread:$0]  %s649, 3072, %s651, %s640, 192, 192, 12
        $region60: #{bigram_lm_forward.1} parent=47 // pred_fallthru
          _
        // Predicated region
        $region61: #{bigram_lm_forward.1} parent=47 // pred_check
          %p657 = pneg %p212
        $region62: #{bigram_lm_forward.1} parent=47 // pred_check_branch
          %659 = sbr.rel (%p657) target = $region64
        $region63: #{bigram_lm_forward.1} parent=47 // pred_region
          %s660 = sand.u32 %s30, 1
          %s661 = scalar_lea.sflag [#allocation4], %s660
          %s662 = sand.u32 %s202, 1
          %s663 = smul.addr %s662, 64
          %s664 = scalar_lea.vmem [#allocation11], %s663
          %s666 = ssub.s32 1024, 1024
          %667 = vsyncadd %s661, %s666
          %s668 = smul.addr %s30, 16
          %s669 = smul.addr %s668, 64
          %s670 = scalar_lea.hbm %s7, %s669
          %s671 = sshll.u32 %s664, 4
          %s672 = int_to_ptr.vmem [resolvable:$true] %s671
          %677 = dma.hbm_to_vmem [thread:$0]  %s670, 1024, %s672, %s661, 64, 64, 4
        $region64: #{bigram_lm_forward.1} parent=47 // pred_fallthru
          _
        // Predicated region
        $region65: #{bigram_lm_forward.1} parent=47 // pred_check
          %p678 = pneg %p238
        $region66: #{bigram_lm_forward.1} parent=47 // pred_check_branch
          %680 = sbr.rel (%p678) target = $region68
        $region67: #{bigram_lm_forward.1} parent=47 // pred_region
          %s681 = sand.u32 %s30, 1
          %s682 = scalar_lea.sflag [#allocation4], %s681
          %s683 = sand.u32 %s228, 1
          %s684 = scalar_lea.vmem [#allocation12], %s683
          %s686 = ssub.s32 16, 16
          %687 = vsyncadd %s682, %s686
          %s688 = smul.addr %s30, 16
          %s689 = scalar_lea.hbm %s8, %s688
          %s691 = sshll.u32 %s684, 4
          %s692 = int_to_ptr.vmem [resolvable:$true] %s691
          %694 = dma.hbm_to_vmem [thread:$0]  %s689, 16, %s692, %s682
        $region68: #{bigram_lm_forward.1} parent=47 // pred_fallthru
          _
        // Predicated region
        $region69: #{bigram_lm_forward.1} parent=47 // pred_check
          %p695 = pneg %p264
        $region70: #{bigram_lm_forward.1} parent=47 // pred_check_branch
          %697 = sbr.rel (%p695) target = $region72
        $region71: #{bigram_lm_forward.1} parent=47 // pred_region
          %s698 = sand.u32 %s30, 1
          %s699 = scalar_lea.sflag [#allocation4], %s698
          %s700 = sand.u32 %s254, 1
          %s701 = scalar_lea.vmem [#allocation13], %s700
          %s703 = ssub.s32 16, 16
          %704 = vsyncadd %s699, %s703
          %s705 = smul.addr %s30, 16
          %s706 = scalar_lea.hbm %s9, %s705
          %s708 = sshll.u32 %s701, 4
          %s709 = int_to_ptr.vmem [resolvable:$true] %s708
          %711 = dma.hbm_to_vmem [thread:$0]  %s706, 16, %s709, %s699
        $region72: #{bigram_lm_forward.1} parent=47 // pred_fallthru
          _
        // Predicated region
        $region73: #{bigram_lm_forward.1} parent=47 // pred_check
          %p712 = pneg %p290
        $region74: #{bigram_lm_forward.1} parent=47 // pred_check_branch
          %714 = sbr.rel (%p712) target = $region76
        $region75: #{bigram_lm_forward.1} parent=47 // pred_region
          %s715 = sand.u32 %s30, 1
          %s716 = scalar_lea.sflag [#allocation4], %s715
          %s717 = sand.u32 %s280, 1
          %s718 = scalar_lea.vmem [#allocation14], %s717
          %s720 = ssub.s32 16, 16
          %721 = vsyncadd %s716, %s720
          %s722 = smul.addr %s30, 16
          %s723 = scalar_lea.hbm %s10, %s722
          %s725 = sshll.u32 %s718, 4
          %s726 = int_to_ptr.vmem [resolvable:$true] %s725
          %728 = dma.hbm_to_vmem [thread:$0]  %s723, 16, %s726, %s716
        $region76: #{bigram_lm_forward.1} parent=47 // pred_fallthru
          _
        // Predicated region
        $region77: #{bigram_lm_forward.1} parent=47 // pred_check
          %p729 = pneg %p316
        $region78: #{bigram_lm_forward.1} parent=47 // pred_check_branch
          %731 = sbr.rel (%p729) target = $region80
        $region79: #{bigram_lm_forward.1} parent=47 // pred_region
          %p732 = scmp.lt.s32.totalorder %s30, 1
          %s733 = scalar_select %p732, %s30, 1
          %s734 = smul.addr %s733, 64
          %s735 = smul.addr %s734, 4
          %s736 = scalar_lea.vmem %s11, %s735
        $region80: #{bigram_lm_forward.1} parent=47 // pred_fallthru
          _
        // Predicated region
        $region81: #{bigram_lm_forward.1} parent=47 // pred_check
          %p737 = pneg %p342
        $region82: #{bigram_lm_forward.1} parent=47 // pred_check_branch
          %739 = sbr.rel (%p737) target = $region84
        $region83: #{bigram_lm_forward.1} parent=47 // pred_region
          %s740 = sand.u32 %s30, 1
          %s741 = scalar_lea.sflag [#allocation4], %s740
          %s742 = sand.u32 %s332, 1
          %s743 = smul.addr %s742, 4
          %s744 = scalar_lea.vmem [#allocation15], %s743
          %s746 = ssub.s32 64, 64
          %747 = vsyncadd %s741, %s746
          %s748 = smul.addr %s30, 4
          %s749 = smul.addr %s748, 16
          %s750 = scalar_lea.hbm %s12, %s749
          %s752 = sshll.u32 %s744, 4
          %s753 = int_to_ptr.vmem [resolvable:$true] %s752
          %755 = dma.hbm_to_vmem [thread:$0]  %s750, 64, %s753, %s741
        $region84: #{bigram_lm_forward.1} parent=47 // pred_fallthru
          _
        // Predicated region
        $region85: #{bigram_lm_forward.1} parent=47 // pred_check
          %p756 = pneg %p368
        $region86: #{bigram_lm_forward.1} parent=47 // pred_check_branch
          %758 = sbr.rel (%p756) target = $region88
        $region87: #{bigram_lm_forward.1} parent=47 // pred_region
          %s759 = sand.u32 %s30, 1
          %s760 = scalar_lea.sflag [#allocation4], %s759
          %s761 = sand.u32 %s358, 1
          %s762 = smul.addr %s761, 256
          %s763 = scalar_lea.vmem [#allocation16], %s762
          %s765 = ssub.s32 4096, 4096
          %766 = vsyncadd %s760, %s765
          %s767 = smul.addr %s30, 64
          %s768 = smul.addr %s767, 64
          %s769 = scalar_lea.hbm %s13, %s768
          %s770 = sshll.u32 %s763, 4
          %s771 = int_to_ptr.vmem [resolvable:$true] %s770
          %776 = dma.hbm_to_vmem [thread:$0]  %s769, 4096, %s771, %s760, 64, 64, 4
        $region88: #{bigram_lm_forward.1} parent=47 // pred_fallthru
          _
        // Predicated region
        $region89: #{bigram_lm_forward.1} parent=47 // pred_check
          %p777 = pneg %p394
        $region90: #{bigram_lm_forward.1} parent=47 // pred_check_branch
          %779 = sbr.rel (%p777) target = $region92
        $region91: #{bigram_lm_forward.1} parent=47 // pred_region
          %s780 = sand.u32 %s30, 1
          %s781 = scalar_lea.sflag [#allocation4], %s780
          %s782 = sand.u32 %s384, 1
          %s783 = scalar_lea.vmem [#allocation17], %s782
          %s785 = ssub.s32 16, 16
          %786 = vsyncadd %s781, %s785
          %s787 = smul.addr %s30, 16
          %s788 = scalar_lea.hbm %s14, %s787
          %s790 = sshll.u32 %s783, 4
          %s791 = int_to_ptr.vmem [resolvable:$true] %s790
          %793 = dma.hbm_to_vmem [thread:$0]  %s788, 16, %s791, %s781
        $region92: #{bigram_lm_forward.1} parent=47 // pred_fallthru
          _
      $region48: #{bigram_lm_forward.1} parent=5 // pred_fallthru
        _
      %p794 = scmp.le.s32.totalorder 1, %s30
      %p795 = scmp.lt.s32.totalorder %s30, 3
      %p796 = pnand %p794, %p795
      %p797 = pneg %p796
      // Predicated region
      $region93: #{bigram_lm_forward.1} parent=5 // pred_check
        _
      $region94: #{bigram_lm_forward.1} parent=5 // pred_check_branch
        %799 = sbr.rel (%p796) target = $region96
      $region95: #{bigram_lm_forward.1} parent=5 // pred_region
        %s800 = ssub.s32 %s30, 1
        // Predicated region
        $region97: #{bigram_lm_forward.1} parent=95 // pred_check
          %p801 = pneg %p72
        $region98: #{bigram_lm_forward.1} parent=95 // pred_check_branch
          %803 = sbr.rel (%p801) target = $region100
        $region99: #{bigram_lm_forward.1} parent=95 // pred_region
          %804 = dma.done [#allocation4], 512
        $region100: #{bigram_lm_forward.1} parent=95 // pred_fallthru
          _
        // Predicated region
        $region101: #{bigram_lm_forward.1} parent=95 // pred_check
          %p805 = pneg %p93
        $region102: #{bigram_lm_forward.1} parent=95 // pred_check_branch
          %807 = sbr.rel (%p805) target = $region104
        $region103: #{bigram_lm_forward.1} parent=95 // pred_region
          %808 = dma.done [#allocation7], 2048
        $region104: #{bigram_lm_forward.1} parent=95 // pred_fallthru
          _
        %s809 = sand.u32 %s35, 1
        %s810 = scalar_lea.sflag [#allocation4], %s809
        %s811 = sand.u32 %s127, 1
        %s812 = scalar_lea.vmem [#allocation8], %s811
        // Predicated region
        $region105: #{bigram_lm_forward.1} parent=95 // pred_check
          %p813 = pneg %p140
        $region106: #{bigram_lm_forward.1} parent=95 // pred_check_branch
          %815 = sbr.rel (%p813) target = $region108
        $region107: #{bigram_lm_forward.1} parent=95 // pred_region
          %816 = dma.done %s810, 16
        $region108: #{bigram_lm_forward.1} parent=95 // pred_fallthru
          _
        %s817 = sand.u32 %s35, 1
        %s818 = scalar_lea.sflag [#allocation4], %s817
        %s819 = sand.u32 %s153, 1
        %s820 = scalar_lea.vmem [#allocation9], %s819
        // Predicated region
        $region109: #{bigram_lm_forward.1} parent=95 // pred_check
          %p821 = pneg %p166
        $region110: #{bigram_lm_forward.1} parent=95 // pred_check_branch
          %823 = sbr.rel (%p821) target = $region112
        $region111: #{bigram_lm_forward.1} parent=95 // pred_region
          %824 = dma.done %s818, 16
        $region112: #{bigram_lm_forward.1} parent=95 // pred_fallthru
          _
        %s825 = sand.u32 %s35, 1
        %s826 = scalar_lea.sflag [#allocation4], %s825
        %s827 = sand.u32 %s179, 1
        %s828 = smul.addr %s827, 192
        %s829 = scalar_lea.vmem [#allocation10], %s828
        // Predicated region
        $region113: #{bigram_lm_forward.1} parent=95 // pred_check
          %p830 = pneg %p192
        $region114: #{bigram_lm_forward.1} parent=95 // pred_check_branch
          %832 = sbr.rel (%p830) target = $region116
        $region115: #{bigram_lm_forward.1} parent=95 // pred_region
          %833 = dma.done %s826, 3072
        $region116: #{bigram_lm_forward.1} parent=95 // pred_fallthru
          _
        %s834 = sand.u32 %s35, 1
        %s835 = scalar_lea.sflag [#allocation4], %s834
        %s836 = sand.u32 %s205, 1
        %s837 = smul.addr %s836, 64
        %s838 = scalar_lea.vmem [#allocation11], %s837
        // Predicated region
        $region117: #{bigram_lm_forward.1} parent=95 // pred_check
          %p839 = pneg %p218
        $region118: #{bigram_lm_forward.1} parent=95 // pred_check_branch
          %841 = sbr.rel (%p839) target = $region120
        $region119: #{bigram_lm_forward.1} parent=95 // pred_region
          %842 = dma.done %s835, 1024
        $region120: #{bigram_lm_forward.1} parent=95 // pred_fallthru
          _
        %s843 = sand.u32 %s35, 1
        %s844 = scalar_lea.sflag [#allocation4], %s843
        %s845 = sand.u32 %s231, 1
        %s846 = scalar_lea.vmem [#allocation12], %s845
        // Predicated region
        $region121: #{bigram_lm_forward.1} parent=95 // pred_check
          %p847 = pneg %p244
        $region122: #{bigram_lm_forward.1} parent=95 // pred_check_branch
          %849 = sbr.rel (%p847) target = $region124
        $region123: #{bigram_lm_forward.1} parent=95 // pred_region
          %850 = dma.done %s844, 16
        $region124: #{bigram_lm_forward.1} parent=95 // pred_fallthru
          _
        %s851 = sand.u32 %s35, 1
        %s852 = scalar_lea.sflag [#allocation4], %s851
        %s853 = sand.u32 %s257, 1
        %s854 = scalar_lea.vmem [#allocation13], %s853
        // Predicated region
        $region125: #{bigram_lm_forward.1} parent=95 // pred_check
          %p855 = pneg %p270
        $region126: #{bigram_lm_forward.1} parent=95 // pred_check_branch
          %857 = sbr.rel (%p855) target = $region128
        $region127: #{bigram_lm_forward.1} parent=95 // pred_region
          %858 = dma.done %s852, 16
        $region128: #{bigram_lm_forward.1} parent=95 // pred_fallthru
          _
        %s859 = sand.u32 %s35, 1
        %s860 = scalar_lea.sflag [#allocation4], %s859
        %s861 = sand.u32 %s283, 1
        %s862 = scalar_lea.vmem [#allocation14], %s861
        // Predicated region
        $region129: #{bigram_lm_forward.1} parent=95 // pred_check
          %p863 = pneg %p296
        $region130: #{bigram_lm_forward.1} parent=95 // pred_check_branch
          %865 = sbr.rel (%p863) target = $region132
        $region131: #{bigram_lm_forward.1} parent=95 // pred_region
          %866 = dma.done %s860, 16
        $region132: #{bigram_lm_forward.1} parent=95 // pred_fallthru
          _
        %s867 = sand.u32 %s35, 1
        %s868 = scalar_lea.sflag [#allocation4], %s867
        %s869 = sand.u32 %s335, 1
        %s870 = smul.addr %s869, 4
        %s871 = scalar_lea.vmem [#allocation15], %s870
        // Predicated region
        $region133: #{bigram_lm_forward.1} parent=95 // pred_check
          %p872 = pneg %p348
        $region134: #{bigram_lm_forward.1} parent=95 // pred_check_branch
          %874 = sbr.rel (%p872) target = $region136
        $region135: #{bigram_lm_forward.1} parent=95 // pred_region
          %875 = dma.done %s868, 64
        $region136: #{bigram_lm_forward.1} parent=95 // pred_fallthru
          _
        %s876 = sand.u32 %s35, 1
        %s877 = scalar_lea.sflag [#allocation4], %s876
        %s878 = sand.u32 %s361, 1
        %s879 = smul.addr %s878, 256
        %s880 = scalar_lea.vmem [#allocation16], %s879
        // Predicated region
        $region137: #{bigram_lm_forward.1} parent=95 // pred_check
          %p881 = pneg %p374
        $region138: #{bigram_lm_forward.1} parent=95 // pred_check_branch
          %883 = sbr.rel (%p881) target = $region140
        $region139: #{bigram_lm_forward.1} parent=95 // pred_region
          %884 = dma.done %s877, 4096
        $region140: #{bigram_lm_forward.1} parent=95 // pred_fallthru
          _
        %s885 = sand.u32 %s35, 1
        %s886 = scalar_lea.sflag [#allocation4], %s885
        %s887 = sand.u32 %s387, 1
        %s888 = scalar_lea.vmem [#allocation17], %s887
        // Predicated region
        $region141: #{bigram_lm_forward.1} parent=95 // pred_check
          %p889 = pneg %p400
        $region142: #{bigram_lm_forward.1} parent=95 // pred_check_branch
          %891 = sbr.rel (%p889) target = $region144
        $region143: #{bigram_lm_forward.1} parent=95 // pred_region
          %892 = dma.done %s886, 16
        $region144: #{bigram_lm_forward.1} parent=95 // pred_fallthru
          _
        // Predicated region
        $region145: #{bigram_lm_forward.1} parent=95 // pred_check
          %p893 = pneg %p421
        $region146: #{bigram_lm_forward.1} parent=95 // pred_check_branch
          %895 = sbr.rel (%p893) target = $region148
        $region147: #{bigram_lm_forward.1} parent=95 // pred_region
          %896 = dma.done [#allocation7], 16
        $region148: #{bigram_lm_forward.1} parent=95 // pred_fallthru
          _
        // Predicated region
        $region149: #{bigram_lm_forward.1} parent=95 // pred_check
          %p897 = pneg %p442
        $region150: #{bigram_lm_forward.1} parent=95 // pred_check_branch
          %899 = sbr.rel (%p897) target = $region152
        $region151: #{bigram_lm_forward.1} parent=95 // pred_region
          %900 = dma.done [#allocation20], 16
        $region152: #{bigram_lm_forward.1} parent=95 // pred_fallthru
          _
        // Predicated region
        $region153: #{bigram_lm_forward.1} parent=95 // pred_check
          %p901 = pneg %p463
        $region154: #{bigram_lm_forward.1} parent=95 // pred_check_branch
          %903 = sbr.rel (%p901) target = $region156
        $region155: #{bigram_lm_forward.1} parent=95 // pred_region
          %904 = dma.done [#allocation20], 1024
        $region156: #{bigram_lm_forward.1} parent=95 // pred_fallthru
          _
        // Predicated region
        $region157: #{bigram_lm_forward.1} parent=95 // pred_check
          %p905 = pneg %p484
        $region158: #{bigram_lm_forward.1} parent=95 // pred_check_branch
          %907 = sbr.rel (%p905) target = $region160
        $region159: #{bigram_lm_forward.1} parent=95 // pred_region
          %908 = dma.done [#allocation23], 16
        $region160: #{bigram_lm_forward.1} parent=95 // pred_fallthru
          _
        %p909 = pneg %p51
        %p910 = pneg %p48
        %p911 = pneg %p72
        %p912 = pneg %p69
        %p913 = pneg %p93
        %p914 = pneg %p90
        %p915 = pneg %p114
        %p916 = pneg %p111
        %s917 = sand.u32 %s35, 1
        %s918 = scalar_lea.sflag [#allocation4], %s917
        %s919 = sand.u32 %s127, 1
        %s920 = scalar_lea.vmem [#allocation8], %s919
        %p921 = pneg %p140
        %p922 = pneg %p137
        %s923 = sand.u32 %s35, 1
        %s924 = scalar_lea.sflag [#allocation4], %s923
        %s925 = sand.u32 %s153, 1
        %s926 = scalar_lea.vmem [#allocation9], %s925
        %p927 = pneg %p166
        %p928 = pneg %p163
        %s929 = sand.u32 %s35, 1
        %s930 = scalar_lea.sflag [#allocation4], %s929
        %s931 = sand.u32 %s179, 1
        %s932 = smul.addr %s931, 192
        %s933 = scalar_lea.vmem [#allocation10], %s932
        %p934 = pneg %p192
        %p935 = pneg %p189
        %s936 = sand.u32 %s35, 1
        %s937 = scalar_lea.sflag [#allocation4], %s936
        %s938 = sand.u32 %s205, 1
        %s939 = smul.addr %s938, 64
        %s940 = scalar_lea.vmem [#allocation11], %s939
        %p941 = pneg %p218
        %p942 = pneg %p215
        %s943 = sand.u32 %s35, 1
        %s944 = scalar_lea.sflag [#allocation4], %s943
        %s945 = sand.u32 %s231, 1
        %s946 = scalar_lea.vmem [#allocation12], %s945
        %p947 = pneg %p244
        %p948 = pneg %p241
        %s949 = sand.u32 %s35, 1
        %s950 = scalar_lea.sflag [#allocation4], %s949
        %s951 = sand.u32 %s257, 1
        %s952 = scalar_lea.vmem [#allocation13], %s951
        %p953 = pneg %p270
        %p954 = pneg %p267
        %s955 = sand.u32 %s35, 1
        %s956 = scalar_lea.sflag [#allocation4], %s955
        %s957 = sand.u32 %s283, 1
        %s958 = scalar_lea.vmem [#allocation14], %s957
        %p959 = pneg %p296
        %p960 = pneg %p293
        %p961 = scmp.lt.s32.totalorder %s35, 1
        %s962 = scalar_select %p961, %s35, 1
        %s963 = smul.addr %s962, 64
        %s964 = smul.addr %s963, 4
        %s965 = scalar_lea.vmem %s11, %s964
        %p966 = pneg %p322
        %p967 = pneg %p319
        %s968 = sand.u32 %s35, 1
        %s969 = scalar_lea.sflag [#allocation4], %s968
        %s970 = sand.u32 %s335, 1
        %s971 = smul.addr %s970, 4
        %s972 = scalar_lea.vmem [#allocation15], %s971
        %p973 = pneg %p348
        %p974 = pneg %p345
        %s975 = sand.u32 %s35, 1
        %s976 = scalar_lea.sflag [#allocation4], %s975
        %s977 = sand.u32 %s361, 1
        %s978 = smul.addr %s977, 256
        %s979 = scalar_lea.vmem [#allocation16], %s978
        %p980 = pneg %p374
        %p981 = pneg %p371
        %s982 = sand.u32 %s35, 1
        %s983 = scalar_lea.sflag [#allocation4], %s982
        %s984 = sand.u32 %s387, 1
        %s985 = scalar_lea.vmem [#allocation17], %s984
        %p986 = pneg %p400
        %p987 = pneg %p397
        %p988 = pneg %p421
        %p989 = pneg %p418
        %p990 = pneg %p442
        %p991 = pneg %p439
        %p992 = pneg %p463
        %p993 = pneg %p460
        %p994 = pneg %p484
        %p995 = pneg %p481
        %p996 = pneg %p505
        %p997 = pneg %p502
        %p998 = scmp.lt.s32.totalorder %s35, 1
        %s999 = scalar_select %p998, %s35, 1
        %s1000 = smul.addr %s999, 64
        %s1001 = smul.addr %s1000, 4
        %s1002 = scalar_lea.vmem %s11, %s1001
        %p1004 = scmp.eq.s32.totalorder %s35, 0
        // Predicated region
        $region161: #{bigram_lm_forward.1} parent=95 // pred_check
          %p1005 = pneg %p1004
        $region162: #{bigram_lm_forward.1} parent=95 // pred_check_branch
          %1007 = sbr.rel (%p1005) target = $region164
        $region163: #{bigram_lm_forward.1} parent=95 // pred_region
          %v1008 = vld [vmem:[%s0] sm:$0xff]
          %v1009 = vld [vmem:[%s0 + $0x8] sm:$0xff]
          %v1010 = vld [vmem:[%s0 + $0x10] sm:$0xff]
          %v1011 = vld [vmem:[%s0 + $0x18] sm:$0xff]
          %1012 = vst [vmem:[#allocation2] sm:$0xff] %v1008
          %1013 = vst [vmem:[#allocation2 + $0x8] sm:$0xff] %v1009
          %1014 = vst [vmem:[#allocation2 + $0x10] sm:$0xff] %v1010
          %1015 = vst [vmem:[#allocation2 + $0x18] sm:$0xff] %v1011
        $region164: #{bigram_lm_forward.1} parent=95 // pred_fallthru
          _
        %v1016 = vld [vmem:[#allocation2] sm:$0xff]
        %v1017 = vld [vmem:[#allocation2 + $0x8] sm:$0xff]
        %v1018 = vld [vmem:[#allocation2 + $0x10] sm:$0xff]
        %v1019 = vld [vmem:[#allocation2 + $0x18] sm:$0xff]
        %v1020 = vld [vmem:[%s812] sm:$0x1]
        %v1021 = vld [vmem:[%s820] sm:$0x1]
        %1022 = vadd.xlane.f32.xlu0 %v1016
        %v1023 = vpop.xlane.xlu0 %1022
        %1024 = vadd.xlane.f32.xlu0 %v1017
        %v1025 = vpop.xlane.xlu0 %1024
        %1026 = vadd.xlane.f32.xlu0 %v1018
        %v1027 = vpop.xlane.xlu0 %1026
        %1028 = vadd.xlane.f32.xlu0 %v1019
        %v1029 = vpop.xlane.xlu0 %1028
        %v1030 = vrcp.pop 128.0
        %v1031 = vmul.f32 %v1023, %v1030
        %v1032 = vmul.f32 %v1025, %v1030
        %v1033 = vmul.f32 %v1027, %v1030
        %v1034 = vmul.f32 %v1029, %v1030
        %v1035 = vsub.f32 %v1016, %v1031
        %v1036 = vsub.f32 %v1017, %v1032
        %v1037 = vsub.f32 %v1018, %v1033
        %v1038 = vsub.f32 %v1019, %v1034
        %v1039 = vmul.f32 %v1035, %v1035
        %v1040 = vmul.f32 %v1036, %v1036
        %v1041 = vmul.f32 %v1037, %v1037
        %v1042 = vmul.f32 %v1038, %v1038
        %1043 = vadd.xlane.f32.xlu0 %v1039
        %v1044 = vpop.xlane.xlu0 %1043
        %1045 = vadd.xlane.f32.xlu0 %v1040
        %v1046 = vpop.xlane.xlu0 %1045
        %1047 = vadd.xlane.f32.xlu0 %v1041
        %v1048 = vpop.xlane.xlu0 %1047
        %1049 = vadd.xlane.f32.xlu0 %v1042
        %v1050 = vpop.xlane.xlu0 %1049
        %v1051 = vmul.f32 %v1044, %v1030
        %v1052 = vmul.f32 %v1046, %v1030
        %v1053 = vmul.f32 %v1048, %v1030
        %v1054 = vmul.f32 %v1050, %v1030
        %v1055 = vadd.f32 %v1051, 1e-05
        %v1056 = vadd.f32 %v1052, 1e-05
        %v1057 = vadd.f32 %v1053, 1e-05
        %v1058 = vadd.f32 %v1054, 1e-05
        %v1059 = vrsqrt.pop %v1055
        %v1060 = vrsqrt.pop %v1056
        %v1061 = vrsqrt.pop %v1057
        %v1062 = vrsqrt.pop %v1058
        %v1063 = vmul.f32 %v1035, %v1059
        %v1064 = vmul.f32 %v1036, %v1060
        %v1065 = vmul.f32 %v1037, %v1061
        %v1066 = vmul.f32 %v1038, %v1062
        %v1068 = vlaneseq
        %v1069 = vshrl.u32 %v1068, 7
        %v1070 = vsub.s32 0, %v1069
        %v1071 = vrot.slane %v1020, %v1070
        %v1073 = vmul.f32 %v1063, %v1071
        %v1074 = vmul.f32 %v1064, %v1071
        %v1075 = vmul.f32 %v1065, %v1071
        %v1076 = vmul.f32 %v1066, %v1071
        %v1078 = vlaneseq
        %v1079 = vshrl.u32 %v1078, 7
        %v1080 = vsub.s32 0, %v1079
        %v1081 = vrot.slane %v1021, %v1080
        %v1083 = vadd.f32 %v1073, %v1081
        %v1084 = vadd.f32 %v1074, %v1081
        %v1085 = vadd.f32 %v1075, %v1081
        %v1086 = vadd.f32 %v1076, %v1081
        %v1087 = vpack.c.bf16 %v1084, %v1083
        %v1088 = vpack.c.bf16 %v1086, %v1085
        %v1089 = vld [vmem:[%s829] sm:$0xff]
        %v1090 = vld [vmem:[%s829 + $0x8] sm:$0xf]
        %v1091 = vld [vmem:[%s829 + $0xc] sm:$0xff]
        %v1092 = vld [vmem:[%s829 + $0x14] sm:$0xf]
        %v1093 = vld [vmem:[%s829 + $0x18] sm:$0xff]
        %v1094 = vld [vmem:[%s829 + $0x20] sm:$0xf]
        %v1095 = vld [vmem:[%s829 + $0x24] sm:$0xff]
        %v1096 = vld [vmem:[%s829 + $0x2c] sm:$0xf]
        %v1097 = vld [vmem:[%s829 + $0x30] sm:$0xff]
        %v1098 = vld [vmem:[%s829 + $0x38] sm:$0xf]
        %v1099 = vld [vmem:[%s829 + $0x3c] sm:$0xff]
        %v1100 = vld [vmem:[%s829 + $0x44] sm:$0xf]
        %v1101 = vld [vmem:[%s829 + $0x48] sm:$0xff]
        %v1102 = vld [vmem:[%s829 + $0x50] sm:$0xf]
        %v1103 = vld [vmem:[%s829 + $0x54] sm:$0xff]
        %v1104 = vld [vmem:[%s829 + $0x5c] sm:$0xf]
        %v1105 = vld [vmem:[%s829 + $0x60] sm:$0xff]
        %v1106 = vld [vmem:[%s829 + $0x68] sm:$0xf]
        %v1107 = vld [vmem:[%s829 + $0x6c] sm:$0xff]
        %v1108 = vld [vmem:[%s829 + $0x74] sm:$0xf]
        %v1109 = vld [vmem:[%s829 + $0x78] sm:$0xff]
        %v1110 = vld [vmem:[%s829 + $0x80] sm:$0xf]
        %v1111 = vld [vmem:[%s829 + $0x84] sm:$0xff]
        %v1112 = vld [vmem:[%s829 + $0x8c] sm:$0xf]
        %v1113 = vld [vmem:[%s829 + $0x90] sm:$0xff]
        %v1114 = vld [vmem:[%s829 + $0x98] sm:$0xf]
        %v1115 = vld [vmem:[%s829 + $0x9c] sm:$0xff]
        %v1116 = vld [vmem:[%s829 + $0xa4] sm:$0xf]
        %v1117 = vld [vmem:[%s829 + $0xa8] sm:$0xff]
        %v1118 = vld [vmem:[%s829 + $0xb0] sm:$0xf]
        %v1119 = vld [vmem:[%s829 + $0xb4] sm:$0xff]
        %v1120 = vld [vmem:[%s829 + $0xbc] sm:$0xf]
        %v1153 = vunpack.c.l.b16 %v1089
        %v1154 = vunpack.c.h.b16 %v1089
        %v1155 = vunpack.c.l.b16 %v1090
        %v1156 = vunpack.c.l.b16 %v1091
        %v1157 = vunpack.c.h.b16 %v1091
        %v1158 = vunpack.c.l.b16 %v1092
        %v1159 = vunpack.c.l.b16 %v1093
        %v1160 = vunpack.c.h.b16 %v1093
        %v1161 = vunpack.c.l.b16 %v1094
        %v1162 = vunpack.c.l.b16 %v1095
        %v1163 = vunpack.c.h.b16 %v1095
        %v1164 = vunpack.c.l.b16 %v1096
        %v1165 = vunpack.c.l.b16 %v1097
        %v1166 = vunpack.c.h.b16 %v1097
        %v1167 = vunpack.c.l.b16 %v1098
        %v1168 = vunpack.c.l.b16 %v1099
        %v1169 = vunpack.c.h.b16 %v1099
        %v1170 = vunpack.c.l.b16 %v1100
        %v1171 = vunpack.c.l.b16 %v1101
        %v1172 = vunpack.c.h.b16 %v1101
        %v1173 = vunpack.c.l.b16 %v1102
        %v1174 = vunpack.c.l.b16 %v1103
        %v1175 = vunpack.c.h.b16 %v1103
        %v1176 = vunpack.c.l.b16 %v1104
        %v1177 = vunpack.c.l.b16 %v1105
        %v1178 = vunpack.c.h.b16 %v1105
        %v1179 = vunpack.c.l.b16 %v1106
        %v1180 = vunpack.c.l.b16 %v1107
        %v1181 = vunpack.c.h.b16 %v1107
        %v1182 = vunpack.c.l.b16 %v1108
        %v1183 = vunpack.c.l.b16 %v1109
        %v1184 = vunpack.c.h.b16 %v1109
        %v1185 = vunpack.c.l.b16 %v1110
        %v1186 = vunpack.c.l.b16 %v1111
        %v1187 = vunpack.c.h.b16 %v1111
        %v1188 = vunpack.c.l.b16 %v1112
        %v1189 = vunpack.c.l.b16 %v1113
        %v1190 = vunpack.c.h.b16 %v1113
        %v1191 = vunpack.c.l.b16 %v1114
        %v1192 = vunpack.c.l.b16 %v1115
        %v1193 = vunpack.c.h.b16 %v1115
        %v1194 = vunpack.c.l.b16 %v1116
        %v1195 = vunpack.c.l.b16 %v1117
        %v1196 = vunpack.c.h.b16 %v1117
        %v1197 = vunpack.c.l.b16 %v1118
        %v1198 = vunpack.c.l.b16 %v1119
        %v1199 = vunpack.c.h.b16 %v1119
        %v1200 = vunpack.c.l.b16 %v1120
        %v1201 = vpack.c.b16 %v1156, %v1153
        %v1202 = vpack.c.b16 %v1157, %v1154
        %v1203 = vpack.c.b16 %v1158, %v1155
        %v1204 = vpack.c.b16 %v1162, %v1159
        %v1205 = vpack.c.b16 %v1163, %v1160
        %v1206 = vpack.c.b16 %v1164, %v1161
        %v1207 = vpack.c.b16 %v1168, %v1165
        %v1208 = vpack.c.b16 %v1169, %v1166
        %v1209 = vpack.c.b16 %v1170, %v1167
        %v1210 = vpack.c.b16 %v1174, %v1171
        %v1211 = vpack.c.b16 %v1175, %v1172
        %v1212 = vpack.c.b16 %v1176, %v1173
        %v1213 = vpack.c.b16 %v1180, %v1177
        %v1214 = vpack.c.b16 %v1181, %v1178
        %v1215 = vpack.c.b16 %v1182, %v1179
        %v1216 = vpack.c.b16 %v1186, %v1183
        %v1217 = vpack.c.b16 %v1187, %v1184
        %v1218 = vpack.c.b16 %v1188, %v1185
        %v1219 = vpack.c.b16 %v1192, %v1189
        %v1220 = vpack.c.b16 %v1193, %v1190
        %v1221 = vpack.c.b16 %v1194, %v1191
        %v1222 = vpack.c.b16 %v1198, %v1195
        %v1223 = vpack.c.b16 %v1199, %v1196
        %v1224 = vpack.c.b16 %v1200, %v1197
        %1249 = vmatprep.subr.bf16.mxu0 %v1202
        %1250 = vmatpush1.bf16.msra.mxu0 %v1201
        %1251 = vmatprep.subr.bf16.mxu0 %v1205
        %1252 = vmatpush1.bf16.msra.mxu0 %v1204
        %1253 = vmatprep.subr.bf16.mxu0 %v1208
        %1254 = vmatpush1.bf16.msra.mxu0 %v1207
        %1255 = vmatprep.subr.bf16.mxu0 %v1211
        %1256 = vmatpush1.bf16.msra.mxu0 %v1210
        %1257 = vmatprep.subr.bf16.mxu0 %v1214
        %1258 = vmatpush1.bf16.msra.mxu0 %v1213
        %1259 = vmatprep.subr.bf16.mxu0 %v1217
        %1260 = vmatpush1.bf16.msra.mxu0 %v1216
        %1261 = vmatprep.subr.bf16.mxu0 %v1220
        %1262 = vmatpush1.bf16.msra.mxu0 %v1219
        %1263 = vmatprep.subr.bf16.mxu0 %v1223
        %1264 = vmatpush1.bf16.msra.mxu0 %v1222
        %1265 = vmatprep.subr.bf16.mxu0 0
        %1266 = vmatpush1.bf16.msra.mxu0 0
        %1267 = vmatprep.subr.bf16.mxu0 0
        %1268 = vmatpush1.bf16.msra.mxu0 0
        %1269 = vmatprep.subr.bf16.mxu0 0
        %1270 = vmatpush1.bf16.msra.mxu0 0
        %1271 = vmatprep.subr.bf16.mxu0 0
        %1272 = vmatpush1.bf16.msra.mxu0 0
        %1273 = vmatprep.subr.bf16.mxu0 0
        %1274 = vmatpush1.bf16.msra.mxu0 0
        %1275 = vmatprep.subr.bf16.mxu0 0
        %1276 = vmatpush1.bf16.msra.mxu0 0
        %1277 = vmatprep.subr.bf16.mxu0 0
        %1278 = vmatpush1.bf16.msra.mxu0 0
        %1279 = vmatprep.subr.bf16.mxu0 0
        %1280 = vmatpush1.bf16.msra.mxu0 0
        %1281 = vmatprep.mubr.bf16.mxu0 0
        %1282 = vmatmul.mubr.bf16.gmra.mrb[0].mxu0 %v1087
        %v1283 = vpop.f32.mrb[0].mxu0
        %v1284 = vadd.f32 0.0, %v1283
        %v1285 = vpop.f32.mrb[0].mxu0
        %v1286 = vadd.f32 0.0, %v1285
        %v1287 = vpop.f32.mrb[0].mxu0
        %v1288 = vadd.f32 0.0, %v1287
        %v1289 = vpop.f32.mrb[0].mxu0
        %v1290 = vadd.f32 0.0, %v1289
        %1291 = vmatprep.mubr.bf16.mxu0 0
        %1292 = vmatmul.mubr.bf16.gmra.mrb[0].mxu0 %v1088
        %v1293 = vpop.f32.mrb[0].mxu0
        %v1294 = vadd.f32 0.0, %v1293
        %v1295 = vpop.f32.mrb[0].mxu0
        %v1296 = vadd.f32 0.0, %v1295
        %v1297 = vpop.f32.mrb[0].mxu0
        %v1298 = vadd.f32 0.0, %v1297
        %v1299 = vpop.f32.mrb[0].mxu0
        %v1300 = vadd.f32 0.0, %v1299
        %1301 = vdwg.mxu0
        %1302 = vmatprep.subr.bf16.mxu0 0
        %1303 = vmatpush1.bf16.msra.mxu0 %v1203
        %1304 = vmatprep.subr.bf16.mxu0 0
        %1305 = vmatpush1.bf16.msra.mxu0 %v1206
        %1306 = vmatprep.subr.bf16.mxu0 0
        %1307 = vmatpush1.bf16.msra.mxu0 %v1209
        %1308 = vmatprep.subr.bf16.mxu0 0
        %1309 = vmatpush1.bf16.msra.mxu0 %v1212
        %1310 = vmatprep.subr.bf16.mxu0 0
        %1311 = vmatpush1.bf16.msra.mxu0 %v1215
        %1312 = vmatprep.subr.bf16.mxu0 0
        %1313 = vmatpush1.bf16.msra.mxu0 %v1218
        %1314 = vmatprep.subr.bf16.mxu0 0
        %1315 = vmatpush1.bf16.msra.mxu0 %v1221
        %1316 = vmatprep.subr.bf16.mxu0 0
        %1317 = vmatpush1.bf16.msra.mxu0 %v1224
        %1318 = vmatprep.subr.bf16.mxu0 0
        %1319 = vmatpush1.bf16.msra.mxu0 0
        %1320 = vmatprep.subr.bf16.mxu0 0
        %1321 = vmatpush1.bf16.msra.mxu0 0
        %1322 = vmatprep.subr.bf16.mxu0 0
        %1323 = vmatpush1.bf16.msra.mxu0 0
        %1324 = vmatprep.subr.bf16.mxu0 0
        %1325 = vmatpush1.bf16.msra.mxu0 0
        %1326 = vmatprep.subr.bf16.mxu0 0
        %1327 = vmatpush1.bf16.msra.mxu0 0
        %1328 = vmatprep.subr.bf16.mxu0 0
        %1329 = vmatpush1.bf16.msra.mxu0 0
        %1330 = vmatprep.subr.bf16.mxu0 0
        %1331 = vmatpush1.bf16.msra.mxu0 0
        %1332 = vmatprep.subr.bf16.mxu0 0
        %1333 = vmatpush1.bf16.msra.mxu0 0
        %1334 = vmatprep.mubr.bf16.mxu0 0
        %1335 = vmatmul.mubr.bf16.gmra.mrb[0].mxu0 %v1087
        %v1336 = vpop.f32.mrb[0].mxu0
        %v1337 = vadd.f32 0.0, %v1336
        %v1338 = vpop.f32.mrb[0].mxu0
        %v1339 = vpop.f32.mrb[0].mxu0
        %v1340 = vadd.f32 0.0, %v1339
        %v1341 = vpop.f32.mrb[0].mxu0
        %1342 = vmatprep.mubr.bf16.mxu0 0
        %1343 = vmatmul.mubr.bf16.gmra.mrb[0].mxu0 %v1088
        %v1344 = vpop.f32.mrb[0].mxu0
        %v1345 = vadd.f32 0.0, %v1344
        %v1346 = vpop.f32.mrb[0].mxu0
        %v1347 = vpop.f32.mrb[0].mxu0
        %v1348 = vadd.f32 0.0, %v1347
        %v1349 = vpop.f32.mrb[0].mxu0
        %1350 = vdwg.mxu0
        %v1351 = vpack.c.bf16 %v1288, %v1284
        %v1352 = vpack.c.bf16 %v1298, %v1294
        %v1353 = vld [vmem:[#allocation6] sm:$0xff]
        %v1354 = vld [vmem:[#allocation6 + $0x8] sm:$0xff]
        %v1355 = vld [vmem:[#allocation6 + $0x10] sm:$0xff]
        %v1356 = vld [vmem:[#allocation6 + $0x18] sm:$0xff]
        %v1357 = vld [vmem:[#allocation6 + $0x20] sm:$0xff]
        %v1358 = vld [vmem:[#allocation6 + $0x28] sm:$0xff]
        %v1359 = vld [vmem:[#allocation6 + $0x30] sm:$0xff]
        %v1360 = vld [vmem:[#allocation6 + $0x38] sm:$0xff]
        %v1361 = vld [vmem:[#allocation6 + $0x40] sm:$0xff]
        %v1362 = vld [vmem:[#allocation6 + $0x48] sm:$0xff]
        %v1363 = vld [vmem:[#allocation6 + $0x50] sm:$0xff]
        %v1364 = vld [vmem:[#allocation6 + $0x58] sm:$0xff]
        %v1365 = vld [vmem:[#allocation6 + $0x60] sm:$0xff]
        %v1366 = vld [vmem:[#allocation6 + $0x68] sm:$0xff]
        %v1367 = vld [vmem:[#allocation6 + $0x70] sm:$0xff]
        %v1368 = vld [vmem:[#allocation6 + $0x78] sm:$0xff]
        %v1369 = vmul.f32 %v1286, %v1353
        %v1370 = vmul.f32 %v1290, %v1354
        %v1371 = vmul.f32 %v1296, %v1355
        %v1372 = vmul.f32 %v1300, %v1356
        %v1373 = vmul.f32 %v1286, %v1357
        %v1374 = vmul.f32 %v1290, %v1358
        %v1375 = vmul.f32 %v1296, %v1359
        %v1376 = vmul.f32 %v1300, %v1360
        %v1377 = vmul.f32 %v1286, %v1361
        %v1378 = vmul.f32 %v1290, %v1362
        %v1379 = vmul.f32 %v1296, %v1363
        %v1380 = vmul.f32 %v1300, %v1364
        %v1381 = vmul.f32 %v1286, %v1365
        %v1382 = vmul.f32 %v1290, %v1366
        %v1383 = vmul.f32 %v1296, %v1367
        %v1384 = vmul.f32 %v1300, %v1368
        %v1385 = vpack.c.bf16 %v1370, %v1369
        %v1386 = vpack.c.bf16 %v1372, %v1371
        %v1387 = vpack.c.bf16 %v1374, %v1373
        %v1388 = vpack.c.bf16 %v1376, %v1375
        %v1389 = vpack.c.bf16 %v1378, %v1377
        %v1390 = vpack.c.bf16 %v1380, %v1379
        %v1391 = vpack.c.bf16 %v1382, %v1381
        %v1392 = vpack.c.bf16 %v1384, %v1383
        %v1393 = vmul.f32 %v1337, %v1353
        %v1394 = vmul.f32 %v1340, %v1354
        %v1395 = vmul.f32 %v1345, %v1355
        %v1396 = vmul.f32 %v1348, %v1356
        %v1397 = vmul.f32 %v1337, %v1357
        %v1398 = vmul.f32 %v1340, %v1358
        %v1399 = vmul.f32 %v1345, %v1359
        %v1400 = vmul.f32 %v1348, %v1360
        %v1401 = vmul.f32 %v1337, %v1361
        %v1402 = vmul.f32 %v1340, %v1362
        %v1403 = vmul.f32 %v1345, %v1363
        %v1404 = vmul.f32 %v1348, %v1364
        %v1405 = vmul.f32 %v1337, %v1365
        %v1406 = vmul.f32 %v1340, %v1366
        %v1407 = vmul.f32 %v1345, %v1367
        %v1408 = vmul.f32 %v1348, %v1368
        %v1409 = vpack.c.bf16 %v1394, %v1393
        %v1410 = vpack.c.bf16 %v1396, %v1395
        %v1411 = vpack.c.bf16 %v1398, %v1397
        %v1412 = vpack.c.bf16 %v1400, %v1399
        %v1413 = vpack.c.bf16 %v1402, %v1401
        %v1414 = vpack.c.bf16 %v1404, %v1403
        %v1415 = vpack.c.bf16 %v1406, %v1405
        %v1416 = vpack.c.bf16 %v1408, %v1407
        %v1417 = vld [vmem:[#allocation3] sm:$0xff]
        %v1418 = vld [vmem:[#allocation3 + $0x8] sm:$0xff]
        %v1419 = vld [vmem:[#allocation3 + $0x10] sm:$0xff]
        %v1420 = vld [vmem:[#allocation3 + $0x18] sm:$0xff]
        %1421 = vmatprep.subr.bf16.mxu0 0
        %1422 = vmatpush1.bf16.xpose.msra.mxu0 %v1385
        %1423 = vmatprep.subr.bf16.mxu0 0
        %1424 = vmatpush1.bf16.xpose.msra.mxu0 %v1386
        %1425 = vmatprep.subr.bf16.mxu0 0
        %1426 = vmatpush1.bf16.xpose.msra.mxu0 %v1387
        %1427 = vmatprep.subr.bf16.mxu0 0
        %1428 = vmatpush1.bf16.xpose.msra.mxu0 %v1388
        %1429 = vmatprep.subr.bf16.mxu0 0
        %1430 = vmatpush1.bf16.xpose.msra.mxu0 %v1389
        %1431 = vmatprep.subr.bf16.mxu0 0
        %1432 = vmatpush1.bf16.xpose.msra.mxu0 %v1390
        %1433 = vmatprep.subr.bf16.mxu0 0
        %1434 = vmatpush1.bf16.xpose.msra.mxu0 %v1391
        %1435 = vmatprep.subr.bf16.mxu0 0
        %1436 = vmatpush1.bf16.xpose.msra.mxu0 %v1392
        %1437 = vmatprep.subr.bf16.mxu0 0
        %1438 = vmatpush1.bf16.xpose.msra.mxu0 0
        %1439 = vmatprep.subr.bf16.mxu0 0
        %1440 = vmatpush1.bf16.xpose.msra.mxu0 0
        %1441 = vmatprep.subr.bf16.mxu0 0
        %1442 = vmatpush1.bf16.xpose.msra.mxu0 0
        %1443 = vmatprep.subr.bf16.mxu0 0
        %1444 = vmatpush1.bf16.xpose.msra.mxu0 0
        %1445 = vmatprep.subr.bf16.mxu0 0
        %1446 = vmatpush1.bf16.xpose.msra.mxu0 0
        %1447 = vmatprep.subr.bf16.mxu0 0
        %1448 = vmatpush1.bf16.xpose.msra.mxu0 0
        %1449 = vmatprep.subr.bf16.mxu0 0
        %1450 = vmatpush1.bf16.xpose.msra.mxu0 0
        %1451 = vmatprep.subr.bf16.mxu0 0
        %1452 = vmatpush1.bf16.xpose.msra.mxu0 0
        %1453 = vmatprep.mubr.bf16.mxu0 0
        %1454 = vmatmul.mubr.bf16.gmra.mrb[0].mxu0 %v1351
        %v1455 = vpop.f32.mrb[0].mxu0
        %v1456 = vadd.f32 %v1417, %v1455
        %v1457 = vpop.f32.mrb[0].mxu0
        %v1458 = vpop.f32.mrb[0].mxu0
        %v1459 = vadd.f32 %v1418, %v1458
        %v1460 = vpop.f32.mrb[0].mxu0
        %1461 = vmatprep.mubr.bf16.mxu0 0
        %1462 = vmatmul.mubr.bf16.gmra.mrb[0].mxu0 %v1352
        %v1463 = vpop.f32.mrb[0].mxu0
        %v1464 = vadd.f32 %v1419, %v1463
        %v1465 = vpop.f32.mrb[0].mxu0
        %v1466 = vpop.f32.mrb[0].mxu0
        %v1467 = vadd.f32 %v1420, %v1466
        %v1468 = vpop.f32.mrb[0].mxu0
        %1469 = vdwg.mxu0
        %1470 = vmax.xlane.f32.xlu0 %v1456
        %v1471 = vpop.xlane.xlu0 %1470
        %1472 = vmax.xlane.f32.xlu0 %v1459
        %v1473 = vpop.xlane.xlu0 %1472
        %1474 = vmax.xlane.f32.xlu0 %v1464
        %v1475 = vpop.xlane.xlu0 %1474
        %1476 = vmax.xlane.f32.xlu0 %v1467
        %v1477 = vpop.xlane.xlu0 %1476
        %v1478 = vsub.f32 %v1456, %v1471
        %v1479 = vsub.f32 %v1459, %v1473
        %v1480 = vsub.f32 %v1464, %v1475
        %v1481 = vsub.f32 %v1467, %v1477
        %v1482 = vmul.f32 %v1478, 1.442695
        %v1483 = vpow.pop %v1482
        %v1484 = vmul.f32 %v1479, 1.442695
        %v1485 = vpow.pop %v1484
        %v1486 = vmul.f32 %v1480, 1.442695
        %v1487 = vpow.pop %v1486
        %v1488 = vmul.f32 %v1481, 1.442695
        %v1489 = vpow.pop %v1488
        %v1490 = vld [vmem:[%s3] sm:$0x1]
        %v1492 = vlaneseq
        %v1493 = vshrl.u32 %v1492, 7
        %v1494 = vsub.s32 0, %v1493
        %v1495 = vrot.slane %v1490, %v1494
        %v1497 = vmul.f32 %v1483, %v1495
        %v1498 = vmul.f32 %v1485, %v1495
        %v1499 = vmul.f32 %v1487, %v1495
        %v1500 = vmul.f32 %v1489, %v1495
        %1501 = vadd.xlane.f32.xlu0 %v1497
        %v1502 = vpop.xlane.xlu0 %1501
        %1503 = vadd.xlane.f32.xlu0 %v1498
        %v1504 = vpop.xlane.xlu0 %1503
        %1505 = vadd.xlane.f32.xlu0 %v1499
        %v1506 = vpop.xlane.xlu0 %1505
        %1507 = vadd.xlane.f32.xlu0 %v1500
        %v1508 = vpop.xlane.xlu0 %1507
        %v1509 = vrcp.pop %v1502
        %v1510 = vrcp.pop %v1504
        %v1511 = vrcp.pop %v1506
        %v1512 = vrcp.pop %v1508
        %v1513 = vmul.f32 %v1509, %v1495
        %v1514 = vmul.f32 %v1510, %v1495
        %v1515 = vmul.f32 %v1511, %v1495
        %v1516 = vmul.f32 %v1512, %v1495
        %v1517 = vadd.f32 %v1513, 0.0
        %v1518 = vadd.f32 %v1514, 0.0
        %v1519 = vadd.f32 %v1515, 0.0
        %v1520 = vadd.f32 %v1516, 0.0
        %s1521 = scalar_lea.vmem %s3, 1
        %v1522 = vld [vmem:[%s1521] sm:$0x1]
        %v1524 = vlaneseq
        %v1525 = vshrl.u32 %v1524, 7
        %v1526 = vsub.s32 0, %v1525
        %v1527 = vrot.slane %v1522, %v1526
        %v1529 = vmul.f32 %v1483, %v1527
        %v1530 = vmul.f32 %v1485, %v1527
        %v1531 = vmul.f32 %v1487, %v1527
        %v1532 = vmul.f32 %v1489, %v1527
        %1533 = vadd.xlane.f32.xlu0 %v1529
        %v1534 = vpop.xlane.xlu0 %1533
        %1535 = vadd.xlane.f32.xlu0 %v1530
        %v1536 = vpop.xlane.xlu0 %1535
        %1537 = vadd.xlane.f32.xlu0 %v1531
        %v1538 = vpop.xlane.xlu0 %1537
        %1539 = vadd.xlane.f32.xlu0 %v1532
        %v1540 = vpop.xlane.xlu0 %1539
        %v1541 = vrcp.pop %v1534
        %v1542 = vrcp.pop %v1536
        %v1543 = vrcp.pop %v1538
        %v1544 = vrcp.pop %v1540
        %v1545 = vmul.f32 %v1541, %v1527
        %v1546 = vmul.f32 %v1542, %v1527
        %v1547 = vmul.f32 %v1543, %v1527
        %v1548 = vmul.f32 %v1544, %v1527
        %v1549 = vadd.f32 %v1517, %v1545
        %v1550 = vadd.f32 %v1518, %v1546
        %v1551 = vadd.f32 %v1519, %v1547
        %v1552 = vadd.f32 %v1520, %v1548
        %s1553 = scalar_lea.vmem %s3, 2
        %v1554 = vld [vmem:[%s1553] sm:$0x1]
        %v1556 = vlaneseq
        %v1557 = vshrl.u32 %v1556, 7
        %v1558 = vsub.s32 0, %v1557
        %v1559 = vrot.slane %v1554, %v1558
        %v1561 = vmul.f32 %v1483, %v1559
        %v1562 = vmul.f32 %v1485, %v1559
        %v1563 = vmul.f32 %v1487, %v1559
        %v1564 = vmul.f32 %v1489, %v1559
        %1565 = vadd.xlane.f32.xlu0 %v1561
        %v1566 = vpop.xlane.xlu0 %1565
        %1567 = vadd.xlane.f32.xlu0 %v1562
        %v1568 = vpop.xlane.xlu0 %1567
        %1569 = vadd.xlane.f32.xlu0 %v1563
        %v1570 = vpop.xlane.xlu0 %1569
        %1571 = vadd.xlane.f32.xlu0 %v1564
        %v1572 = vpop.xlane.xlu0 %1571
        %v1573 = vrcp.pop %v1566
        %v1574 = vrcp.pop %v1568
        %v1575 = vrcp.pop %v1570
        %v1576 = vrcp.pop %v1572
        %v1577 = vmul.f32 %v1573, %v1559
        %v1578 = vmul.f32 %v1574, %v1559
        %v1579 = vmul.f32 %v1575, %v1559
        %v1580 = vmul.f32 %v1576, %v1559
        %v1581 = vadd.f32 %v1549, %v1577
        %v1582 = vadd.f32 %v1550, %v1578
        %v1583 = vadd.f32 %v1551, %v1579
        %v1584 = vadd.f32 %v1552, %v1580
        %s1585 = scalar_lea.vmem %s3, 3
        %v1586 = vld [vmem:[%s1585] sm:$0x1]
        %v1588 = vlaneseq
        %v1589 = vshrl.u32 %v1588, 7
        %v1590 = vsub.s32 0, %v1589
        %v1591 = vrot.slane %v1586, %v1590
        %v1593 = vmul.f32 %v1483, %v1591
        %v1594 = vmul.f32 %v1485, %v1591
        %v1595 = vmul.f32 %v1487, %v1591
        %v1596 = vmul.f32 %v1489, %v1591
        %1597 = vadd.xlane.f32.xlu0 %v1593
        %v1598 = vpop.xlane.xlu0 %1597
        %1599 = vadd.xlane.f32.xlu0 %v1594
        %v1600 = vpop.xlane.xlu0 %1599
        %1601 = vadd.xlane.f32.xlu0 %v1595
        %v1602 = vpop.xlane.xlu0 %1601
        %1603 = vadd.xlane.f32.xlu0 %v1596
        %v1604 = vpop.xlane.xlu0 %1603
        %v1605 = vrcp.pop %v1598
        %v1606 = vrcp.pop %v1600
        %v1607 = vrcp.pop %v1602
        %v1608 = vrcp.pop %v1604
        %v1609 = vmul.f32 %v1605, %v1591
        %v1610 = vmul.f32 %v1606, %v1591
        %v1611 = vmul.f32 %v1607, %v1591
        %v1612 = vmul.f32 %v1608, %v1591
        %v1613 = vadd.f32 %v1581, %v1609
        %v1614 = vadd.f32 %v1582, %v1610
        %v1615 = vadd.f32 %v1583, %v1611
        %v1616 = vadd.f32 %v1584, %v1612
        %v1617 = vmul.f32 %v1483, %v1613
        %v1618 = vmul.f32 %v1485, %v1614
        %v1619 = vmul.f32 %v1487, %v1615
        %v1620 = vmul.f32 %v1489, %v1616
        %v1621 = vpack.c.bf16 %v1618, %v1617
        %v1622 = vpack.c.bf16 %v1620, %v1619
        %1623 = vmatprep.subr.bf16.mxu0 0
        %1624 = vmatpush1.bf16.msra.mxu0 %v1409
        %1625 = vmatprep.subr.bf16.mxu0 0
        %1626 = vmatpush1.bf16.msra.mxu0 %v1410
        %1627 = vmatprep.subr.bf16.mxu0 0
        %1628 = vmatpush1.bf16.msra.mxu0 %v1411
        %1629 = vmatprep.subr.bf16.mxu0 0
        %1630 = vmatpush1.bf16.msra.mxu0 %v1412
        %1631 = vmatprep.subr.bf16.mxu0 0
        %1632 = vmatpush1.bf16.msra.mxu0 %v1413
        %1633 = vmatprep.subr.bf16.mxu0 0
        %1634 = vmatpush1.bf16.msra.mxu0 %v1414
        %1635 = vmatprep.subr.bf16.mxu0 0
        %1636 = vmatpush1.bf16.msra.mxu0 %v1415
        %1637 = vmatprep.subr.bf16.mxu0 0
        %1638 = vmatpush1.bf16.msra.mxu0 %v1416
        %1639 = vmatprep.subr.bf16.mxu0 0
        %1640 = vmatpush1.bf16.msra.mxu0 0
        %1641 = vmatprep.subr.bf16.mxu0 0
        %1642 = vmatpush1.bf16.msra.mxu0 0
        %1643 = vmatprep.subr.bf16.mxu0 0
        %1644 = vmatpush1.bf16.msra.mxu0 0
        %1645 = vmatprep.subr.bf16.mxu0 0
        %1646 = vmatpush1.bf16.msra.mxu0 0
        %1647 = vmatprep.subr.bf16.mxu0 0
        %1648 = vmatpush1.bf16.msra.mxu0 0
        %1649 = vmatprep.subr.bf16.mxu0 0
        %1650 = vmatpush1.bf16.msra.mxu0 0
        %1651 = vmatprep.subr.bf16.mxu0 0
        %1652 = vmatpush1.bf16.msra.mxu0 0
        %1653 = vmatprep.subr.bf16.mxu0 0
        %1654 = vmatpush1.bf16.msra.mxu0 0
        %1655 = vmatprep.mubr.bf16.mxu0 0
        %1656 = vmatmul.mubr.bf16.gmra.mrb[0].mxu0 %v1621
        %v1657 = vpop.f32.mrb[0].mxu0
        %v1658 = vadd.f32 0.0, %v1657
        %v1659 = vpop.f32.mrb[0].mxu0
        %v1660 = vpop.f32.mrb[0].mxu0
        %v1661 = vadd.f32 0.0, %v1660
        %v1662 = vpop.f32.mrb[0].mxu0
        %1663 = vmatprep.mubr.bf16.mxu0 0
        %1664 = vmatmul.mubr.bf16.gmra.mrb[0].mxu0 %v1622
        %v1665 = vpop.f32.mrb[0].mxu0
        %v1666 = vadd.f32 0.0, %v1665
        %v1667 = vpop.f32.mrb[0].mxu0
        %v1668 = vpop.f32.mrb[0].mxu0
        %v1669 = vadd.f32 0.0, %v1668
        %v1670 = vpop.f32.mrb[0].mxu0
        %1671 = vdwg.mxu0
        %v1672 = vpack.c.bf16 %v1661, %v1658
        %v1673 = vpack.c.bf16 %v1669, %v1666
        %v1674 = vld [vmem:[%s838] sm:$0xf]
        %v1675 = vld [vmem:[%s838 + $0x4] sm:$0xf]
        %v1676 = vld [vmem:[%s838 + $0x8] sm:$0xf]
        %v1677 = vld [vmem:[%s838 + $0xc] sm:$0xf]
        %v1678 = vld [vmem:[%s838 + $0x10] sm:$0xf]
        %v1679 = vld [vmem:[%s838 + $0x14] sm:$0xf]
        %v1680 = vld [vmem:[%s838 + $0x18] sm:$0xf]
        %v1681 = vld [vmem:[%s838 + $0x1c] sm:$0xf]
        %v1682 = vld [vmem:[%s838 + $0x20] sm:$0xf]
        %v1683 = vld [vmem:[%s838 + $0x24] sm:$0xf]
        %v1684 = vld [vmem:[%s838 + $0x28] sm:$0xf]
        %v1685 = vld [vmem:[%s838 + $0x2c] sm:$0xf]
        %v1686 = vld [vmem:[%s838 + $0x30] sm:$0xf]
        %v1687 = vld [vmem:[%s838 + $0x34] sm:$0xf]
        %v1688 = vld [vmem:[%s838 + $0x38] sm:$0xf]
        %v1689 = vld [vmem:[%s838 + $0x3c] sm:$0xf]
        %v1690 = vld [vmem:[%s846] sm:$0x1]
        %v1692 = vlaneseq
        %v1693 = vshrl.u32 %v1692, 7
        %v1694 = vsub.s32 0, %v1693
        %v1695 = vrot.slane %v1690, %v1694
        %v1713 = vunpack.c.l.b16 %v1674
        %v1714 = vunpack.c.l.b16 %v1675
        %v1715 = vunpack.c.l.b16 %v1676
        %v1716 = vunpack.c.l.b16 %v1677
        %v1717 = vunpack.c.l.b16 %v1678
        %v1718 = vunpack.c.l.b16 %v1679
        %v1719 = vunpack.c.l.b16 %v1680
        %v1720 = vunpack.c.l.b16 %v1681
        %v1721 = vunpack.c.l.b16 %v1682
        %v1722 = vunpack.c.l.b16 %v1683
        %v1723 = vunpack.c.l.b16 %v1684
        %v1724 = vunpack.c.l.b16 %v1685
        %v1725 = vunpack.c.l.b16 %v1686
        %v1726 = vunpack.c.l.b16 %v1687
        %v1727 = vunpack.c.l.b16 %v1688
        %v1728 = vunpack.c.l.b16 %v1689
        %v1729 = vpack.c.b16 %v1714, %v1713
        %v1730 = vpack.c.b16 %v1716, %v1715
        %v1731 = vpack.c.b16 %v1718, %v1717
        %v1732 = vpack.c.b16 %v1720, %v1719
        %v1733 = vpack.c.b16 %v1722, %v1721
        %v1734 = vpack.c.b16 %v1724, %v1723
        %v1735 = vpack.c.b16 %v1726, %v1725
        %v1736 = vpack.c.b16 %v1728, %v1727
        %1745 = vmatprep.subr.bf16.mxu0 0
        %1746 = vmatpush1.bf16.msra.mxu0 %v1729
        %1747 = vmatprep.subr.bf16.mxu0 0
        %1748 = vmatpush1.bf16.msra.mxu0 %v1730
        %1749 = vmatprep.subr.bf16.mxu0 0
        %1750 = vmatpush1.bf16.msra.mxu0 %v1731
        %1751 = vmatprep.subr.bf16.mxu0 0
        %1752 = vmatpush1.bf16.msra.mxu0 %v1732
        %1753 = vmatprep.subr.bf16.mxu0 0
        %1754 = vmatpush1.bf16.msra.mxu0 %v1733
        %1755 = vmatprep.subr.bf16.mxu0 0
        %1756 = vmatpush1.bf16.msra.mxu0 %v1734
        %1757 = vmatprep.subr.bf16.mxu0 0
        %1758 = vmatpush1.bf16.msra.mxu0 %v1735
        %1759 = vmatprep.subr.bf16.mxu0 0
        %1760 = vmatpush1.bf16.msra.mxu0 %v1736
        %1761 = vmatprep.subr.bf16.mxu0 0
        %1762 = vmatpush1.bf16.msra.mxu0 0
        %1763 = vmatprep.subr.bf16.mxu0 0
        %1764 = vmatpush1.bf16.msra.mxu0 0
        %1765 = vmatprep.subr.bf16.mxu0 0
        %1766 = vmatpush1.bf16.msra.mxu0 0
        %1767 = vmatprep.subr.bf16.mxu0 0
        %1768 = vmatpush1.bf16.msra.mxu0 0
        %1769 = vmatprep.subr.bf16.mxu0 0
        %1770 = vmatpush1.bf16.msra.mxu0 0
        %1771 = vmatprep.subr.bf16.mxu0 0
        %1772 = vmatpush1.bf16.msra.mxu0 0
        %1773 = vmatprep.subr.bf16.mxu0 0
        %1774 = vmatpush1.bf16.msra.mxu0 0
        %1775 = vmatprep.subr.bf16.mxu0 0
        %1776 = vmatpush1.bf16.msra.mxu0 0
        %1777 = vmatprep.mubr.bf16.mxu0 0
        %1778 = vmatmul.mubr.bf16.gmra.mrb[0].mxu0 %v1672
        %v1779 = vpop.f32.mrb[0].mxu0
        %v1780 = vadd.f32 %v1695, %v1779
        %v1781 = vpop.f32.mrb[0].mxu0
        %v1782 = vpop.f32.mrb[0].mxu0
        %v1783 = vadd.f32 %v1695, %v1782
        %v1784 = vpop.f32.mrb[0].mxu0
        %1785 = vmatprep.mubr.bf16.mxu0 0
        %1786 = vmatmul.mubr.bf16.gmra.mrb[0].mxu0 %v1673
        %v1787 = vpop.f32.mrb[0].mxu0
        %v1788 = vadd.f32 %v1695, %v1787
        %v1789 = vpop.f32.mrb[0].mxu0
        %v1790 = vpop.f32.mrb[0].mxu0
        %v1791 = vadd.f32 %v1695, %v1790
        %v1792 = vpop.f32.mrb[0].mxu0
        %1793 = vdwg.mxu0
        %v1794 = vadd.f32 %v1016, %v1780
        %v1795 = vadd.f32 %v1017, %v1783
        %v1796 = vadd.f32 %v1018, %v1788
        %v1797 = vadd.f32 %v1019, %v1791
        %v1798 = vld [vmem:[%s854] sm:$0x1]
        %v1799 = vld [vmem:[%s862] sm:$0x1]
        %1800 = vadd.xlane.f32.xlu0 %v1794
        %v1801 = vpop.xlane.xlu0 %1800
        %1802 = vadd.xlane.f32.xlu0 %v1795
        %v1803 = vpop.xlane.xlu0 %1802
        %1804 = vadd.xlane.f32.xlu0 %v1796
        %v1805 = vpop.xlane.xlu0 %1804
        %1806 = vadd.xlane.f32.xlu0 %v1797
        %v1807 = vpop.xlane.xlu0 %1806
        %v1808 = vmul.f32 %v1801, %v1030
        %v1809 = vmul.f32 %v1803, %v1030
        %v1810 = vmul.f32 %v1805, %v1030
        %v1811 = vmul.f32 %v1807, %v1030
        %v1812 = vsub.f32 %v1794, %v1808
        %v1813 = vsub.f32 %v1795, %v1809
        %v1814 = vsub.f32 %v1796, %v1810
        %v1815 = vsub.f32 %v1797, %v1811
        %v1816 = vmul.f32 %v1812, %v1812
        %v1817 = vmul.f32 %v1813, %v1813
        %v1818 = vmul.f32 %v1814, %v1814
        %v1819 = vmul.f32 %v1815, %v1815
        %1820 = vadd.xlane.f32.xlu0 %v1816
        %v1821 = vpop.xlane.xlu0 %1820
        %1822 = vadd.xlane.f32.xlu0 %v1817
        %v1823 = vpop.xlane.xlu0 %1822
        %1824 = vadd.xlane.f32.xlu0 %v1818
        %v1825 = vpop.xlane.xlu0 %1824
        %1826 = vadd.xlane.f32.xlu0 %v1819
        %v1827 = vpop.xlane.xlu0 %1826
        %v1828 = vmul.f32 %v1821, %v1030
        %v1829 = vmul.f32 %v1823, %v1030
        %v1830 = vmul.f32 %v1825, %v1030
        %v1831 = vmul.f32 %v1827, %v1030
        %v1832 = vadd.f32 %v1828, 1e-05
        %v1833 = vadd.f32 %v1829, 1e-05
        %v1834 = vadd.f32 %v1830, 1e-05
        %v1835 = vadd.f32 %v1831, 1e-05
        %v1836 = vrsqrt.pop %v1832
        %v1837 = vrsqrt.pop %v1833
        %v1838 = vrsqrt.pop %v1834
        %v1839 = vrsqrt.pop %v1835
        %v1840 = vmul.f32 %v1812, %v1836
        %v1841 = vmul.f32 %v1813, %v1837
        %v1842 = vmul.f32 %v1814, %v1838
        %v1843 = vmul.f32 %v1815, %v1839
        %v1845 = vlaneseq
        %v1846 = vshrl.u32 %v1845, 7
        %v1847 = vsub.s32 0, %v1846
        %v1848 = vrot.slane %v1798, %v1847
        %v1850 = vmul.f32 %v1840, %v1848
        %v1851 = vmul.f32 %v1841, %v1848
        %v1852 = vmul.f32 %v1842, %v1848
        %v1853 = vmul.f32 %v1843, %v1848
        %v1855 = vlaneseq
        %v1856 = vshrl.u32 %v1855, 7
        %v1857 = vsub.s32 0, %v1856
        %v1858 = vrot.slane %v1799, %v1857
        %v1860 = vadd.f32 %v1850, %v1858
        %v1861 = vadd.f32 %v1851, %v1858
        %v1862 = vadd.f32 %v1852, %v1858
        %v1863 = vadd.f32 %v1853, %v1858
        %v1864 = vpack.c.bf16 %v1861, %v1860
        %v1865 = vpack.c.bf16 %v1863, %v1862
        %v1866 = vld [vmem:[%s1002] sm:$0xff]
        %v1867 = vld [vmem:[%s1002 + $0x8] sm:$0xff]
        %v1868 = vld [vmem:[%s1002 + $0x10] sm:$0xff]
        %v1869 = vld [vmem:[%s1002 + $0x18] sm:$0xff]
        %v1870 = vld [vmem:[%s1002 + $0x20] sm:$0xff]
        %v1871 = vld [vmem:[%s1002 + $0x28] sm:$0xff]
        %v1872 = vld [vmem:[%s1002 + $0x30] sm:$0xff]
        %v1873 = vld [vmem:[%s1002 + $0x38] sm:$0xff]
        %v1874 = vld [vmem:[%s1002 + $0x40] sm:$0xff]
        %v1875 = vld [vmem:[%s1002 + $0x48] sm:$0xff]
        %v1876 = vld [vmem:[%s1002 + $0x50] sm:$0xff]
        %v1877 = vld [vmem:[%s1002 + $0x58] sm:$0xff]
        %v1878 = vld [vmem:[%s1002 + $0x60] sm:$0xff]
        %v1879 = vld [vmem:[%s1002 + $0x68] sm:$0xff]
        %v1880 = vld [vmem:[%s1002 + $0x70] sm:$0xff]
        %v1881 = vld [vmem:[%s1002 + $0x78] sm:$0xff]
        %v1882 = vld [vmem:[%s1002 + $0x80] sm:$0xff]
        %v1883 = vld [vmem:[%s1002 + $0x88] sm:$0xff]
        %v1884 = vld [vmem:[%s1002 + $0x90] sm:$0xff]
        %v1885 = vld [vmem:[%s1002 + $0x98] sm:$0xff]
        %v1886 = vld [vmem:[%s1002 + $0xa0] sm:$0xff]
        %v1887 = vld [vmem:[%s1002 + $0xa8] sm:$0xff]
        %v1888 = vld [vmem:[%s1002 + $0xb0] sm:$0xff]
        %v1889 = vld [vmem:[%s1002 + $0xb8] sm:$0xff]
        %v1890 = vld [vmem:[%s1002 + $0xc0] sm:$0xff]
        %v1891 = vld [vmem:[%s1002 + $0xc8] sm:$0xff]
        %v1892 = vld [vmem:[%s1002 + $0xd0] sm:$0xff]
        %v1893 = vld [vmem:[%s1002 + $0xd8] sm:$0xff]
        %v1894 = vld [vmem:[%s1002 + $0xe0] sm:$0xff]
        %v1895 = vld [vmem:[%s1002 + $0xe8] sm:$0xff]
        %v1896 = vld [vmem:[%s1002 + $0xf0] sm:$0xff]
        %v1897 = vld [vmem:[%s1002 + $0xf8] sm:$0xff]
        %v1898 = vld [vmem:[%s871] sm:$0xf]
        %v1900 = vlaneseq
        %v1901 = vshrl.u32 %v1900, 7
        %v1902 = vsub.s32 0, %v1901
        %v1903 = vrot.slane %v1898, %v1902
        %v1904 = vlaneseq
        %v1905 = vshrl.u32 %v1904, 7
        %v1906 = vsub.s32 1, %v1905
        %v1907 = vrot.slane %v1898, %v1906
        %v1908 = vlaneseq
        %v1909 = vshrl.u32 %v1908, 7
        %v1910 = vsub.s32 2, %v1909
        %v1911 = vrot.slane %v1898, %v1910
        %v1912 = vlaneseq
        %v1913 = vshrl.u32 %v1912, 7
        %v1914 = vsub.s32 3, %v1913
        %v1915 = vrot.slane %v1898, %v1914
        %v1952 = vunpack.c.l.b16 %v1866
        %v1953 = vunpack.c.h.b16 %v1866
        %v1954 = vunpack.c.l.b16 %v1867
        %v1955 = vunpack.c.h.b16 %v1867
        %v1956 = vunpack.c.l.b16 %v1868
        %v1957 = vunpack.c.h.b16 %v1868
        %v1958 = vunpack.c.l.b16 %v1869
        %v1959 = vunpack.c.h.b16 %v1869
        %v1960 = vunpack.c.l.b16 %v1870
        %v1961 = vunpack.c.h.b16 %v1870
        %v1962 = vunpack.c.l.b16 %v1871
        %v1963 = vunpack.c.h.b16 %v1871
        %v1964 = vunpack.c.l.b16 %v1872
        %v1965 = vunpack.c.h.b16 %v1872
        %v1966 = vunpack.c.l.b16 %v1873
        %v1967 = vunpack.c.h.b16 %v1873
        %v1968 = vunpack.c.l.b16 %v1874
        %v1969 = vunpack.c.h.b16 %v1874
        %v1970 = vunpack.c.l.b16 %v1875
        %v1971 = vunpack.c.h.b16 %v1875
        %v1972 = vunpack.c.l.b16 %v1876
        %v1973 = vunpack.c.h.b16 %v1876
        %v1974 = vunpack.c.l.b16 %v1877
        %v1975 = vunpack.c.h.b16 %v1877
        %v1976 = vunpack.c.l.b16 %v1878
        %v1977 = vunpack.c.h.b16 %v1878
        %v1978 = vunpack.c.l.b16 %v1879
        %v1979 = vunpack.c.h.b16 %v1879
        %v1980 = vunpack.c.l.b16 %v1880
        %v1981 = vunpack.c.h.b16 %v1880
        %v1982 = vunpack.c.l.b16 %v1881
        %v1983 = vunpack.c.h.b16 %v1881
        %v1984 = vunpack.c.l.b16 %v1882
        %v1985 = vunpack.c.h.b16 %v1882
        %v1986 = vunpack.c.l.b16 %v1883
        %v1987 = vunpack.c.h.b16 %v1883
        %v1988 = vunpack.c.l.b16 %v1884
        %v1989 = vunpack.c.h.b16 %v1884
        %v1990 = vunpack.c.l.b16 %v1885
        %v1991 = vunpack.c.h.b16 %v1885
        %v1992 = vunpack.c.l.b16 %v1886
        %v1993 = vunpack.c.h.b16 %v1886
        %v1994 = vunpack.c.l.b16 %v1887
        %v1995 = vunpack.c.h.b16 %v1887
        %v1996 = vunpack.c.l.b16 %v1888
        %v1997 = vunpack.c.h.b16 %v1888
        %v1998 = vunpack.c.l.b16 %v1889
        %v1999 = vunpack.c.h.b16 %v1889
        %v2000 = vunpack.c.l.b16 %v1890
        %v2001 = vunpack.c.h.b16 %v1890
        %v2002 = vunpack.c.l.b16 %v1891
        %v2003 = vunpack.c.h.b16 %v1891
        %v2004 = vunpack.c.l.b16 %v1892
        %v2005 = vunpack.c.h.b16 %v1892
        %v2006 = vunpack.c.l.b16 %v1893
        %v2007 = vunpack.c.h.b16 %v1893
        %v2008 = vunpack.c.l.b16 %v1894
        %v2009 = vunpack.c.h.b16 %v1894
        %v2010 = vunpack.c.l.b16 %v1895
        %v2011 = vunpack.c.h.b16 %v1895
        %v2012 = vunpack.c.l.b16 %v1896
        %v2013 = vunpack.c.h.b16 %v1896
        %v2014 = vunpack.c.l.b16 %v1897
        %v2015 = vunpack.c.h.b16 %v1897
        %v2016 = vpack.c.b16 %v1956, %v1952
        %v2017 = vpack.c.b16 %v1957, %v1953
        %v2018 = vpack.c.b16 %v1958, %v1954
        %v2019 = vpack.c.b16 %v1959, %v1955
        %v2020 = vpack.c.b16 %v1964, %v1960
        %v2021 = vpack.c.b16 %v1965, %v1961
        %v2022 = vpack.c.b16 %v1966, %v1962
        %v2023 = vpack.c.b16 %v1967, %v1963
        %v2024 = vpack.c.b16 %v1972, %v1968
        %v2025 = vpack.c.b16 %v1973, %v1969
        %v2026 = vpack.c.b16 %v1974, %v1970
        %v2027 = vpack.c.b16 %v1975, %v1971
        %v2028 = vpack.c.b16 %v1980, %v1976
        %v2029 = vpack.c.b16 %v1981, %v1977
        %v2030 = vpack.c.b16 %v1982, %v1978
        %v2031 = vpack.c.b16 %v1983, %v1979
        %v2032 = vpack.c.b16 %v1988, %v1984
        %v2033 = vpack.c.b16 %v1989, %v1985
        %v2034 = vpack.c.b16 %v1990, %v1986
        %v2035 = vpack.c.b16 %v1991, %v1987
        %v2036 = vpack.c.b16 %v1996, %v1992
        %v2037 = vpack.c.b16 %v1997, %v1993
        %v2038 = vpack.c.b16 %v1998, %v1994
        %v2039 = vpack.c.b16 %v1999, %v1995
        %v2040 = vpack.c.b16 %v2004, %v2000
        %v2041 = vpack.c.b16 %v2005, %v2001
        %v2042 = vpack.c.b16 %v2006, %v2002
        %v2043 = vpack.c.b16 %v2007, %v2003
        %v2044 = vpack.c.b16 %v2012, %v2008
        %v2045 = vpack.c.b16 %v2013, %v2009
        %v2046 = vpack.c.b16 %v2014, %v2010
        %v2047 = vpack.c.b16 %v2015, %v2011
        %2080 = vmatprep.subr.bf16.mxu0 %v2017
        %2081 = vmatpush1.bf16.msra.mxu0 %v2016
        %2082 = vmatprep.subr.bf16.mxu0 %v2021
        %2083 = vmatpush1.bf16.msra.mxu0 %v2020
        %2084 = vmatprep.subr.bf16.mxu0 %v2025
        %2085 = vmatpush1.bf16.msra.mxu0 %v2024
        %2086 = vmatprep.subr.bf16.mxu0 %v2029
        %2087 = vmatpush1.bf16.msra.mxu0 %v2028
        %2088 = vmatprep.subr.bf16.mxu0 %v2033
        %2089 = vmatpush1.bf16.msra.mxu0 %v2032
        %2090 = vmatprep.subr.bf16.mxu0 %v2037
        %2091 = vmatpush1.bf16.msra.mxu0 %v2036
        %2092 = vmatprep.subr.bf16.mxu0 %v2041
        %2093 = vmatpush1.bf16.msra.mxu0 %v2040
        %2094 = vmatprep.subr.bf16.mxu0 %v2045
        %2095 = vmatpush1.bf16.msra.mxu0 %v2044
        %2096 = vmatprep.subr.bf16.mxu0 0
        %2097 = vmatpush1.bf16.msra.mxu0 0
        %2098 = vmatprep.subr.bf16.mxu0 0
        %2099 = vmatpush1.bf16.msra.mxu0 0
        %2100 = vmatprep.subr.bf16.mxu0 0
        %2101 = vmatpush1.bf16.msra.mxu0 0
        %2102 = vmatprep.subr.bf16.mxu0 0
        %2103 = vmatpush1.bf16.msra.mxu0 0
        %2104 = vmatprep.subr.bf16.mxu0 0
        %2105 = vmatpush1.bf16.msra.mxu0 0
        %2106 = vmatprep.subr.bf16.mxu0 0
        %2107 = vmatpush1.bf16.msra.mxu0 0
        %2108 = vmatprep.subr.bf16.mxu0 0
        %2109 = vmatpush1.bf16.msra.mxu0 0
        %2110 = vmatprep.subr.bf16.mxu0 0
        %2111 = vmatpush1.bf16.msra.mxu0 0
        %2112 = vmatprep.mubr.bf16.mxu0 0
        %2113 = vmatmul.mubr.bf16.gmra.mrb[0].mxu0 %v1864
        %v2114 = vpop.f32.mrb[0].mxu0
        %v2115 = vadd.f32 %v1903, %v2114
        %v2116 = vpop.f32.mrb[0].mxu0
        %v2117 = vadd.f32 %v1907, %v2116
        %v2118 = vpop.f32.mrb[0].mxu0
        %v2119 = vadd.f32 %v1903, %v2118
        %v2120 = vpop.f32.mrb[0].mxu0
        %v2121 = vadd.f32 %v1907, %v2120
        %2122 = vmatprep.mubr.bf16.mxu0 0
        %2123 = vmatmul.mubr.bf16.gmra.mrb[0].mxu0 %v1865
        %v2124 = vpop.f32.mrb[0].mxu0
        %v2125 = vadd.f32 %v1903, %v2124
        %v2126 = vpop.f32.mrb[0].mxu0
        %v2127 = vadd.f32 %v1907, %v2126
        %v2128 = vpop.f32.mrb[0].mxu0
        %v2129 = vadd.f32 %v1903, %v2128
        %v2130 = vpop.f32.mrb[0].mxu0
        %v2131 = vadd.f32 %v1907, %v2130
        %2132 = vdwg.mxu0
        %2133 = vmatprep.subr.bf16.mxu0 %v2019
        %2134 = vmatpush1.bf16.msra.mxu0 %v2018
        %2135 = vmatprep.subr.bf16.mxu0 %v2023
        %2136 = vmatpush1.bf16.msra.mxu0 %v2022
        %2137 = vmatprep.subr.bf16.mxu0 %v2027
        %2138 = vmatpush1.bf16.msra.mxu0 %v2026
        %2139 = vmatprep.subr.bf16.mxu0 %v2031
        %2140 = vmatpush1.bf16.msra.mxu0 %v2030
        %2141 = vmatprep.subr.bf16.mxu0 %v2035
        %2142 = vmatpush1.bf16.msra.mxu0 %v2034
        %2143 = vmatprep.subr.bf16.mxu0 %v2039
        %2144 = vmatpush1.bf16.msra.mxu0 %v2038
        %2145 = vmatprep.subr.bf16.mxu0 %v2043
        %2146 = vmatpush1.bf16.msra.mxu0 %v2042
        %2147 = vmatprep.subr.bf16.mxu0 %v2047
        %2148 = vmatpush1.bf16.msra.mxu0 %v2046
        %2149 = vmatprep.subr.bf16.mxu0 0
        %2150 = vmatpush1.bf16.msra.mxu0 0
        %2151 = vmatprep.subr.bf16.mxu0 0
        %2152 = vmatpush1.bf16.msra.mxu0 0
        %2153 = vmatprep.subr.bf16.mxu0 0
        %2154 = vmatpush1.bf16.msra.mxu0 0
        %2155 = vmatprep.subr.bf16.mxu0 0
        %2156 = vmatpush1.bf16.msra.mxu0 0
        %2157 = vmatprep.subr.bf16.mxu0 0
        %2158 = vmatpush1.bf16.msra.mxu0 0
        %2159 = vmatprep.subr.bf16.mxu0 0
        %2160 = vmatpush1.bf16.msra.mxu0 0
        %2161 = vmatprep.subr.bf16.mxu0 0
        %2162 = vmatpush1.bf16.msra.mxu0 0
        %2163 = vmatprep.subr.bf16.mxu0 0
        %2164 = vmatpush1.bf16.msra.mxu0 0
        %2165 = vmatprep.mubr.bf16.mxu0 0
        %2166 = vmatmul.mubr.bf16.gmra.mrb[0].mxu0 %v1864
        %v2167 = vpop.f32.mrb[0].mxu0
        %v2168 = vadd.f32 %v1911, %v2167
        %v2169 = vpop.f32.mrb[0].mxu0
        %v2170 = vadd.f32 %v1915, %v2169
        %v2171 = vpop.f32.mrb[0].mxu0
        %v2172 = vadd.f32 %v1911, %v2171
        %v2173 = vpop.f32.mrb[0].mxu0
        %v2174 = vadd.f32 %v1915, %v2173
        %2175 = vmatprep.mubr.bf16.mxu0 0
        %2176 = vmatmul.mubr.bf16.gmra.mrb[0].mxu0 %v1865
        %v2177 = vpop.f32.mrb[0].mxu0
        %v2178 = vadd.f32 %v1911, %v2177
        %v2179 = vpop.f32.mrb[0].mxu0
        %v2180 = vadd.f32 %v1915, %v2179
        %v2181 = vpop.f32.mrb[0].mxu0
        %v2182 = vadd.f32 %v1911, %v2181
        %v2183 = vpop.f32.mrb[0].mxu0
        %v2184 = vadd.f32 %v1915, %v2183
        %2185 = vdwg.mxu0
        %v2186 = vmax.f32 %v2115, 0.0
        %v2187 = vmax.f32 %v2117, 0.0
        %v2188 = vmax.f32 %v2168, 0.0
        %v2189 = vmax.f32 %v2170, 0.0
        %v2190 = vmax.f32 %v2119, 0.0
        %v2191 = vmax.f32 %v2121, 0.0
        %v2192 = vmax.f32 %v2172, 0.0
        %v2193 = vmax.f32 %v2174, 0.0
        %v2194 = vmax.f32 %v2125, 0.0
        %v2195 = vmax.f32 %v2127, 0.0
        %v2196 = vmax.f32 %v2178, 0.0
        %v2197 = vmax.f32 %v2180, 0.0
        %v2198 = vmax.f32 %v2129, 0.0
        %v2199 = vmax.f32 %v2131, 0.0
        %v2200 = vmax.f32 %v2182, 0.0
        %v2201 = vmax.f32 %v2184, 0.0
        %v2202 = vpack.c.bf16 %v2190, %v2186
        %v2203 = vpack.c.bf16 %v2191, %v2187
        %v2204 = vpack.c.bf16 %v2192, %v2188
        %v2205 = vpack.c.bf16 %v2193, %v2189
        %v2206 = vpack.c.bf16 %v2198, %v2194
        %v2207 = vpack.c.bf16 %v2199, %v2195
        %v2208 = vpack.c.bf16 %v2200, %v2196
        %v2209 = vpack.c.bf16 %v2201, %v2197
        %v2210 = vld [vmem:[%s880] sm:$0xf]
        %v2211 = vld [vmem:[%s880 + $0x4] sm:$0xf]
        %v2212 = vld [vmem:[%s880 + $0x8] sm:$0xf]
        %v2213 = vld [vmem:[%s880 + $0xc] sm:$0xf]
        %v2214 = vld [vmem:[%s880 + $0x10] sm:$0xf]
        %v2215 = vld [vmem:[%s880 + $0x14] sm:$0xf]
        %v2216 = vld [vmem:[%s880 + $0x18] sm:$0xf]
        %v2217 = vld [vmem:[%s880 + $0x1c] sm:$0xf]
        %v2218 = vld [vmem:[%s880 + $0x20] sm:$0xf]
        %v2219 = vld [vmem:[%s880 + $0x24] sm:$0xf]
        %v2220 = vld [vmem:[%s880 + $0x28] sm:$0xf]
        %v2221 = vld [vmem:[%s880 + $0x2c] sm:$0xf]
        %v2222 = vld [vmem:[%s880 + $0x30] sm:$0xf]
        %v2223 = vld [vmem:[%s880 + $0x34] sm:$0xf]
        %v2224 = vld [vmem:[%s880 + $0x38] sm:$0xf]
        %v2225 = vld [vmem:[%s880 + $0x3c] sm:$0xf]
        %v2226 = vld [vmem:[%s880 + $0x40] sm:$0xf]
        %v2227 = vld [vmem:[%s880 + $0x44] sm:$0xf]
        %v2228 = vld [vmem:[%s880 + $0x48] sm:$0xf]
        %v2229 = vld [vmem:[%s880 + $0x4c] sm:$0xf]
        %v2230 = vld [vmem:[%s880 + $0x50] sm:$0xf]
        %v2231 = vld [vmem:[%s880 + $0x54] sm:$0xf]
        %v2232 = vld [vmem:[%s880 + $0x58] sm:$0xf]
        %v2233 = vld [vmem:[%s880 + $0x5c] sm:$0xf]
        %v2234 = vld [vmem:[%s880 + $0x60] sm:$0xf]
        %v2235 = vld [vmem:[%s880 + $0x64] sm:$0xf]
        %v2236 = vld [vmem:[%s880 + $0x68] sm:$0xf]
        %v2237 = vld [vmem:[%s880 + $0x6c] sm:$0xf]
        %v2238 = vld [vmem:[%s880 + $0x70] sm:$0xf]
        %v2239 = vld [vmem:[%s880 + $0x74] sm:$0xf]
        %v2240 = vld [vmem:[%s880 + $0x78] sm:$0xf]
        %v2241 = vld [vmem:[%s880 + $0x7c] sm:$0xf]
        %v2242 = vld [vmem:[%s880 + $0x80] sm:$0xf]
        %v2243 = vld [vmem:[%s880 + $0x84] sm:$0xf]
        %v2244 = vld [vmem:[%s880 + $0x88] sm:$0xf]
        %v2245 = vld [vmem:[%s880 + $0x8c] sm:$0xf]
        %v2246 = vld [vmem:[%s880 + $0x90] sm:$0xf]
        %v2247 = vld [vmem:[%s880 + $0x94] sm:$0xf]
        %v2248 = vld [vmem:[%s880 + $0x98] sm:$0xf]
        %v2249 = vld [vmem:[%s880 + $0x9c] sm:$0xf]
        %v2250 = vld [vmem:[%s880 + $0xa0] sm:$0xf]
        %v2251 = vld [vmem:[%s880 + $0xa4] sm:$0xf]
        %v2252 = vld [vmem:[%s880 + $0xa8] sm:$0xf]
        %v2253 = vld [vmem:[%s880 + $0xac] sm:$0xf]
        %v2254 = vld [vmem:[%s880 + $0xb0] sm:$0xf]
        %v2255 = vld [vmem:[%s880 + $0xb4] sm:$0xf]
        %v2256 = vld [vmem:[%s880 + $0xb8] sm:$0xf]
        %v2257 = vld [vmem:[%s880 + $0xbc] sm:$0xf]
        %v2258 = vld [vmem:[%s880 + $0xc0] sm:$0xf]
        %v2259 = vld [vmem:[%s880 + $0xc4] sm:$0xf]
        %v2260 = vld [vmem:[%s880 + $0xc8] sm:$0xf]
        %v2261 = vld [vmem:[%s880 + $0xcc] sm:$0xf]
        %v2262 = vld [vmem:[%s880 + $0xd0] sm:$0xf]
        %v2263 = vld [vmem:[%s880 + $0xd4] sm:$0xf]
        %v2264 = vld [vmem:[%s880 + $0xd8] sm:$0xf]
        %v2265 = vld [vmem:[%s880 + $0xdc] sm:$0xf]
        %v2266 = vld [vmem:[%s880 + $0xe0] sm:$0xf]
        %v2267 = vld [vmem:[%s880 + $0xe4] sm:$0xf]
        %v2268 = vld [vmem:[%s880 + $0xe8] sm:$0xf]
        %v2269 = vld [vmem:[%s880 + $0xec] sm:$0xf]
        %v2270 = vld [vmem:[%s880 + $0xf0] sm:$0xf]
        %v2271 = vld [vmem:[%s880 + $0xf4] sm:$0xf]
        %v2272 = vld [vmem:[%s880 + $0xf8] sm:$0xf]
        %v2273 = vld [vmem:[%s880 + $0xfc] sm:$0xf]
        %v2274 = vld [vmem:[%s888] sm:$0x1]
        %v2276 = vlaneseq
        %v2277 = vshrl.u32 %v2276, 7
        %v2278 = vsub.s32 0, %v2277
        %v2279 = vrot.slane %v2274, %v2278
        %v2345 = vunpack.c.l.b16 %v2210
        %v2346 = vunpack.c.l.b16 %v2211
        %v2347 = vunpack.c.l.b16 %v2212
        %v2348 = vunpack.c.l.b16 %v2213
        %v2349 = vunpack.c.l.b16 %v2214
        %v2350 = vunpack.c.l.b16 %v2215
        %v2351 = vunpack.c.l.b16 %v2216
        %v2352 = vunpack.c.l.b16 %v2217
        %v2353 = vunpack.c.l.b16 %v2218
        %v2354 = vunpack.c.l.b16 %v2219
        %v2355 = vunpack.c.l.b16 %v2220
        %v2356 = vunpack.c.l.b16 %v2221
        %v2357 = vunpack.c.l.b16 %v2222
        %v2358 = vunpack.c.l.b16 %v2223
        %v2359 = vunpack.c.l.b16 %v2224
        %v2360 = vunpack.c.l.b16 %v2225
        %v2361 = vunpack.c.l.b16 %v2226
        %v2362 = vunpack.c.l.b16 %v2227
        %v2363 = vunpack.c.l.b16 %v2228
        %v2364 = vunpack.c.l.b16 %v2229
        %v2365 = vunpack.c.l.b16 %v2230
        %v2366 = vunpack.c.l.b16 %v2231
        %v2367 = vunpack.c.l.b16 %v2232
        %v2368 = vunpack.c.l.b16 %v2233
        %v2369 = vunpack.c.l.b16 %v2234
        %v2370 = vunpack.c.l.b16 %v2235
        %v2371 = vunpack.c.l.b16 %v2236
        %v2372 = vunpack.c.l.b16 %v2237
        %v2373 = vunpack.c.l.b16 %v2238
        %v2374 = vunpack.c.l.b16 %v2239
        %v2375 = vunpack.c.l.b16 %v2240
        %v2376 = vunpack.c.l.b16 %v2241
        %v2377 = vunpack.c.l.b16 %v2242
        %v2378 = vunpack.c.l.b16 %v2243
        %v2379 = vunpack.c.l.b16 %v2244
        %v2380 = vunpack.c.l.b16 %v2245
        %v2381 = vunpack.c.l.b16 %v2246
        %v2382 = vunpack.c.l.b16 %v2247
        %v2383 = vunpack.c.l.b16 %v2248
        %v2384 = vunpack.c.l.b16 %v2249
        %v2385 = vunpack.c.l.b16 %v2250
        %v2386 = vunpack.c.l.b16 %v2251
        %v2387 = vunpack.c.l.b16 %v2252
        %v2388 = vunpack.c.l.b16 %v2253
        %v2389 = vunpack.c.l.b16 %v2254
        %v2390 = vunpack.c.l.b16 %v2255
        %v2391 = vunpack.c.l.b16 %v2256
        %v2392 = vunpack.c.l.b16 %v2257
        %v2393 = vunpack.c.l.b16 %v2258
        %v2394 = vunpack.c.l.b16 %v2259
        %v2395 = vunpack.c.l.b16 %v2260
        %v2396 = vunpack.c.l.b16 %v2261
        %v2397 = vunpack.c.l.b16 %v2262
        %v2398 = vunpack.c.l.b16 %v2263
        %v2399 = vunpack.c.l.b16 %v2264
        %v2400 = vunpack.c.l.b16 %v2265
        %v2401 = vunpack.c.l.b16 %v2266
        %v2402 = vunpack.c.l.b16 %v2267
        %v2403 = vunpack.c.l.b16 %v2268
        %v2404 = vunpack.c.l.b16 %v2269
        %v2405 = vunpack.c.l.b16 %v2270
        %v2406 = vunpack.c.l.b16 %v2271
        %v2407 = vunpack.c.l.b16 %v2272
        %v2408 = vunpack.c.l.b16 %v2273
        %v2409 = vpack.c.b16 %v2346, %v2345
        %v2410 = vpack.c.b16 %v2348, %v2347
        %v2411 = vpack.c.b16 %v2350, %v2349
        %v2412 = vpack.c.b16 %v2352, %v2351
        %v2413 = vpack.c.b16 %v2354, %v2353
        %v2414 = vpack.c.b16 %v2356, %v2355
        %v2415 = vpack.c.b16 %v2358, %v2357
        %v2416 = vpack.c.b16 %v2360, %v2359
        %v2417 = vpack.c.b16 %v2362, %v2361
        %v2418 = vpack.c.b16 %v2364, %v2363
        %v2419 = vpack.c.b16 %v2366, %v2365
        %v2420 = vpack.c.b16 %v2368, %v2367
        %v2421 = vpack.c.b16 %v2370, %v2369
        %v2422 = vpack.c.b16 %v2372, %v2371
        %v2423 = vpack.c.b16 %v2374, %v2373
        %v2424 = vpack.c.b16 %v2376, %v2375
        %v2425 = vpack.c.b16 %v2378, %v2377
        %v2426 = vpack.c.b16 %v2380, %v2379
        %v2427 = vpack.c.b16 %v2382, %v2381
        %v2428 = vpack.c.b16 %v2384, %v2383
        %v2429 = vpack.c.b16 %v2386, %v2385
        %v2430 = vpack.c.b16 %v2388, %v2387
        %v2431 = vpack.c.b16 %v2390, %v2389
        %v2432 = vpack.c.b16 %v2392, %v2391
        %v2433 = vpack.c.b16 %v2394, %v2393
        %v2434 = vpack.c.b16 %v2396, %v2395
        %v2435 = vpack.c.b16 %v2398, %v2397
        %v2436 = vpack.c.b16 %v2400, %v2399
        %v2437 = vpack.c.b16 %v2402, %v2401
        %v2438 = vpack.c.b16 %v2404, %v2403
        %v2439 = vpack.c.b16 %v2406, %v2405
        %v2440 = vpack.c.b16 %v2408, %v2407
        %2473 = vmatprep.subr.bf16.mxu0 0
        %2474 = vmatpush1.bf16.msra.mxu0 %v2409
        %2475 = vmatprep.subr.bf16.mxu0 0
        %2476 = vmatpush1.bf16.msra.mxu0 %v2410
        %2477 = vmatprep.subr.bf16.mxu0 0
        %2478 = vmatpush1.bf16.msra.mxu0 %v2411
        %2479 = vmatprep.subr.bf16.mxu0 0
        %2480 = vmatpush1.bf16.msra.mxu0 %v2412
        %2481 = vmatprep.subr.bf16.mxu0 0
        %2482 = vmatpush1.bf16.msra.mxu0 %v2413
        %2483 = vmatprep.subr.bf16.mxu0 0
        %2484 = vmatpush1.bf16.msra.mxu0 %v2414
        %2485 = vmatprep.subr.bf16.mxu0 0
        %2486 = vmatpush1.bf16.msra.mxu0 %v2415
        %2487 = vmatprep.subr.bf16.mxu0 0
        %2488 = vmatpush1.bf16.msra.mxu0 %v2416
        %2489 = vmatprep.subr.bf16.mxu0 0
        %2490 = vmatpush1.bf16.msra.mxu0 %v2417
        %2491 = vmatprep.subr.bf16.mxu0 0
        %2492 = vmatpush1.bf16.msra.mxu0 %v2418
        %2493 = vmatprep.subr.bf16.mxu0 0
        %2494 = vmatpush1.bf16.msra.mxu0 %v2419
        %2495 = vmatprep.subr.bf16.mxu0 0
        %2496 = vmatpush1.bf16.msra.mxu0 %v2420
        %2497 = vmatprep.subr.bf16.mxu0 0
        %2498 = vmatpush1.bf16.msra.mxu0 %v2421
        %2499 = vmatprep.subr.bf16.mxu0 0
        %2500 = vmatpush1.bf16.msra.mxu0 %v2422
        %2501 = vmatprep.subr.bf16.mxu0 0
        %2502 = vmatpush1.bf16.msra.mxu0 %v2423
        %2503 = vmatprep.subr.bf16.mxu0 0
        %2504 = vmatpush1.bf16.msra.mxu0 %v2424
        %2505 = vmatprep.mubr.bf16.mxu0 %v2203
        %2506 = vmatmul.mubr.bf16.gmra.mrb[0].mxu0 %v2202
        %v2507 = vpop.f32.mrb[0].mxu0
        %v2508 = vadd.f32 %v2279, %v2507
        %v2509 = vpop.f32.mrb[0].mxu0
        %v2510 = vpop.f32.mrb[0].mxu0
        %v2511 = vadd.f32 %v2279, %v2510
        %v2512 = vpop.f32.mrb[0].mxu0
        %2513 = vmatprep.mubr.bf16.mxu0 %v2207
        %2514 = vmatmul.mubr.bf16.gmra.mrb[0].mxu0 %v2206
        %v2515 = vpop.f32.mrb[0].mxu0
        %v2516 = vadd.f32 %v2279, %v2515
        %v2517 = vpop.f32.mrb[0].mxu0
        %v2518 = vpop.f32.mrb[0].mxu0
        %v2519 = vadd.f32 %v2279, %v2518
        %v2520 = vpop.f32.mrb[0].mxu0
        %2521 = vdwg.mxu0
        %2522 = vmatprep.subr.bf16.mxu0 0
        %2523 = vmatpush1.bf16.msra.mxu0 %v2425
        %2524 = vmatprep.subr.bf16.mxu0 0
        %2525 = vmatpush1.bf16.msra.mxu0 %v2426
        %2526 = vmatprep.subr.bf16.mxu0 0
        %2527 = vmatpush1.bf16.msra.mxu0 %v2427
        %2528 = vmatprep.subr.bf16.mxu0 0
        %2529 = vmatpush1.bf16.msra.mxu0 %v2428
        %2530 = vmatprep.subr.bf16.mxu0 0
        %2531 = vmatpush1.bf16.msra.mxu0 %v2429
        %2532 = vmatprep.subr.bf16.mxu0 0
        %2533 = vmatpush1.bf16.msra.mxu0 %v2430
        %2534 = vmatprep.subr.bf16.mxu0 0
        %2535 = vmatpush1.bf16.msra.mxu0 %v2431
        %2536 = vmatprep.subr.bf16.mxu0 0
        %2537 = vmatpush1.bf16.msra.mxu0 %v2432
        %2538 = vmatprep.subr.bf16.mxu0 0
        %2539 = vmatpush1.bf16.msra.mxu0 %v2433
        %2540 = vmatprep.subr.bf16.mxu0 0
        %2541 = vmatpush1.bf16.msra.mxu0 %v2434
        %2542 = vmatprep.subr.bf16.mxu0 0
        %2543 = vmatpush1.bf16.msra.mxu0 %v2435
        %2544 = vmatprep.subr.bf16.mxu0 0
        %2545 = vmatpush1.bf16.msra.mxu0 %v2436
        %2546 = vmatprep.subr.bf16.mxu0 0
        %2547 = vmatpush1.bf16.msra.mxu0 %v2437
        %2548 = vmatprep.subr.bf16.mxu0 0
        %2549 = vmatpush1.bf16.msra.mxu0 %v2438
        %2550 = vmatprep.subr.bf16.mxu0 0
        %2551 = vmatpush1.bf16.msra.mxu0 %v2439
        %2552 = vmatprep.subr.bf16.mxu0 0
        %2553 = vmatpush1.bf16.msra.mxu0 %v2440
        %2554 = vmatprep.mubr.bf16.mxu0 %v2205
        %2555 = vmatmul.mubr.bf16.gmra.mrb[0].mxu0 %v2204
        %v2556 = vpop.f32.mrb[0].mxu0
        %v2557 = vadd.f32 %v2508, %v2556
        %v2558 = vpop.f32.mrb[0].mxu0
        %v2559 = vpop.f32.mrb[0].mxu0
        %v2560 = vadd.f32 %v2511, %v2559
        %v2561 = vpop.f32.mrb[0].mxu0
        %2562 = vmatprep.mubr.bf16.mxu0 %v2209
        %2563 = vmatmul.mubr.bf16.gmra.mrb[0].mxu0 %v2208
        %v2564 = vpop.f32.mrb[0].mxu0
        %v2565 = vadd.f32 %v2516, %v2564
        %v2566 = vpop.f32.mrb[0].mxu0
        %v2567 = vpop.f32.mrb[0].mxu0
        %v2568 = vadd.f32 %v2519, %v2567
        %v2569 = vpop.f32.mrb[0].mxu0
        %2570 = vdwg.mxu0
        %v2571 = vadd.f32 %v1794, %v2557
        %v2572 = vadd.f32 %v1795, %v2560
        %v2573 = vadd.f32 %v1796, %v2565
        %v2574 = vadd.f32 %v1797, %v2568
        %2575 = vst [vmem:[#allocation2] sm:$0xff] %v2571
        %2576 = vst [vmem:[#allocation2 + $0x8] sm:$0xff] %v2572
        %2577 = vst [vmem:[#allocation2 + $0x10] sm:$0xff] %v2573
        %2578 = vst [vmem:[#allocation2 + $0x18] sm:$0xff] %v2574
        %p2579 = scmp.eq.s32.totalorder %s35, 1
        // Predicated region
        $region165: #{bigram_lm_forward.1} parent=95 // pred_check
          %p2580 = pneg %p2579
        $region166: #{bigram_lm_forward.1} parent=95 // pred_check_branch
          %2582 = sbr.rel (%p2580) target = $region168
        $region167: #{bigram_lm_forward.1} parent=95 // pred_region
          %v2583 = vld [vmem:[#allocation18] sm:$0x1]
          %v2584 = vld [vmem:[#allocation19] sm:$0x1]
          %2585 = vadd.xlane.f32.xlu0 %v2571
          %v2586 = vpop.xlane.xlu0 %2585
          %2587 = vadd.xlane.f32.xlu0 %v2572
          %v2588 = vpop.xlane.xlu0 %2587
          %2589 = vadd.xlane.f32.xlu0 %v2573
          %v2590 = vpop.xlane.xlu0 %2589
          %2591 = vadd.xlane.f32.xlu0 %v2574
          %v2592 = vpop.xlane.xlu0 %2591
          %v2593 = vmul.f32 %v2586, %v1030
          %v2594 = vmul.f32 %v2588, %v1030
          %v2595 = vmul.f32 %v2590, %v1030
          %v2596 = vmul.f32 %v2592, %v1030
          %v2597 = vsub.f32 %v2571, %v2593
          %v2598 = vsub.f32 %v2572, %v2594
          %v2599 = vsub.f32 %v2573, %v2595
          %v2600 = vsub.f32 %v2574, %v2596
          %v2601 = vmul.f32 %v2597, %v2597
          %v2602 = vmul.f32 %v2598, %v2598
          %v2603 = vmul.f32 %v2599, %v2599
          %v2604 = vmul.f32 %v2600, %v2600
          %2605 = vadd.xlane.f32.xlu0 %v2601
          %v2606 = vpop.xlane.xlu0 %2605
          %2607 = vadd.xlane.f32.xlu0 %v2602
          %v2608 = vpop.xlane.xlu0 %2607
          %2609 = vadd.xlane.f32.xlu0 %v2603
          %v2610 = vpop.xlane.xlu0 %2609
          %2611 = vadd.xlane.f32.xlu0 %v2604
          %v2612 = vpop.xlane.xlu0 %2611
          %v2613 = vmul.f32 %v2606, %v1030
          %v2614 = vmul.f32 %v2608, %v1030
          %v2615 = vmul.f32 %v2610, %v1030
          %v2616 = vmul.f32 %v2612, %v1030
          %v2617 = vadd.f32 %v2613, 1e-05
          %v2618 = vadd.f32 %v2614, 1e-05
          %v2619 = vadd.f32 %v2615, 1e-05
          %v2620 = vadd.f32 %v2616, 1e-05
          %v2621 = vrsqrt.pop %v2617
          %v2622 = vrsqrt.pop %v2618
          %v2623 = vrsqrt.pop %v2619
          %v2624 = vrsqrt.pop %v2620
          %v2625 = vmul.f32 %v2597, %v2621
          %v2626 = vmul.f32 %v2598, %v2622
          %v2627 = vmul.f32 %v2599, %v2623
          %v2628 = vmul.f32 %v2600, %v2624
          %v2630 = vlaneseq
          %v2631 = vshrl.u32 %v2630, 7
          %v2632 = vsub.s32 0, %v2631
          %v2633 = vrot.slane %v2583, %v2632
          %v2635 = vmul.f32 %v2625, %v2633
          %v2636 = vmul.f32 %v2626, %v2633
          %v2637 = vmul.f32 %v2627, %v2633
          %v2638 = vmul.f32 %v2628, %v2633
          %v2640 = vlaneseq
          %v2641 = vshrl.u32 %v2640, 7
          %v2642 = vsub.s32 0, %v2641
          %v2643 = vrot.slane %v2584, %v2642
          %v2645 = vadd.f32 %v2635, %v2643
          %v2646 = vadd.f32 %v2636, %v2643
          %v2647 = vadd.f32 %v2637, %v2643
          %v2648 = vadd.f32 %v2638, %v2643
          %v2649 = vpack.c.bf16 %v2646, %v2645
          %v2650 = vpack.c.bf16 %v2648, %v2647
          %v2651 = vld [vmem:[#allocation21] sm:$0xf]
          %v2652 = vld [vmem:[#allocation21 + $0x4] sm:$0xf]
          %v2653 = vld [vmem:[#allocation21 + $0x8] sm:$0xf]
          %v2654 = vld [vmem:[#allocation21 + $0xc] sm:$0xf]
          %v2655 = vld [vmem:[#allocation21 + $0x10] sm:$0xf]
          %v2656 = vld [vmem:[#allocation21 + $0x14] sm:$0xf]
          %v2657 = vld [vmem:[#allocation21 + $0x18] sm:$0xf]
          %v2658 = vld [vmem:[#allocation21 + $0x1c] sm:$0xf]
          %v2659 = vld [vmem:[#allocation21 + $0x20] sm:$0xf]
          %v2660 = vld [vmem:[#allocation21 + $0x24] sm:$0xf]
          %v2661 = vld [vmem:[#allocation21 + $0x28] sm:$0xf]
          %v2662 = vld [vmem:[#allocation21 + $0x2c] sm:$0xf]
          %v2663 = vld [vmem:[#allocation21 + $0x30] sm:$0xf]
          %v2664 = vld [vmem:[#allocation21 + $0x34] sm:$0xf]
          %v2665 = vld [vmem:[#allocation21 + $0x38] sm:$0xf]
          %v2666 = vld [vmem:[#allocation21 + $0x3c] sm:$0xf]
          %v2667 = vld [vmem:[#allocation22] sm:$0x1]
          %v2669 = vlaneseq
          %v2670 = vshrl.u32 %v2669, 7
          %v2671 = vsub.s32 0, %v2670
          %v2672 = vrot.slane %v2667, %v2671
          %v2690 = vunpack.c.l.b16 %v2651
          %v2691 = vunpack.c.l.b16 %v2652
          %v2692 = vunpack.c.l.b16 %v2653
          %v2693 = vunpack.c.l.b16 %v2654
          %v2694 = vunpack.c.l.b16 %v2655
          %v2695 = vunpack.c.l.b16 %v2656
          %v2696 = vunpack.c.l.b16 %v2657
          %v2697 = vunpack.c.l.b16 %v2658
          %v2698 = vunpack.c.l.b16 %v2659
          %v2699 = vunpack.c.l.b16 %v2660
          %v2700 = vunpack.c.l.b16 %v2661
          %v2701 = vunpack.c.l.b16 %v2662
          %v2702 = vunpack.c.l.b16 %v2663
          %v2703 = vunpack.c.l.b16 %v2664
          %v2704 = vunpack.c.l.b16 %v2665
          %v2705 = vunpack.c.l.b16 %v2666
          %v2706 = vpack.c.b16 %v2691, %v2690
          %v2707 = vpack.c.b16 %v2693, %v2692
          %v2708 = vpack.c.b16 %v2695, %v2694
          %v2709 = vpack.c.b16 %v2697, %v2696
          %v2710 = vpack.c.b16 %v2699, %v2698
          %v2711 = vpack.c.b16 %v2701, %v2700
          %v2712 = vpack.c.b16 %v2703, %v2702
          %v2713 = vpack.c.b16 %v2705, %v2704
          %2722 = vmatprep.subr.bf16.mxu0 0
          %2723 = vmatpush1.bf16.msra.mxu0 %v2706
          %2724 = vmatprep.subr.bf16.mxu0 0
          %2725 = vmatpush1.bf16.msra.mxu0 %v2707
          %2726 = vmatprep.subr.bf16.mxu0 0
          %2727 = vmatpush1.bf16.msra.mxu0 %v2708
          %2728 = vmatprep.subr.bf16.mxu0 0
          %2729 = vmatpush1.bf16.msra.mxu0 %v2709
          %2730 = vmatprep.subr.bf16.mxu0 0
          %2731 = vmatpush1.bf16.msra.mxu0 %v2710
          %2732 = vmatprep.subr.bf16.mxu0 0
          %2733 = vmatpush1.bf16.msra.mxu0 %v2711
          %2734 = vmatprep.subr.bf16.mxu0 0
          %2735 = vmatpush1.bf16.msra.mxu0 %v2712
          %2736 = vmatprep.subr.bf16.mxu0 0
          %2737 = vmatpush1.bf16.msra.mxu0 %v2713
          %2738 = vmatprep.subr.bf16.mxu0 0
          %2739 = vmatpush1.bf16.msra.mxu0 0
          %2740 = vmatprep.subr.bf16.mxu0 0
          %2741 = vmatpush1.bf16.msra.mxu0 0
          %2742 = vmatprep.subr.bf16.mxu0 0
          %2743 = vmatpush1.bf16.msra.mxu0 0
          %2744 = vmatprep.subr.bf16.mxu0 0
          %2745 = vmatpush1.bf16.msra.mxu0 0
          %2746 = vmatprep.subr.bf16.mxu0 0
          %2747 = vmatpush1.bf16.msra.mxu0 0
          %2748 = vmatprep.subr.bf16.mxu0 0
          %2749 = vmatpush1.bf16.msra.mxu0 0
          %2750 = vmatprep.subr.bf16.mxu0 0
          %2751 = vmatpush1.bf16.msra.mxu0 0
          %2752 = vmatprep.subr.bf16.mxu0 0
          %2753 = vmatpush1.bf16.msra.mxu0 0
          %2754 = vmatprep.mubr.bf16.mxu0 0
          %2755 = vmatmul.mubr.bf16.gmra.mrb[0].mxu0 %v2649
          %v2756 = vpop.f32.mrb[0].mxu0
          %v2757 = vadd.f32 %v2672, %v2756
          %v2758 = vpop.f32.mrb[0].mxu0
          %v2759 = vpop.f32.mrb[0].mxu0
          %v2760 = vadd.f32 %v2672, %v2759
          %v2761 = vpop.f32.mrb[0].mxu0
          %2762 = vmatprep.mubr.bf16.mxu0 0
          %2763 = vmatmul.mubr.bf16.gmra.mrb[0].mxu0 %v2650
          %v2764 = vpop.f32.mrb[0].mxu0
          %v2765 = vadd.f32 %v2672, %v2764
          %v2766 = vpop.f32.mrb[0].mxu0
          %v2767 = vpop.f32.mrb[0].mxu0
          %v2768 = vadd.f32 %v2672, %v2767
          %v2769 = vpop.f32.mrb[0].mxu0
          %2770 = vdwg.mxu0
          %2771 = vst [vmem:[#allocation24] sm:$0xff] %v2757
          %2772 = vst [vmem:[#allocation24 + $0x8] sm:$0xff] %v2760
          %2773 = vst [vmem:[#allocation24 + $0x10] sm:$0xff] %v2765
          %2774 = vst [vmem:[#allocation24 + $0x18] sm:$0xff] %v2768
        $region168: #{bigram_lm_forward.1} parent=95 // pred_fallthru
          _
        // Predicated region
        $region169: #{bigram_lm_forward.1} parent=95 // pred_check
          %p2775 = pneg %p502
        $region170: #{bigram_lm_forward.1} parent=95 // pred_check_branch
          %2777 = sbr.rel (%p2775) target = $region172
        $region171: #{bigram_lm_forward.1} parent=95 // pred_region
          %s2779 = ssub.s32 512, 512
          %2780 = vsyncadd [#allocation5], %s2779
          %s2781 = sshll.u32 [#allocation24], 4
          %s2782 = int_to_ptr.vmem [resolvable:$true] %s2781
          %2787 = dma.vmem_to_hbm [thread:$0]  %s2782, 512, %s19, [#allocation5], 128, 128, 8
        $region172: #{bigram_lm_forward.1} parent=95 // pred_fallthru
          _
        // Predicated region
        $region173: #{bigram_lm_forward.1} parent=95 // pred_check
          %p2788 = pneg %p502
        $region174: #{bigram_lm_forward.1} parent=95 // pred_check_branch
          %2790 = sbr.rel (%p2788) target = $region176
        $region175: #{bigram_lm_forward.1} parent=95 // pred_region
          %2791 = dma.done [#allocation5], 512
        $region176: #{bigram_lm_forward.1} parent=95 // pred_fallthru
          _
      $region96: #{bigram_lm_forward.1} parent=5 // pred_fallthru
        _
      %p2792 = scmp.le.s32.totalorder 2, %s30
      // Predicated region
      $region177: #{bigram_lm_forward.1} parent=5 // pred_check
        %p2793 = pneg %p2792
      $region178: #{bigram_lm_forward.1} parent=5 // pred_check_branch
        %2795 = sbr.rel (%p2793) target = $region180
      $region179: #{bigram_lm_forward.1} parent=5 // pred_region
        %s2796 = ssub.s32 %s30, 2
      $region180: #{bigram_lm_forward.1} parent=5 // pred_fallthru
        _
    $region6: #{bigram_lm_forward.1} parent=1 // loop_footer
      %s34 = sadd.s32 1, %s30
    $region7: #{bigram_lm_forward.1} parent=1 // loop_footer_branch
      %29 = sbr.rel target = $region3
    $region8: #{bigram_lm_forward.1} parent=1 // loop_exit
      _
    %2797 = vsyncpa [#allocation4], 1
    %s2798 = scalar_lea.sflag [#allocation4], 1
    %2799 = vsyncpa %s2798, 1
    %2800 = vsyncpa [#allocation7], 1
    %2801 = vsyncpa [#allocation20], 1
    %2802 = vsyncpa [#allocation23], 1
    %2803 = vsyncpa [#allocation5], 1
    %s2804 = scalar_lea.sflag [#allocation5], 1
    %2805 = vsyncpa %s2804, 1

</llo_original>
